<compile_context>
chip_gen: v7x
topology: tpu7x:2x2x1
jax: 0.10.0
libtpu: 0.0.40
codegen_flags: <defaults>
</compile_context>

<pallas_src>
import functools

import jax
import jax.numpy as jnp
from jax.experimental import pallas as pl
from jax.experimental.pallas import tpu as pltpu

LANE = 128   # pad all channel dims to this (lane-dense stores, full MXU tiles)


def _round_up(x, m):
    return (x + m - 1) // m * m


def _vmem_limit_bytes():
    # v4/v5e/v6e have 128 MiB physical VMEM -> allow larger fused per-image
    # blocks; keep the conservative 32 MiB on v7x (64 MiB physical) / unknown.
    try:
        kind = jax.devices()[0].device_kind.lower()
    except Exception:
        return 32 * 1024 * 1024
    if any(t in kind for t in ("v4", "v5", "v6")):
        return 64 * 1024 * 1024
    return 32 * 1024 * 1024


def _cparams():
    return pltpu.CompilerParams(dimension_semantics=("parallel",),
                                vmem_limit_bytes=_vmem_limit_bytes())


# ----------------------------------------------------------------------------
# Fully-fused per-image kernel (channels already padded to 128)
# ----------------------------------------------------------------------------
def fused_bottleneck_kernel(x_ref, w1_ref, b1_ref, w2_ref, b2_ref, w3_ref, b3_ref,
                            fc1w_ref, fc1b_ref, fc2w_ref, fc2b_ref, *rest,
                            stride, downsample):
    if downsample:
        ws_ref, bs_ref, o_ref, y1p_ref = rest
    else:
        o_ref, y1p_ref = rest

    H, W, Cin = x_ref.shape
    Pln = y1p_ref.shape[-1]
    Ho, Wo, Cexp = o_ref.shape

    # ---- conv1x1 + BN + ReLU (BN scale folded into w1, shift in b1) ----
    x = x_ref[...]                                                 # bf16 (H,W,Cin)
    y1 = jnp.dot(x.reshape(H * W, Cin), w1_ref[...],
                 preferred_element_type=jnp.float32)
    y1 = jnp.maximum(y1 + b1_ref[...], 0.0)                        # f32 (H*W,Pln)

    # Halo-padded VMEM scratch: zero border = conv zero padding; interior
    # written in place -- no HBM round trip / XLA pad between "kernels".
    y1p_ref[...] = jnp.zeros_like(y1p_ref)
    y1p_ref[pl.ds(1, H), pl.ds(1, W), :] = y1.reshape(H, W, Pln)

    # ---- 3x3 conv (pad=1, stride) + BN + ReLU as ONE K-folded matmul ----
    # Tap accumulation stays on the MXU (K = 9*Pln); no f32 plane RMW.
    taps = []
    for kh in range(3):
        for kw in range(3):
            if stride == 1:
                p = y1p_ref[pl.ds(kh, Ho), pl.ds(kw, Wo), :]
            else:
                p = y1p_ref[pl.ds(kh, Ho, stride), pl.ds(kw, Wo, stride), :]
            taps.append(p.reshape(Ho * Wo, Pln).astype(jnp.bfloat16))
    patches = jnp.concatenate(taps, axis=-1)                       # (Ho*Wo, 9*Pln)
    y2 = jnp.dot(patches, w2_ref[...], preferred_element_type=jnp.float32)
    y2 = jnp.maximum(y2 + b2_ref[...], 0.0)

    # ---- conv1x1 + BN (Dropout(0.2) == identity in eval) ----
    x_res = jnp.dot(y2.astype(jnp.bfloat16), w3_ref[...],
                    preferred_element_type=jnp.float32) + b3_ref[...]  # f32

    # ---- squeeze (AdaptiveMaxPool2d(1)) + excitation MLP on resident x_res ----
    pooled = jnp.max(x_res, axis=0, keepdims=True)                 # (1, Cexp) f32
    h = jnp.dot(pooled, fc1w_ref[...], preferred_element_type=jnp.float32)
    h = jnp.maximum(h + fc1b_ref[...], 0.0)
    s = jnp.dot(h, fc2w_ref[...], preferred_element_type=jnp.float32) + fc2b_ref[...]
    se = jax.nn.sigmoid(s)                                         # (1, Cexp) f32

    # ---- shortcut (+downsample 1x1 conv + BN) + SE-scale + add + ReLU ----
    if downsample:
        if stride == 1:
            xs = x
        else:
            xs = x_ref[pl.ds(0, Ho, stride), pl.ds(0, Wo, stride), :]
        sc = jnp.dot(xs.reshape(Ho * Wo, Cin), ws_ref[...],
                     preferred_element_type=jnp.float32) + bs_ref[...]
    else:
        sc = x.astype(jnp.float32).reshape(Ho * Wo, Cexp)

    out = jnp.maximum(x_res * se + sc, 0.0)
    o_ref[...] = out.reshape(Ho, Wo, Cexp).astype(o_ref.dtype)     # bf16 store


# ----------------------------------------------------------------------------
# pallas_call wrapper
# ----------------------------------------------------------------------------
def fused_bottleneck(x_p, kp, *, stride, downsample, Ho, Wo):
    B, H, W, cin_p = x_p.shape
    pln_p, cex_p, hid_p = kp["pln_p"], kp["cex_p"], kp["hid_p"]

    in_specs = [
        pl.BlockSpec((None, H, W, cin_p), lambda b: (b, 0, 0, 0)),   # x
        pl.BlockSpec((cin_p, pln_p), lambda b: (0, 0)),              # w1
        pl.BlockSpec((1, pln_p), lambda b: (0, 0)),                  # b1
        pl.BlockSpec((9 * pln_p, pln_p), lambda b: (0, 0)),          # w2 (K-folded)
        pl.BlockSpec((1, pln_p), lambda b: (0, 0)),                  # b2
        pl.BlockSpec((pln_p, cex_p), lambda b: (0, 0)),              # w3
        pl.BlockSpec((1, cex_p), lambda b: (0, 0)),                  # b3
        pl.BlockSpec((cex_p, hid_p), lambda b: (0, 0)),              # fc1_w
        pl.BlockSpec((1, hid_p), lambda b: (0, 0)),                  # fc1_b
        pl.BlockSpec((hid_p, cex_p), lambda b: (0, 0)),              # fc2_w
        pl.BlockSpec((1, cex_p), lambda b: (0, 0)),                  # fc2_b
    ]
    args = [x_p, kp["w1"], kp["b1"], kp["w2"], kp["b2"], kp["w3"], kp["b3"],
            kp["fc1_w"], kp["fc1_b"], kp["fc2_w"], kp["fc2_b"]]
    if downsample:
        in_specs += [pl.BlockSpec((cin_p, cex_p), lambda b: (0, 0)),  # ws
                     pl.BlockSpec((1, cex_p), lambda b: (0, 0))]      # bs
        args += [kp["ws"], kp["bs"]]

    return pl.pallas_call(
        functools.partial(fused_bottleneck_kernel, stride=stride,
                          downsample=downsample),
        out_shape=jax.ShapeDtypeStruct((B, Ho, Wo, cex_p), jnp.bfloat16),
        grid_spec=pltpu.PrefetchScalarGridSpec(
            num_scalar_prefetch=0, grid=(B,),
            in_specs=in_specs,
            out_specs=pl.BlockSpec((None, Ho, Wo, cex_p), lambda b: (b, 0, 0, 0)),
            scratch_shapes=[pltpu.VMEM((H + 2, W + 2, pln_p), jnp.float32)]),
        compiler_params=_cparams(),
    )(*args)


# ----------------------------------------------------------------------------
# Parameters (PyTorch __init__ shapes; BN folded for inference) + kernel prep
# ----------------------------------------------------------------------------
def _bn_fold(gamma, beta, mean, var, eps=1e-5):
    scale = gamma / jnp.sqrt(var + eps)
    return scale, beta - mean * scale


def init_params(key, inplanes, planes, expansion, downsample, r):
    cexp = expansion * planes
    hid = cexp // r
    ks = jax.random.split(key, 12)

    def w(k, shape, fan_in):
        return jax.random.normal(k, shape, jnp.float32) / jnp.sqrt(fan_in)

    def bn(k, c):
        k1, k2, k3, k4 = jax.random.split(k, 4)
        gamma = 1.0 + 0.1 * jax.random.normal(k1, (c,), jnp.float32)
        beta = 0.1 * jax.random.normal(k2, (c,), jnp.float32)
        mean = 0.05 * jax.random.normal(k3, (c,), jnp.float32)
        var = 1.0 + 0.1 * jnp.abs(jax.random.normal(k4, (c,), jnp.float32))
        return _bn_fold(gamma, beta, mean, var)

    p = {}
    p["w1"] = w(ks[0], (1, 1, inplanes, planes), inplanes)          # HWIO
    p["bn1"] = bn(ks[1], planes)
    p["w2"] = w(ks[2], (3, 3, planes, planes), 9 * planes)          # HWIO
    p["bn2"] = bn(ks[3], planes)
    p["w3"] = w(ks[4], (1, 1, planes, cexp), planes)                # HWIO
    p["bn3"] = bn(ks[5], cexp)
    if downsample:
        p["ws"] = w(ks[6], (1, 1, inplanes, cexp), inplanes)        # HWIO
        p["bns"] = bn(ks[7], cexp)
    p["fc1_w"] = w(ks[8], (cexp, hid), cexp)                        # (in, out)
    p["fc1_b"] = 0.1 * jax.random.normal(ks[9], (hid,), jnp.float32)
    p["fc2_w"] = w(ks[10], (hid, cexp), hid)
    p["fc2_b"] = 0.1 * jax.random.normal(ks[11], (cexp,), jnp.float32)
    return p


def prepare_kernel_params(p, inplanes, planes, expansion, downsample, r):
    """Fold BN scale into weights, zero-pad channels to 128 (padded columns /
    biases are exactly zero -- the fused kernel relies on this), K-fold the 3x3
    weight, cast matmul operands to bf16 (biases / tiny MLP stay f32)."""
    cexp = expansion * planes
    hid = cexp // r
    cin_p = _round_up(inplanes, LANE)
    pln_p = _round_up(planes, LANE)
    cex_p = _round_up(cexp, LANE)
    hid_p = _round_up(hid, LANE)

    def fold_pad_1x1(w_hwio, sb, ci_p, co_p):
        s, b = sb
        w = w_hwio[0, 0] * s[None, :]                               # fold BN scale
        w = jnp.pad(w, ((0, ci_p - w.shape[0]), (0, co_p - w.shape[1])))
        bb = jnp.pad(b, (0, co_p - b.shape[0])).reshape(1, -1)
        return w.astype(jnp.bfloat16), bb.astype(jnp.float32)

    kp = {"cexp": cexp, "cin_p": cin_p, "pln_p": pln_p,
          "cex_p": cex_p, "hid_p": hid_p}
    kp["w1"], kp["b1"] = fold_pad_1x1(p["w1"], p["bn1"], cin_p, pln_p)

    s2, b2 = p["bn2"]
    w2 = p["w2"] * s2[None, None, None, :]                          # (3,3,pl,pl)
    w2 = jnp.pad(w2, ((0, 0), (0, 0), (0, pln_p - planes), (0, pln_p - planes)))
    # K-folded layout: rows ordered (kh, kw, cin) to match the in-kernel
    # tap-concatenation order.
    kp["w2"] = w2.reshape(9 * pln_p, pln_p).astype(jnp.bfloat16)
    kp["b2"] = jnp.pad(b2, (0, pln_p - planes)).reshape(1, -1).astype(jnp.float32)

    kp["w3"], kp["b3"] = fold_pad_1x1(p["w3"], p["bn3"], pln_p, cex_p)
    if downsample:
        kp["ws"], kp["bs"] = fold_pad_1x1(p["ws"], p["bns"], cin_p, cex_p)

    kp["fc1_w"] = jnp.pad(p["fc1_w"], ((0, cex_p - cexp), (0, hid_p - hid)))
    kp["fc1_b"] = jnp.pad(p["fc1_b"], (0, hid_p - hid)).reshape(1, -1)
    kp["fc2_w"] = jnp.pad(p["fc2_w"], ((0, hid_p - hid), (0, cex_p - cexp)))
    kp["fc2_b"] = jnp.pad(p["fc2_b"], (0, cex_p - cexp)).reshape(1, -1)
    return kp


# ----------------------------------------------------------------------------
# MSEBottleNeck forward (Pallas)
# ----------------------------------------------------------------------------
def mse_bottleneck_forward(x_nchw, kp, *, stride=1, downsample=False):
    x = jnp.transpose(x_nchw, (0, 2, 3, 1)).astype(jnp.float32)     # NHWC
    B, H, W, Cin = x.shape
    cexp, cin_p, cex_p = kp["cexp"], kp["cin_p"], kp["cex_p"]
    Ho = (H - 1) // stride + 1
    Wo = (W - 1) // stride + 1
    if not downsample:
        # PyTorch identity shortcut only type-checks when shapes already match.
        assert stride == 1 and Cin == cexp and cin_p == cex_p, (
            "identity shortcut needs stride == 1 and inplanes == expansion*planes")

    x_p = jnp.pad(x, ((0, 0), (0, 0), (0, 0), (0, cin_p - Cin))).astype(jnp.bfloat16)

    out = fused_bottleneck(x_p, kp, stride=stride, downsample=downsample,
                           Ho=Ho, Wo=Wo)                            # (B,Ho,Wo,cex_p) bf16

    out = out[..., :cexp].astype(jnp.float32)                       # drop channel pad
    return jnp.transpose(out, (0, 3, 1, 2))                         # back to NCHW


# ----------------------------------------------------------------------------
# Pure-JAX f32 reference (for correctness check)
# ----------------------------------------------------------------------------
def reference_forward(x_nchw, params, *, stride=1, downsample=False):
    x = jnp.transpose(x_nchw, (0, 2, 3, 1)).astype(jnp.float32)

    def conv(x, w, s, pad):
        return jax.lax.conv_general_dilated(
            x, w, (s, s), pad, dimension_numbers=("NHWC", "HWIO", "NHWC"))

    def bn(x, sb):
        s, b = sb
        return x * s + b

    y = jax.nn.relu(bn(conv(x, params["w1"], 1, "VALID"), params["bn1"]))
    y = jax.nn.relu(bn(conv(y, params["w2"], stride, [(1, 1), (1, 1)]), params["bn2"]))
    x_res = bn(conv(y, params["w3"], 1, "VALID"), params["bn3"])
    pooled = jnp.max(x_res, axis=(1, 2))
    h = jax.nn.relu(pooled @ params["fc1_w"] + params["fc1_b"])
    se = jax.nn.sigmoid(h @ params["fc2_w"] + params["fc2_b"])
    if downsample:
        sc = bn(conv(x, params["ws"], stride, "VALID"), params["bns"])
    else:
        sc = x
    out = jax.nn.relu(x_res * se[:, None, None, :] + sc)
    return jnp.transpose(out, (0, 3, 1, 2))


# ----------------------------------------------------------------------------
if __name__ == "__main__":
    planes, expansion, r = 4, 4, 4
    B, H, W = 2, 16, 16
    configs = [
        dict(inplanes=8, downsample=True, stride=1),    # projection shortcut
        dict(inplanes=16, downsample=False, stride=1),  # identity shortcut
    ]
    key = jax.random.PRNGKey(0)
    for cfg in configs:
        inplanes, downsample, stride = cfg["inplanes"], cfg["downsample"], cfg["stride"]
        key, kx, kpk = jax.random.split(key, 3)
        x = jax.random.normal(kx, (B, inplanes, H, W), jnp.float32)  # NCHW input
        raw = init_params(kpk, inplanes, planes, expansion, downsample, r)
        kparams = prepare_kernel_params(raw, inplanes, planes, expansion,
                                        downsample, r)

        out = mse_bottleneck_forward(x, kparams, stride=stride, downsample=downsample)
        out = jax.block_until_ready(out)
        ref = reference_forward(x, raw, stride=stride, downsample=downsample)

        assert out.shape == (B, expansion * planes, H, W), out.shape
        err = float(jnp.max(jnp.abs(out - ref)))
        scale = float(jnp.max(jnp.abs(ref))) + 1e-6
        # bf16 matmul operands / bf16 output -> relative tolerance
        assert err / scale < 5e-2, f"cfg={cfg}: rel err {err / scale:.4f}"
    print("KERNEL_OK")
</pallas_src>

<mosaic_0001>
module attributes {stable_mosaic.version = 11 : i64} {
  func.func @fused_bottleneck_kernel(%arg0: i32, %arg1: memref<1x16x16x128xbf16, #tpu.memory_space<vmem>>, %arg2: memref<128x128xbf16, #tpu.memory_space<vmem>>, %arg3: memref<1x128xf32, #tpu.memory_space<vmem>>, %arg4: memref<1152x128xbf16, #tpu.memory_space<vmem>>, %arg5: memref<1x128xf32, #tpu.memory_space<vmem>>, %arg6: memref<128x128xbf16, #tpu.memory_space<vmem>>, %arg7: memref<1x128xf32, #tpu.memory_space<vmem>>, %arg8: memref<128x128xf32, #tpu.memory_space<vmem>>, %arg9: memref<1x128xf32, #tpu.memory_space<vmem>>, %arg10: memref<128x128xf32, #tpu.memory_space<vmem>>, %arg11: memref<1x128xf32, #tpu.memory_space<vmem>>, %arg12: memref<128x128xbf16, #tpu.memory_space<vmem>>, %arg13: memref<1x128xf32, #tpu.memory_space<vmem>>, %arg14: memref<1x16x16x128xbf16, #tpu.memory_space<vmem>>, %arg15: memref<18x18x128xf32, #tpu.memory_space<vmem>>) attributes {dimension_semantics = [#tpu.dimension_semantics<parallel>], iteration_bounds = array<i64: 2>, scalar_prefetch = 0 : i64, scratch_operands = 1 : i64, tpu.core_type = #tpu.core_type<tc>, window_params = [{transform_indices = @transform_0, window_bounds = array<i64: 1, 16, 16, 128>}, {pipeline_mode = #tpu.pipeline_mode<synchronous>, transform_indices = @transform_1, window_bounds = array<i64: 128, 128>}, {pipeline_mode = #tpu.pipeline_mode<synchronous>, transform_indices = @transform_2, window_bounds = array<i64: 1, 128>}, {pipeline_mode = #tpu.pipeline_mode<synchronous>, transform_indices = @transform_3, window_bounds = array<i64: 1152, 128>}, {pipeline_mode = #tpu.pipeline_mode<synchronous>, transform_indices = @transform_4, window_bounds = array<i64: 1, 128>}, {pipeline_mode = #tpu.pipeline_mode<synchronous>, transform_indices = @transform_5, window_bounds = array<i64: 128, 128>}, {pipeline_mode = #tpu.pipeline_mode<synchronous>, transform_indices = @transform_6, window_bounds = array<i64: 1, 128>}, {pipeline_mode = #tpu.pipeline_mode<synchronous>, transform_indices = @transform_7, window_bounds = array<i64: 128, 128>}, {pipeline_mode = #tpu.pipeline_mode<synchronous>, transform_indices = @transform_8, window_bounds = array<i64: 1, 128>}, {pipeline_mode = #tpu.pipeline_mode<synchronous>, transform_indices = @transform_9, window_bounds = array<i64: 128, 128>}, {pipeline_mode = #tpu.pipeline_mode<synchronous>, transform_indices = @transform_10, window_bounds = array<i64: 1, 128>}, {pipeline_mode = #tpu.pipeline_mode<synchronous>, transform_indices = @transform_11, window_bounds = array<i64: 128, 128>}, {pipeline_mode = #tpu.pipeline_mode<synchronous>, transform_indices = @transform_12, window_bounds = array<i64: 1, 128>}, {transform_indices = @transform_13, window_bounds = array<i64: 1, 16, 16, 128>}]} {
    %c0 = arith.constant 0 : index
    %c0_0 = arith.constant 0 : index
    %c0_1 = arith.constant 0 : index
    %c0_2 = arith.constant 0 : index
    %0 = vector.load %arg1[%c0, %c0_0, %c0_1, %c0_2] : memref<1x16x16x128xbf16, #tpu.memory_space<vmem>>, vector<1x16x16x128xbf16>
    %1 = vector.shape_cast %0 : vector<1x16x16x128xbf16> to vector<16x16x128xbf16>
    %2 = vector.shape_cast %1 : vector<16x16x128xbf16> to vector<256x128xbf16>
    %c0_3 = arith.constant 0 : index
    %c0_4 = arith.constant 0 : index
    %3 = vector.load %arg2[%c0_3, %c0_4] : memref<128x128xbf16, #tpu.memory_space<vmem>>, vector<128x128xbf16>
    %cst = arith.constant dense<0.000000e+00> : vector<256x128xf32>
    %4 = tpu.matmul %2, %3, %cst {dimension_numbers = #tpu.dot_dimension_numbers<[1], [0], [0], [1], [0, 0, 1, 1], [], []>} : vector<256x128xbf16>, vector<128x128xbf16>, vector<256x128xf32> -> vector<256x128xf32>
    %c0_5 = arith.constant 0 : index
    %c0_6 = arith.constant 0 : index
    %5 = vector.load %arg3[%c0_5, %c0_6] : memref<1x128xf32, #tpu.memory_space<vmem>>, vector<1x128xf32>
    %6 = vector.broadcast %5 : vector<1x128xf32> to vector<256x128xf32>
    %7 = arith.addf %4, %6 : vector<256x128xf32>
    %cst_7 = arith.constant 0.000000e+00 : f32
    %8 = vector.broadcast %cst_7 : f32 to vector<256x128xf32>
    %9 = arith.maximumf %7, %8 : vector<256x128xf32>
    %cst_8 = arith.constant 0.000000e+00 : f32
    %10 = vector.broadcast %cst_8 : f32 to vector<18x18x128xf32>
    %c0_9 = arith.constant 0 : index
    %c0_10 = arith.constant 0 : index
    %c0_11 = arith.constant 0 : index
    %11 = vector.load %arg15[%c0_9, %c0_10, %c0_11] : memref<18x18x128xf32, #tpu.memory_space<vmem>>, vector<18x18x128xf32>
    tpu.vector_store %arg15[%c0_9, %c0_10, %c0_11], %10 {strides = array<i32>} : memref<18x18x128xf32, #tpu.memory_space<vmem>>, vector<18x18x128xf32>,
    %12 = vector.shape_cast %9 : vector<256x128xf32> to vector<16x16x128xf32>
    %c1 = arith.constant 1 : index
    %c1_12 = arith.constant 1 : index
    %c0_13 = arith.constant 0 : index
    %13 = vector.load %arg15[%c1, %c1_12, %c0_13] : memref<18x18x128xf32, #tpu.memory_space<vmem>>, vector<16x16x128xf32>
    tpu.vector_store %arg15[%c1, %c1_12, %c0_13], %12 {strides = array<i32>} : memref<18x18x128xf32, #tpu.memory_space<vmem>>, vector<16x16x128xf32>,
    %c0_14 = arith.constant 0 : index
    %c0_15 = arith.constant 0 : index
    %c0_16 = arith.constant 0 : index
    %14 = vector.load %arg15[%c0_14, %c0_15, %c0_16] : memref<18x18x128xf32, #tpu.memory_space<vmem>>, vector<16x16x128xf32>
    %15 = vector.shape_cast %14 : vector<16x16x128xf32> to vector<256x128xf32>
    %16 = arith.truncf %15 : vector<256x128xf32> to vector<256x128xbf16>
    %c0_17 = arith.constant 0 : index
    %c1_18 = arith.constant 1 : index
    %c0_19 = arith.constant 0 : index
    %17 = vector.load %arg15[%c0_17, %c1_18, %c0_19] : memref<18x18x128xf32, #tpu.memory_space<vmem>>, vector<16x16x128xf32>
    %18 = vector.shape_cast %17 : vector<16x16x128xf32> to vector<256x128xf32>
    %19 = arith.truncf %18 : vector<256x128xf32> to vector<256x128xbf16>
    %c0_20 = arith.constant 0 : index
    %c2 = arith.constant 2 : index
    %c0_21 = arith.constant 0 : index
    %20 = vector.load %arg15[%c0_20, %c2, %c0_21] : memref<18x18x128xf32, #tpu.memory_space<vmem>>, vector<16x16x128xf32>
    %21 = vector.shape_cast %20 : vector<16x16x128xf32> to vector<256x128xf32>
    %22 = arith.truncf %21 : vector<256x128xf32> to vector<256x128xbf16>
    %c1_22 = arith.constant 1 : index
    %c0_23 = arith.constant 0 : index
    %c0_24 = arith.constant 0 : index
    %23 = vector.load %arg15[%c1_22, %c0_23, %c0_24] : memref<18x18x128xf32, #tpu.memory_space<vmem>>, vector<16x16x128xf32>
    %24 = vector.shape_cast %23 : vector<16x16x128xf32> to vector<256x128xf32>
    %25 = arith.truncf %24 : vector<256x128xf32> to vector<256x128xbf16>
    %c1_25 = arith.constant 1 : index
    %c1_26 = arith.constant 1 : index
    %c0_27 = arith.constant 0 : index
    %26 = vector.load %arg15[%c1_25, %c1_26, %c0_27] : memref<18x18x128xf32, #tpu.memory_space<vmem>>, vector<16x16x128xf32>
    %27 = vector.shape_cast %26 : vector<16x16x128xf32> to vector<256x128xf32>
    %28 = arith.truncf %27 : vector<256x128xf32> to vector<256x128xbf16>
    %c1_28 = arith.constant 1 : index
    %c2_29 = arith.constant 2 : index
    %c0_30 = arith.constant 0 : index
    %29 = vector.load %arg15[%c1_28, %c2_29, %c0_30] : memref<18x18x128xf32, #tpu.memory_space<vmem>>, vector<16x16x128xf32>
    %30 = vector.shape_cast %29 : vector<16x16x128xf32> to vector<256x128xf32>
    %31 = arith.truncf %30 : vector<256x128xf32> to vector<256x128xbf16>
    %c2_31 = arith.constant 2 : index
    %c0_32 = arith.constant 0 : index
    %c0_33 = arith.constant 0 : index
    %32 = vector.load %arg15[%c2_31, %c0_32, %c0_33] : memref<18x18x128xf32, #tpu.memory_space<vmem>>, vector<16x16x128xf32>
    %33 = vector.shape_cast %32 : vector<16x16x128xf32> to vector<256x128xf32>
    %34 = arith.truncf %33 : vector<256x128xf32> to vector<256x128xbf16>
    %c2_34 = arith.constant 2 : index
    %c1_35 = arith.constant 1 : index
    %c0_36 = arith.constant 0 : index
    %35 = vector.load %arg15[%c2_34, %c1_35, %c0_36] : memref<18x18x128xf32, #tpu.memory_space<vmem>>, vector<16x16x128xf32>
    %36 = vector.shape_cast %35 : vector<16x16x128xf32> to vector<256x128xf32>
    %37 = arith.truncf %36 : vector<256x128xf32> to vector<256x128xbf16>
    %c2_37 = arith.constant 2 : index
    %c2_38 = arith.constant 2 : index
    %c0_39 = arith.constant 0 : index
    %38 = vector.load %arg15[%c2_37, %c2_38, %c0_39] : memref<18x18x128xf32, #tpu.memory_space<vmem>>, vector<16x16x128xf32>
    %39 = vector.shape_cast %38 : vector<16x16x128xf32> to vector<256x128xf32>
    %40 = arith.truncf %39 : vector<256x128xf32> to vector<256x128xbf16>
    %41 = tpu.concatenate %16, %19, %22, %25, %28, %31, %34, %37, %40 in 1 : vector<256x128xbf16>, vector<256x128xbf16>, vector<256x128xbf16>, vector<256x128xbf16>, vector<256x128xbf16>, vector<256x128xbf16>, vector<256x128xbf16>, vector<256x128xbf16>, vector<256x128xbf16> -> vector<256x1152xbf16>
    %c0_40 = arith.constant 0 : index
    %c0_41 = arith.constant 0 : index
    %42 = vector.load %arg4[%c0_40, %c0_41] : memref<1152x128xbf16, #tpu.memory_space<vmem>>, vector<1152x128xbf16>
    %cst_42 = arith.constant dense<0.000000e+00> : vector<256x128xf32>
    %43 = tpu.matmul %41, %42, %cst_42 {dimension_numbers = #tpu.dot_dimension_numbers<[1], [0], [0], [1], [0, 0, 1, 1], [], []>} : vector<256x1152xbf16>, vector<1152x128xbf16>, vector<256x128xf32> -> vector<256x128xf32>
    %c0_43 = arith.constant 0 : index
    %c0_44 = arith.constant 0 : index
    %44 = vector.load %arg5[%c0_43, %c0_44] : memref<1x128xf32, #tpu.memory_space<vmem>>, vector<1x128xf32>
    %45 = vector.broadcast %44 : vector<1x128xf32> to vector<256x128xf32>
    %46 = arith.addf %43, %45 : vector<256x128xf32>
    %cst_45 = arith.constant 0.000000e+00 : f32
    %47 = vector.broadcast %cst_45 : f32 to vector<256x128xf32>
    %48 = arith.maximumf %46, %47 : vector<256x128xf32>
    %49 = arith.truncf %48 : vector<256x128xf32> to vector<256x128xbf16>
    %c0_46 = arith.constant 0 : index
    %c0_47 = arith.constant 0 : index
    %50 = vector.load %arg6[%c0_46, %c0_47] : memref<128x128xbf16, #tpu.memory_space<vmem>>, vector<128x128xbf16>
    %cst_48 = arith.constant dense<0.000000e+00> : vector<256x128xf32>
    %51 = tpu.matmul %49, %50, %cst_48 {dimension_numbers = #tpu.dot_dimension_numbers<[1], [0], [0], [1], [0, 0, 1, 1], [], []>} : vector<256x128xbf16>, vector<128x128xbf16>, vector<256x128xf32> -> vector<256x128xf32>
    %c0_49 = arith.constant 0 : index
    %c0_50 = arith.constant 0 : index
    %52 = vector.load %arg7[%c0_49, %c0_50] : memref<1x128xf32, #tpu.memory_space<vmem>>, vector<1x128xf32>
    %53 = vector.broadcast %52 : vector<1x128xf32> to vector<256x128xf32>
    %54 = arith.addf %51, %53 : vector<256x128xf32>
    %cst_51 = arith.constant dense<0xFF800000> : vector<128xf32>
    %55 = vector.multi_reduction <maximumf>, %54, %cst_51 [0] : vector<256x128xf32> to vector<128xf32>
    %56 = vector.shape_cast %55 : vector<128xf32> to vector<1x128xf32>
    %c0_52 = arith.constant 0 : index
    %c0_53 = arith.constant 0 : index
    %57 = vector.load %arg8[%c0_52, %c0_53] : memref<128x128xf32, #tpu.memory_space<vmem>>, vector<128x128xf32>
    %cst_54 = arith.constant dense<0.000000e+00> : vector<1x128xf32>
    %58 = tpu.matmul %56, %57, %cst_54 {dimension_numbers = #tpu.dot_dimension_numbers<[1], [0], [0], [1], [0, 0, 1, 1], [], []>} : vector<1x128xf32>, vector<128x128xf32>, vector<1x128xf32> -> vector<1x128xf32>
    %c0_55 = arith.constant 0 : index
    %c0_56 = arith.constant 0 : index
    %59 = vector.load %arg9[%c0_55, %c0_56] : memref<1x128xf32, #tpu.memory_space<vmem>>, vector<1x128xf32>
    %60 = arith.addf %58, %59 : vector<1x128xf32>
    %cst_57 = arith.constant 0.000000e+00 : f32
    %61 = vector.broadcast %cst_57 : f32 to vector<1x128xf32>
    %62 = arith.maximumf %60, %61 : vector<1x128xf32>
    %c0_58 = arith.constant 0 : index
    %c0_59 = arith.constant 0 : index
    %63 = vector.load %arg10[%c0_58, %c0_59] : memref<128x128xf32, #tpu.memory_space<vmem>>, vector<128x128xf32>
    %cst_60 = arith.constant dense<0.000000e+00> : vector<1x128xf32>
    %64 = tpu.matmul %62, %63, %cst_60 {dimension_numbers = #tpu.dot_dimension_numbers<[1], [0], [0], [1], [0, 0, 1, 1], [], []>} : vector<1x128xf32>, vector<128x128xf32>, vector<1x128xf32> -> vector<1x128xf32>
    %c0_61 = arith.constant 0 : index
    %c0_62 = arith.constant 0 : index
    %65 = vector.load %arg11[%c0_61, %c0_62] : memref<1x128xf32, #tpu.memory_space<vmem>>, vector<1x128xf32>
    %66 = arith.addf %64, %65 : vector<1x128xf32>
    %67 = arith.negf %66 : vector<1x128xf32>
    %68 = math.exp %67 : vector<1x128xf32>
    %cst_63 = arith.constant 1.000000e+00 : f32
    %69 = vector.broadcast %cst_63 : f32 to vector<1x128xf32>
    %70 = arith.addf %69, %68 : vector<1x128xf32>
    %71 = arith.divf %69, %70 : vector<1x128xf32>
    %72 = vector.shape_cast %1 : vector<16x16x128xbf16> to vector<256x128xbf16>
    %c0_64 = arith.constant 0 : index
    %c0_65 = arith.constant 0 : index
    %73 = vector.load %arg12[%c0_64, %c0_65] : memref<128x128xbf16, #tpu.memory_space<vmem>>, vector<128x128xbf16>
    %cst_66 = arith.constant dense<0.000000e+00> : vector<256x128xf32>
    %74 = tpu.matmul %72, %73, %cst_66 {dimension_numbers = #tpu.dot_dimension_numbers<[1], [0], [0], [1], [0, 0, 1, 1], [], []>} : vector<256x128xbf16>, vector<128x128xbf16>, vector<256x128xf32> -> vector<256x128xf32>
    %c0_67 = arith.constant 0 : index
    %c0_68 = arith.constant 0 : index
    %75 = vector.load %arg13[%c0_67, %c0_68] : memref<1x128xf32, #tpu.memory_space<vmem>>, vector<1x128xf32>
    %76 = vector.broadcast %75 : vector<1x128xf32> to vector<256x128xf32>
    %77 = arith.addf %74, %76 : vector<256x128xf32>
    %78 = vector.broadcast %71 : vector<1x128xf32> to vector<256x128xf32>
    %79 = arith.mulf %54, %78 : vector<256x128xf32>
    %80 = arith.addf %79, %77 : vector<256x128xf32>
    %cst_69 = arith.constant 0.000000e+00 : f32
    %81 = vector.broadcast %cst_69 : f32 to vector<256x128xf32>
    %82 = arith.maximumf %80, %81 : vector<256x128xf32>
    %83 = vector.shape_cast %82 : vector<256x128xf32> to vector<16x16x128xf32>
    %84 = arith.truncf %83 : vector<16x16x128xf32> to vector<16x16x128xbf16>
    %c0_70 = arith.constant 0 : index
    %c0_71 = arith.constant 0 : index
    %c0_72 = arith.constant 0 : index
    %c0_73 = arith.constant 0 : index
    %85 = vector.load %arg14[%c0_70, %c0_71, %c0_72, %c0_73] : memref<1x16x16x128xbf16, #tpu.memory_space<vmem>>, vector<1x16x16x128xbf16>
    %86 = vector.shape_cast %85 : vector<1x16x16x128xbf16> to vector<16x16x128xbf16>
    %87 = vector.shape_cast %84 : vector<16x16x128xbf16> to vector<1x16x16x128xbf16>
    tpu.vector_store %arg14[%c0_70, %c0_71, %c0_72, %c0_73], %87 {strides = array<i32>} : memref<1x16x16x128xbf16, #tpu.memory_space<vmem>>, vector<1x16x16x128xbf16>,
    return
  }
  func.func @transform_0(%arg0: i32) -> (i32, i32, i32, i32) {
    %c0_i32 = arith.constant 0 : i32
    %c0_i32_0 = arith.constant 0 : i32
    %c0_i32_1 = arith.constant 0 : i32
    %c0_i32_2 = arith.constant 0 : i32
    return %arg0, %c0_i32, %c0_i32_0, %c0_i32_1 : i32, i32, i32, i32
  }
  func.func @transform_1(%arg0: i32) -> (i32, i32) {
    %c0_i32 = arith.constant 0 : i32
    %c0_i32_0 = arith.constant 0 : i32
    %c0_i32_1 = arith.constant 0 : i32
    return %c0_i32, %c0_i32_0 : i32, i32
  }
  func.func @transform_2(%arg0: i32) -> (i32, i32) {
    %c0_i32 = arith.constant 0 : i32
    %c0_i32_0 = arith.constant 0 : i32
    %c0_i32_1 = arith.constant 0 : i32
    return %c0_i32, %c0_i32_0 : i32, i32
  }
  func.func @transform_3(%arg0: i32) -> (i32, i32) {
    %c0_i32 = arith.constant 0 : i32
    %c0_i32_0 = arith.constant 0 : i32
    %c0_i32_1 = arith.constant 0 : i32
    return %c0_i32, %c0_i32_0 : i32, i32
  }
  func.func @transform_4(%arg0: i32) -> (i32, i32) {
    %c0_i32 = arith.constant 0 : i32
    %c0_i32_0 = arith.constant 0 : i32
    %c0_i32_1 = arith.constant 0 : i32
    return %c0_i32, %c0_i32_0 : i32, i32
  }
  func.func @transform_5(%arg0: i32) -> (i32, i32) {
    %c0_i32 = arith.constant 0 : i32
    %c0_i32_0 = arith.constant 0 : i32
    %c0_i32_1 = arith.constant 0 : i32
    return %c0_i32, %c0_i32_0 : i32, i32
  }
  func.func @transform_6(%arg0: i32) -> (i32, i32) {
    %c0_i32 = arith.constant 0 : i32
    %c0_i32_0 = arith.constant 0 : i32
    %c0_i32_1 = arith.constant 0 : i32
    return %c0_i32, %c0_i32_0 : i32, i32
  }
  func.func @transform_7(%arg0: i32) -> (i32, i32) {
    %c0_i32 = arith.constant 0 : i32
    %c0_i32_0 = arith.constant 0 : i32
    %c0_i32_1 = arith.constant 0 : i32
    return %c0_i32, %c0_i32_0 : i32, i32
  }
  func.func @transform_8(%arg0: i32) -> (i32, i32) {
    %c0_i32 = arith.constant 0 : i32
    %c0_i32_0 = arith.constant 0 : i32
    %c0_i32_1 = arith.constant 0 : i32
    return %c0_i32, %c0_i32_0 : i32, i32
  }
  func.func @transform_9(%arg0: i32) -> (i32, i32) {
    %c0_i32 = arith.constant 0 : i32
    %c0_i32_0 = arith.constant 0 : i32
    %c0_i32_1 = arith.constant 0 : i32
    return %c0_i32, %c0_i32_0 : i32, i32
  }
  func.func @transform_10(%arg0: i32) -> (i32, i32) {
    %c0_i32 = arith.constant 0 : i32
    %c0_i32_0 = arith.constant 0 : i32
    %c0_i32_1 = arith.constant 0 : i32
    return %c0_i32, %c0_i32_0 : i32, i32
  }
  func.func @transform_11(%arg0: i32) -> (i32, i32) {
    %c0_i32 = arith.constant 0 : i32
    %c0_i32_0 = arith.constant 0 : i32
    %c0_i32_1 = arith.constant 0 : i32
    return %c0_i32, %c0_i32_0 : i32, i32
  }
  func.func @transform_12(%arg0: i32) -> (i32, i32) {
    %c0_i32 = arith.constant 0 : i32
    %c0_i32_0 = arith.constant 0 : i32
    %c0_i32_1 = arith.constant 0 : i32
    return %c0_i32, %c0_i32_0 : i32, i32
  }
  func.func @transform_13(%arg0: i32) -> (i32, i32, i32, i32) {
    %c0_i32 = arith.constant 0 : i32
    %c0_i32_0 = arith.constant 0 : i32
    %c0_i32_1 = arith.constant 0 : i32
    %c0_i32_2 = arith.constant 0 : i32
    return %arg0, %c0_i32, %c0_i32_0, %c0_i32_1 : i32, i32, i32, i32
  }
}

</mosaic_0001>

<llo_original>
// kernel: tpu_custom_call.1
$region0: #{tpu_custom_call.1}
  #allocation0 [shape = 'u32[]', space=smem, size = 0x4, offset = 0x4, fixed_abs, tag = 'smem constant byte address 0x4 - core index']
  #allocation1 [shape = 'u32[144,128]{1,0:T(1,128)}', space=vmem, size = 0x12000, scoped, tag = 'internal scratch']
  #allocation2 [shape = 'f32[18,18,128]{2,1,0:T(8,128)}', space=vmem, size = 0x36000, scoped, tag = 'scratch operand']
  %s0 = inlined_call_operand.hbm [shape: bf16[2,16,16,128], index: 0, kind: input, shape index: {}]
  %s1 = inlined_call_operand.hbm [shape: bf16[128,128], index: 1, kind: input, shape index: {}]
  %s2 = inlined_call_operand.vmem [shape: f32[1,128], index: 2, kind: input, shape index: {}]
  %s3 = inlined_call_operand.hbm [shape: bf16[1152,128], index: 3, kind: input, shape index: {}]
  %s4 = inlined_call_operand.vmem [shape: f32[1,128], index: 4, kind: input, shape index: {}]
  %s5 = inlined_call_operand.hbm [shape: bf16[128,128], index: 5, kind: input, shape index: {}]
  %s6 = inlined_call_operand.vmem [shape: f32[1,128], index: 6, kind: input, shape index: {}]
  %s7 = inlined_call_operand.hbm [shape: f32[128,128], index: 7, kind: input, shape index: {}]
  %s8 = inlined_call_operand.vmem [shape: f32[1,128], index: 8, kind: input, shape index: {}]
  %s9 = inlined_call_operand.hbm [shape: f32[128,128], index: 9, kind: input, shape index: {}]
  %s10 = inlined_call_operand.vmem [shape: f32[1,128], index: 10, kind: input, shape index: {}]
  %s11 = inlined_call_operand.hbm [shape: bf16[128,128], index: 11, kind: input, shape index: {}]
  %s12 = inlined_call_operand.vmem [shape: f32[1,128], index: 12, kind: input, shape index: {}]
  %s13 = inlined_call_operand.hbm [shape: bf16[2,16,16,128], index: 13, kind: output, shape index: {}]
  %s14 = sld [smem:[#allocation0]]
  $region113: #{tpu_custom_call.1} parent=0
    _
  %s16 = ssub.s32 1, %s14
  %s17 = scalar_select 0, %s16, %s14
  $region1: #{tpu_custom_call.1} parent=0
    #allocation3 [shape = 'u8[131072]{0}', space=vmem, size = 0x20000, scoped, tag = 'input window, operand 0']
    #allocation4 [shape = 's32[2]{0}', space=sflag, size = 0x8, scoped, tag = 'scoped memory for tpu_custom_call.1']
    #allocation5 [shape = 's32[2]{0}', space=sflag, size = 0x8, scoped, tag = 'scoped memory for tpu_custom_call.1']
    #allocation6 [shape = 'u8[32768]{0}', space=vmem, size = 0x8000, scoped, tag = 'input window, operand 1, single buffered']
    #allocation7 [shape = 's32[1]{0}', space=sflag, size = 0x4, scoped, tag = 'scoped memory for tpu_custom_call.1']
    #allocation8 [shape = 'u8[294912]{0}', space=vmem, size = 0x48000, scoped, tag = 'input window, operand 3, single buffered']
    #allocation9 [shape = 'u8[32768]{0}', space=vmem, size = 0x8000, scoped, tag = 'input window, operand 5, single buffered']
    #allocation10 [shape = 's32[1]{0}', space=sflag, size = 0x4, scoped, tag = 'scoped memory for tpu_custom_call.1']
    #allocation11 [shape = 'u8[65536]{0}', space=vmem, size = 0x10000, scoped, tag = 'input window, operand 7, single buffered']
    #allocation12 [shape = 'u8[65536]{0}', space=vmem, size = 0x10000, scoped, tag = 'input window, operand 9, single buffered']
    #allocation13 [shape = 's32[1]{0}', space=sflag, size = 0x4, scoped, tag = 'scoped memory for tpu_custom_call.1']
    #allocation14 [shape = 'u8[32768]{0}', space=vmem, size = 0x8000, scoped, tag = 'input window, operand 11, single buffered']
    #allocation15 [shape = 'u8[131072]{0}', space=vmem, size = 0x20000, scoped, tag = 'output window, operand 0']
    %18 = vsyncpa [#allocation4], 0
    %s19 = scalar_lea.sflag [#allocation4], 1
    %20 = vsyncpa %s19, 0
    %21 = vsyncpa [#allocation7], 0
    %22 = vsyncpa [#allocation10], 0
    %23 = vsyncpa [#allocation13], 0
    %24 = vsyncpa [#allocation5], 0
    %s25 = scalar_lea.sflag [#allocation5], 1
    %26 = vsyncpa %s25, 0
    loop: start=0, step=1, limit=4
    $region2: #{tpu_custom_call.1} parent=1 // loop_pre_header
      _
    $region3: #{tpu_custom_call.1} parent=1 // loop_header
      %s28 = sphi 0, %s32
      %p29 = scmp.ge.s32.totalorder %s28, 4
      %s38 = sphi 0, %s40
      %s41 = sphi 0, %s38
      %s42 = sphi 0, %s41
      %s58 = sphi 0, %s42
      %s62 = sphi 0, %s62
      %s64 = sphi 0, %s62
      %s65 = sphi 0, %s64
      %s79 = sphi 0, %s65
      %s83 = sphi 0, %s83
      %s85 = sphi 0, %s83
      %s86 = sphi 0, %s85
      %s100 = sphi 0, %s86
      %s104 = sphi 0, %s104
      %s106 = sphi 0, %s104
      %s107 = sphi 0, %s106
      %s121 = sphi 0, %s107
      %s125 = sphi 0, %s125
      %s127 = sphi 0, %s125
      %s128 = sphi 0, %s127
      %s142 = sphi 0, %s128
      %s146 = sphi 0, %s146
      %s148 = sphi 0, %s146
      %s149 = sphi 0, %s148
      %s163 = sphi 0, %s149
      %s167 = sphi 0, %s167
      %s169 = sphi 0, %s167
      %s170 = sphi 0, %s169
      %s184 = sphi 0, %s170
      %s188 = sphi 0, %s188
      %s190 = sphi 0, %s188
      %s191 = sphi 0, %s190
      %s205 = sphi 0, %s191
      %s209 = sphi 0, %s209
      %s211 = sphi 0, %s209
      %s212 = sphi 0, %s211
      %s226 = sphi 0, %s212
      %s230 = sphi 0, %s230
      %s232 = sphi 0, %s230
      %s233 = sphi 0, %s232
      %s247 = sphi 0, %s233
      %s251 = sphi 0, %s251
      %s253 = sphi 0, %s251
      %s254 = sphi 0, %s253
      %s268 = sphi 0, %s254
      %s272 = sphi 0, %s272
      %s274 = sphi 0, %s272
      %s275 = sphi 0, %s274
      %s289 = sphi 0, %s275
      %s293 = sphi 0, %s293
      %s295 = sphi 0, %s293
      %s296 = sphi 0, %s295
      %s310 = sphi 0, %s296
      %s316 = sphi 0, %s318
      %s319 = sphi 0, %s316
      %s320 = sphi 0, %s319
      %s336 = sphi 0, %s320
    $region4: #{tpu_custom_call.1} parent=1 // loop_header_branch
      %31 = sbr.rel (%p29) target = $region8
    $region5: #{tpu_custom_call.1} parent=1 // loop_body
      %s33 = ssub.s32 %s28, 1
      %s34 = ssub.s32 %s28, 2
      %s35 = sadd.s32 %s28, 1
      %s36 = ssub.s32 %s28, %s35
      %p37 = scmp.eq.s32.totalorder %s36, 0
      %s39 = sadd.s32 %s38, 1
      %s40 = scalar_select %p37, %s38, %s39
      %p43 = pneg %p37
      %p44 = scmp.eq.s32.totalorder %s28, 1
      %p45 = por %p43, %p44
      %p46 = scmp.ne.s32.totalorder %s38, %s41
      %p47 = scmp.eq.s32.totalorder %s28, 0
      %p48 = por %p46, %p47
      %p49 = scmp.ne.s32.totalorder %s38, %s41
      %p50 = scmp.eq.s32.totalorder %s33, 1
      %p51 = por %p49, %p50
      %p52 = scmp.ne.s32.totalorder %s41, %s42
      %p53 = scmp.eq.s32.totalorder %s33, 0
      %p54 = por %p52, %p53
      %p55 = scmp.ne.s32.totalorder %s41, %s42
      %p56 = scmp.eq.s32.totalorder %s34, 1
      %p57 = por %p55, %p56
      %p59 = scmp.ne.s32.totalorder %s42, %s58
      %p60 = scmp.eq.s32.totalorder %s34, 0
      %p61 = por %p59, %p60
      %s63 = sadd.s32 %s62, 1
      %p66 = scmp.eq.s32.totalorder %s28, 1
      %p67 = scmp.ne.s32.totalorder %s62, %s64
      %p68 = scmp.eq.s32.totalorder %s28, 0
      %p69 = por %p67, %p68
      %p70 = scmp.ne.s32.totalorder %s62, %s64
      %p71 = scmp.eq.s32.totalorder %s33, 1
      %p72 = por %p70, %p71
      %p73 = scmp.ne.s32.totalorder %s64, %s65
      %p74 = scmp.eq.s32.totalorder %s33, 0
      %p75 = por %p73, %p74
      %p76 = scmp.ne.s32.totalorder %s64, %s65
      %p77 = scmp.eq.s32.totalorder %s34, 1
      %p78 = por %p76, %p77
      %p80 = scmp.ne.s32.totalorder %s65, %s79
      %p81 = scmp.eq.s32.totalorder %s34, 0
      %p82 = por %p80, %p81
      %s84 = sadd.s32 %s83, 1
      %p87 = scmp.eq.s32.totalorder %s28, 1
      %p88 = scmp.ne.s32.totalorder %s83, %s85
      %p89 = scmp.eq.s32.totalorder %s28, 0
      %p90 = por %p88, %p89
      %p91 = scmp.ne.s32.totalorder %s83, %s85
      %p92 = scmp.eq.s32.totalorder %s33, 1
      %p93 = por %p91, %p92
      %p94 = scmp.ne.s32.totalorder %s85, %s86
      %p95 = scmp.eq.s32.totalorder %s33, 0
      %p96 = por %p94, %p95
      %p97 = scmp.ne.s32.totalorder %s85, %s86
      %p98 = scmp.eq.s32.totalorder %s34, 1
      %p99 = por %p97, %p98
      %p101 = scmp.ne.s32.totalorder %s86, %s100
      %p102 = scmp.eq.s32.totalorder %s34, 0
      %p103 = por %p101, %p102
      %s105 = sadd.s32 %s104, 1
      %p108 = scmp.eq.s32.totalorder %s28, 1
      %p109 = scmp.ne.s32.totalorder %s104, %s106
      %p110 = scmp.eq.s32.totalorder %s28, 0
      %p111 = por %p109, %p110
      %p112 = scmp.ne.s32.totalorder %s104, %s106
      %p113 = scmp.eq.s32.totalorder %s33, 1
      %p114 = por %p112, %p113
      %p115 = scmp.ne.s32.totalorder %s106, %s107
      %p116 = scmp.eq.s32.totalorder %s33, 0
      %p117 = por %p115, %p116
      %p118 = scmp.ne.s32.totalorder %s106, %s107
      %p119 = scmp.eq.s32.totalorder %s34, 1
      %p120 = por %p118, %p119
      %p122 = scmp.ne.s32.totalorder %s107, %s121
      %p123 = scmp.eq.s32.totalorder %s34, 0
      %p124 = por %p122, %p123
      %s126 = sadd.s32 %s125, 1
      %p129 = scmp.eq.s32.totalorder %s28, 1
      %p130 = scmp.ne.s32.totalorder %s125, %s127
      %p131 = scmp.eq.s32.totalorder %s28, 0
      %p132 = por %p130, %p131
      %p133 = scmp.ne.s32.totalorder %s125, %s127
      %p134 = scmp.eq.s32.totalorder %s33, 1
      %p135 = por %p133, %p134
      %p136 = scmp.ne.s32.totalorder %s127, %s128
      %p137 = scmp.eq.s32.totalorder %s33, 0
      %p138 = por %p136, %p137
      %p139 = scmp.ne.s32.totalorder %s127, %s128
      %p140 = scmp.eq.s32.totalorder %s34, 1
      %p141 = por %p139, %p140
      %p143 = scmp.ne.s32.totalorder %s128, %s142
      %p144 = scmp.eq.s32.totalorder %s34, 0
      %p145 = por %p143, %p144
      %s147 = sadd.s32 %s146, 1
      %p150 = scmp.eq.s32.totalorder %s28, 1
      %p151 = scmp.ne.s32.totalorder %s146, %s148
      %p152 = scmp.eq.s32.totalorder %s28, 0
      %p153 = por %p151, %p152
      %p154 = scmp.ne.s32.totalorder %s146, %s148
      %p155 = scmp.eq.s32.totalorder %s33, 1
      %p156 = por %p154, %p155
      %p157 = scmp.ne.s32.totalorder %s148, %s149
      %p158 = scmp.eq.s32.totalorder %s33, 0
      %p159 = por %p157, %p158
      %p160 = scmp.ne.s32.totalorder %s148, %s149
      %p161 = scmp.eq.s32.totalorder %s34, 1
      %p162 = por %p160, %p161
      %p164 = scmp.ne.s32.totalorder %s149, %s163
      %p165 = scmp.eq.s32.totalorder %s34, 0
      %p166 = por %p164, %p165
      %s168 = sadd.s32 %s167, 1
      %p171 = scmp.eq.s32.totalorder %s28, 1
      %p172 = scmp.ne.s32.totalorder %s167, %s169
      %p173 = scmp.eq.s32.totalorder %s28, 0
      %p174 = por %p172, %p173
      %p175 = scmp.ne.s32.totalorder %s167, %s169
      %p176 = scmp.eq.s32.totalorder %s33, 1
      %p177 = por %p175, %p176
      %p178 = scmp.ne.s32.totalorder %s169, %s170
      %p179 = scmp.eq.s32.totalorder %s33, 0
      %p180 = por %p178, %p179
      %p181 = scmp.ne.s32.totalorder %s169, %s170
      %p182 = scmp.eq.s32.totalorder %s34, 1
      %p183 = por %p181, %p182
      %p185 = scmp.ne.s32.totalorder %s170, %s184
      %p186 = scmp.eq.s32.totalorder %s34, 0
      %p187 = por %p185, %p186
      %s189 = sadd.s32 %s188, 1
      %p192 = scmp.eq.s32.totalorder %s28, 1
      %p193 = scmp.ne.s32.totalorder %s188, %s190
      %p194 = scmp.eq.s32.totalorder %s28, 0
      %p195 = por %p193, %p194
      %p196 = scmp.ne.s32.totalorder %s188, %s190
      %p197 = scmp.eq.s32.totalorder %s33, 1
      %p198 = por %p196, %p197
      %p199 = scmp.ne.s32.totalorder %s190, %s191
      %p200 = scmp.eq.s32.totalorder %s33, 0
      %p201 = por %p199, %p200
      %p202 = scmp.ne.s32.totalorder %s190, %s191
      %p203 = scmp.eq.s32.totalorder %s34, 1
      %p204 = por %p202, %p203
      %p206 = scmp.ne.s32.totalorder %s191, %s205
      %p207 = scmp.eq.s32.totalorder %s34, 0
      %p208 = por %p206, %p207
      %s210 = sadd.s32 %s209, 1
      %p213 = scmp.eq.s32.totalorder %s28, 1
      %p214 = scmp.ne.s32.totalorder %s209, %s211
      %p215 = scmp.eq.s32.totalorder %s28, 0
      %p216 = por %p214, %p215
      %p217 = scmp.ne.s32.totalorder %s209, %s211
      %p218 = scmp.eq.s32.totalorder %s33, 1
      %p219 = por %p217, %p218
      %p220 = scmp.ne.s32.totalorder %s211, %s212
      %p221 = scmp.eq.s32.totalorder %s33, 0
      %p222 = por %p220, %p221
      %p223 = scmp.ne.s32.totalorder %s211, %s212
      %p224 = scmp.eq.s32.totalorder %s34, 1
      %p225 = por %p223, %p224
      %p227 = scmp.ne.s32.totalorder %s212, %s226
      %p228 = scmp.eq.s32.totalorder %s34, 0
      %p229 = por %p227, %p228
      %s231 = sadd.s32 %s230, 1
      %p234 = scmp.eq.s32.totalorder %s28, 1
      %p235 = scmp.ne.s32.totalorder %s230, %s232
      %p236 = scmp.eq.s32.totalorder %s28, 0
      %p237 = por %p235, %p236
      %p238 = scmp.ne.s32.totalorder %s230, %s232
      %p239 = scmp.eq.s32.totalorder %s33, 1
      %p240 = por %p238, %p239
      %p241 = scmp.ne.s32.totalorder %s232, %s233
      %p242 = scmp.eq.s32.totalorder %s33, 0
      %p243 = por %p241, %p242
      %p244 = scmp.ne.s32.totalorder %s232, %s233
      %p245 = scmp.eq.s32.totalorder %s34, 1
      %p246 = por %p244, %p245
      %p248 = scmp.ne.s32.totalorder %s233, %s247
      %p249 = scmp.eq.s32.totalorder %s34, 0
      %p250 = por %p248, %p249
      %s252 = sadd.s32 %s251, 1
      %p255 = scmp.eq.s32.totalorder %s28, 1
      %p256 = scmp.ne.s32.totalorder %s251, %s253
      %p257 = scmp.eq.s32.totalorder %s28, 0
      %p258 = por %p256, %p257
      %p259 = scmp.ne.s32.totalorder %s251, %s253
      %p260 = scmp.eq.s32.totalorder %s33, 1
      %p261 = por %p259, %p260
      %p262 = scmp.ne.s32.totalorder %s253, %s254
      %p263 = scmp.eq.s32.totalorder %s33, 0
      %p264 = por %p262, %p263
      %p265 = scmp.ne.s32.totalorder %s253, %s254
      %p266 = scmp.eq.s32.totalorder %s34, 1
      %p267 = por %p265, %p266
      %p269 = scmp.ne.s32.totalorder %s254, %s268
      %p270 = scmp.eq.s32.totalorder %s34, 0
      %p271 = por %p269, %p270
      %s273 = sadd.s32 %s272, 1
      %p276 = scmp.eq.s32.totalorder %s28, 1
      %p277 = scmp.ne.s32.totalorder %s272, %s274
      %p278 = scmp.eq.s32.totalorder %s28, 0
      %p279 = por %p277, %p278
      %p280 = scmp.ne.s32.totalorder %s272, %s274
      %p281 = scmp.eq.s32.totalorder %s33, 1
      %p282 = por %p280, %p281
      %p283 = scmp.ne.s32.totalorder %s274, %s275
      %p284 = scmp.eq.s32.totalorder %s33, 0
      %p285 = por %p283, %p284
      %p286 = scmp.ne.s32.totalorder %s274, %s275
      %p287 = scmp.eq.s32.totalorder %s34, 1
      %p288 = por %p286, %p287
      %p290 = scmp.ne.s32.totalorder %s275, %s289
      %p291 = scmp.eq.s32.totalorder %s34, 0
      %p292 = por %p290, %p291
      %s294 = sadd.s32 %s293, 1
      %p297 = scmp.eq.s32.totalorder %s28, 1
      %p298 = scmp.ne.s32.totalorder %s293, %s295
      %p299 = scmp.eq.s32.totalorder %s28, 0
      %p300 = por %p298, %p299
      %p301 = scmp.ne.s32.totalorder %s293, %s295
      %p302 = scmp.eq.s32.totalorder %s33, 1
      %p303 = por %p301, %p302
      %p304 = scmp.ne.s32.totalorder %s295, %s296
      %p305 = scmp.eq.s32.totalorder %s33, 0
      %p306 = por %p304, %p305
      %p307 = scmp.ne.s32.totalorder %s295, %s296
      %p308 = scmp.eq.s32.totalorder %s34, 1
      %p309 = por %p307, %p308
      %p311 = scmp.ne.s32.totalorder %s296, %s310
      %p312 = scmp.eq.s32.totalorder %s34, 0
      %p313 = por %p311, %p312
      %s314 = ssub.s32 %s28, %s35
      %p315 = scmp.eq.s32.totalorder %s314, 0
      %s317 = sadd.s32 %s316, 1
      %s318 = scalar_select %p315, %s316, %s317
      %p321 = pneg %p315
      %p322 = scmp.eq.s32.totalorder %s28, 1
      %p323 = por %p321, %p322
      %p324 = scmp.ne.s32.totalorder %s316, %s319
      %p325 = scmp.eq.s32.totalorder %s28, 0
      %p326 = por %p324, %p325
      %p327 = scmp.ne.s32.totalorder %s316, %s319
      %p328 = scmp.eq.s32.totalorder %s33, 1
      %p329 = por %p327, %p328
      %p330 = scmp.ne.s32.totalorder %s319, %s320
      %p331 = scmp.eq.s32.totalorder %s33, 0
      %p332 = por %p330, %p331
      %p333 = scmp.ne.s32.totalorder %s319, %s320
      %p334 = scmp.eq.s32.totalorder %s34, 1
      %p335 = por %p333, %p334
      %p337 = scmp.ne.s32.totalorder %s320, %s336
      %p338 = scmp.eq.s32.totalorder %s34, 0
      %p339 = por %p337, %p338
      %p340 = scmp.le.s32.totalorder 1, %s28
      %p341 = scmp.lt.s32.totalorder %s28, 3
      %p342 = pnand %p340, %p341
      %p343 = pneg %p342
      // Predicated region
      $region9: #{tpu_custom_call.1} parent=5 // pred_check
        _
      $region10: #{tpu_custom_call.1} parent=5 // pred_check_branch
        %345 = sbr.rel (%p342) target = $region12
      $region11: #{tpu_custom_call.1} parent=5 // pred_region
        %s346 = ssub.s32 %s28, 1
        // Predicated region
        $region13: #{tpu_custom_call.1} parent=11 // pred_check
          %p347 = pneg %p75
        $region14: #{tpu_custom_call.1} parent=11 // pred_check_branch
          %349 = sbr.rel (%p347) target = $region16
        $region15: #{tpu_custom_call.1} parent=11 // pred_region
          %s351 = ssub.s32 1024, 1024
          %352 = vsyncadd [#allocation7], %s351
          %s353 = sshll.u32 [#allocation6], 4
          %s354 = int_to_ptr.vmem [resolvable:$true] %s353
          %359 = dma.hbm_to_vmem [thread:$0]  %s1, 1024, %s354, [#allocation7], 64, 64, 4
        $region16: #{tpu_custom_call.1} parent=11 // pred_fallthru
          _
        // Predicated region
        $region17: #{tpu_custom_call.1} parent=11 // pred_check
          %p360 = pneg %p96
        $region18: #{tpu_custom_call.1} parent=11 // pred_check_branch
          %362 = sbr.rel (%p360) target = $region20
        $region19: #{tpu_custom_call.1} parent=11 // pred_region
          _
        $region20: #{tpu_custom_call.1} parent=11 // pred_fallthru
          _
        // Predicated region
        $region21: #{tpu_custom_call.1} parent=11 // pred_check
          %p363 = pneg %p117
        $region22: #{tpu_custom_call.1} parent=11 // pred_check_branch
          %365 = sbr.rel (%p363) target = $region24
        $region23: #{tpu_custom_call.1} parent=11 // pred_region
          %s367 = ssub.s32 9216, 9216
          %368 = vsyncadd [#allocation7], %s367
          %s369 = sshll.u32 [#allocation8], 4
          %s370 = int_to_ptr.vmem [resolvable:$true] %s369
          %375 = dma.hbm_to_vmem [thread:$0]  %s3, 9216, %s370, [#allocation7], 64, 64, 4
        $region24: #{tpu_custom_call.1} parent=11 // pred_fallthru
          _
        // Predicated region
        $region25: #{tpu_custom_call.1} parent=11 // pred_check
          %p376 = pneg %p138
        $region26: #{tpu_custom_call.1} parent=11 // pred_check_branch
          %378 = sbr.rel (%p376) target = $region28
        $region27: #{tpu_custom_call.1} parent=11 // pred_region
          _
        $region28: #{tpu_custom_call.1} parent=11 // pred_fallthru
          _
        // Predicated region
        $region29: #{tpu_custom_call.1} parent=11 // pred_check
          %p379 = pneg %p159
        $region30: #{tpu_custom_call.1} parent=11 // pred_check_branch
          %381 = sbr.rel (%p379) target = $region32
        $region31: #{tpu_custom_call.1} parent=11 // pred_region
          %s383 = ssub.s32 1024, 1024
          %384 = vsyncadd [#allocation10], %s383
          %s385 = sshll.u32 [#allocation9], 4
          %s386 = int_to_ptr.vmem [resolvable:$true] %s385
          %391 = dma.hbm_to_vmem [thread:$0]  %s5, 1024, %s386, [#allocation10], 64, 64, 4
        $region32: #{tpu_custom_call.1} parent=11 // pred_fallthru
          _
        // Predicated region
        $region33: #{tpu_custom_call.1} parent=11 // pred_check
          %p392 = pneg %p180
        $region34: #{tpu_custom_call.1} parent=11 // pred_check_branch
          %394 = sbr.rel (%p392) target = $region36
        $region35: #{tpu_custom_call.1} parent=11 // pred_region
          _
        $region36: #{tpu_custom_call.1} parent=11 // pred_fallthru
          _
        // Predicated region
        $region37: #{tpu_custom_call.1} parent=11 // pred_check
          %p395 = pneg %p201
        $region38: #{tpu_custom_call.1} parent=11 // pred_check_branch
          %397 = sbr.rel (%p395) target = $region40
        $region39: #{tpu_custom_call.1} parent=11 // pred_region
          %s399 = ssub.s32 2048, 2048
          %400 = vsyncadd [#allocation10], %s399
          %s401 = sshll.u32 [#allocation11], 4
          %s402 = int_to_ptr.vmem [resolvable:$true] %s401
          %407 = dma.hbm_to_vmem [thread:$0]  %s7, 2048, %s402, [#allocation10], 128, 128, 8
        $region40: #{tpu_custom_call.1} parent=11 // pred_fallthru
          _
        // Predicated region
        $region41: #{tpu_custom_call.1} parent=11 // pred_check
          %p408 = pneg %p222
        $region42: #{tpu_custom_call.1} parent=11 // pred_check_branch
          %410 = sbr.rel (%p408) target = $region44
        $region43: #{tpu_custom_call.1} parent=11 // pred_region
          _
        $region44: #{tpu_custom_call.1} parent=11 // pred_fallthru
          _
        // Predicated region
        $region45: #{tpu_custom_call.1} parent=11 // pred_check
          %p411 = pneg %p243
        $region46: #{tpu_custom_call.1} parent=11 // pred_check_branch
          %413 = sbr.rel (%p411) target = $region48
        $region47: #{tpu_custom_call.1} parent=11 // pred_region
          %s415 = ssub.s32 2048, 2048
          %416 = vsyncadd [#allocation13], %s415
          %s417 = sshll.u32 [#allocation12], 4
          %s418 = int_to_ptr.vmem [resolvable:$true] %s417
          %423 = dma.hbm_to_vmem [thread:$0]  %s9, 2048, %s418, [#allocation13], 128, 128, 8
        $region48: #{tpu_custom_call.1} parent=11 // pred_fallthru
          _
        // Predicated region
        $region49: #{tpu_custom_call.1} parent=11 // pred_check
          %p424 = pneg %p264
        $region50: #{tpu_custom_call.1} parent=11 // pred_check_branch
          %426 = sbr.rel (%p424) target = $region52
        $region51: #{tpu_custom_call.1} parent=11 // pred_region
          _
        $region52: #{tpu_custom_call.1} parent=11 // pred_fallthru
          _
        // Predicated region
        $region53: #{tpu_custom_call.1} parent=11 // pred_check
          %p427 = pneg %p285
        $region54: #{tpu_custom_call.1} parent=11 // pred_check_branch
          %429 = sbr.rel (%p427) target = $region56
        $region55: #{tpu_custom_call.1} parent=11 // pred_region
          %s431 = ssub.s32 1024, 1024
          %432 = vsyncadd [#allocation13], %s431
          %s433 = sshll.u32 [#allocation14], 4
          %s434 = int_to_ptr.vmem [resolvable:$true] %s433
          %439 = dma.hbm_to_vmem [thread:$0]  %s11, 1024, %s434, [#allocation13], 64, 64, 4
        $region56: #{tpu_custom_call.1} parent=11 // pred_fallthru
          _
        // Predicated region
        $region57: #{tpu_custom_call.1} parent=11 // pred_check
          %p440 = pneg %p306
        $region58: #{tpu_custom_call.1} parent=11 // pred_check_branch
          %442 = sbr.rel (%p440) target = $region60
        $region59: #{tpu_custom_call.1} parent=11 // pred_region
          _
        $region60: #{tpu_custom_call.1} parent=11 // pred_fallthru
          _
      $region12: #{tpu_custom_call.1} parent=5 // pred_fallthru
        _
      %p443 = scmp.lt.s32.totalorder %s28, 2
      // Predicated region
      $region61: #{tpu_custom_call.1} parent=5 // pred_check
        %p444 = pneg %p443
      $region62: #{tpu_custom_call.1} parent=5 // pred_check_branch
        %446 = sbr.rel (%p444) target = $region64
      $region63: #{tpu_custom_call.1} parent=5 // pred_region
        // Predicated region
        $region65: #{tpu_custom_call.1} parent=63 // pred_check
          %p447 = pneg %p48
        $region66: #{tpu_custom_call.1} parent=63 // pred_check_branch
          %449 = sbr.rel (%p447) target = $region68
        $region67: #{tpu_custom_call.1} parent=63 // pred_region
          %s450 = sand.u32 %s38, 1
          %s451 = scalar_lea.sflag [#allocation4], %s450
          %s452 = sand.u32 %s38, 1
          %s453 = smul.addr %s452, 128
          %s454 = scalar_lea.vmem [#allocation3], %s453
          %s456 = ssub.s32 2048, 2048
          %457 = vsyncadd %s451, %s456
          %s458 = smul.addr %s28, 32
          %s459 = smul.addr %s458, 64
          %s460 = scalar_lea.hbm %s0, %s459
          %s461 = sshll.u32 %s454, 4
          %s462 = int_to_ptr.vmem [resolvable:$true] %s461
          %467 = dma.hbm_to_vmem [thread:$0]  %s460, 2048, %s462, %s451, 64, 64, 4
        $region68: #{tpu_custom_call.1} parent=63 // pred_fallthru
          _
      $region64: #{tpu_custom_call.1} parent=5 // pred_fallthru
        _
      %p468 = scmp.le.s32.totalorder 1, %s28
      %p469 = scmp.lt.s32.totalorder %s28, 3
      %p470 = pnand %p468, %p469
      %p471 = pneg %p470
      // Predicated region
      $region69: #{tpu_custom_call.1} parent=5 // pred_check
        _
      $region70: #{tpu_custom_call.1} parent=5 // pred_check_branch
        %473 = sbr.rel (%p470) target = $region72
      $region71: #{tpu_custom_call.1} parent=5 // pred_region
        %s474 = ssub.s32 %s28, 1
        %s475 = sand.u32 %s41, 1
        %s476 = scalar_lea.sflag [#allocation4], %s475
        %s477 = sand.u32 %s41, 1
        %s478 = smul.addr %s477, 128
        %s479 = scalar_lea.vmem [#allocation3], %s478
        // Predicated region
        $region73: #{tpu_custom_call.1} parent=71 // pred_check
          %p480 = pneg %p54
        $region74: #{tpu_custom_call.1} parent=71 // pred_check_branch
          %482 = sbr.rel (%p480) target = $region76
        $region75: #{tpu_custom_call.1} parent=71 // pred_region
          %483 = dma.done %s476, 2048
        $region76: #{tpu_custom_call.1} parent=71 // pred_fallthru
          _
        // Predicated region
        $region77: #{tpu_custom_call.1} parent=71 // pred_check
          %p484 = pneg %p75
        $region78: #{tpu_custom_call.1} parent=71 // pred_check_branch
          %486 = sbr.rel (%p484) target = $region80
        $region79: #{tpu_custom_call.1} parent=71 // pred_region
          %487 = dma.done [#allocation7], 1024
        $region80: #{tpu_custom_call.1} parent=71 // pred_fallthru
          _
        // Predicated region
        $region81: #{tpu_custom_call.1} parent=71 // pred_check
          %p488 = pneg %p117
        $region82: #{tpu_custom_call.1} parent=71 // pred_check_branch
          %490 = sbr.rel (%p488) target = $region84
        $region83: #{tpu_custom_call.1} parent=71 // pred_region
          %491 = dma.done [#allocation7], 9216
        $region84: #{tpu_custom_call.1} parent=71 // pred_fallthru
          _
        // Predicated region
        $region85: #{tpu_custom_call.1} parent=71 // pred_check
          %p492 = pneg %p159
        $region86: #{tpu_custom_call.1} parent=71 // pred_check_branch
          %494 = sbr.rel (%p492) target = $region88
        $region87: #{tpu_custom_call.1} parent=71 // pred_region
          %495 = dma.done [#allocation10], 1024
        $region88: #{tpu_custom_call.1} parent=71 // pred_fallthru
          _
        // Predicated region
        $region89: #{tpu_custom_call.1} parent=71 // pred_check
          %p496 = pneg %p201
        $region90: #{tpu_custom_call.1} parent=71 // pred_check_branch
          %498 = sbr.rel (%p496) target = $region92
        $region91: #{tpu_custom_call.1} parent=71 // pred_region
          %499 = dma.done [#allocation10], 2048
        $region92: #{tpu_custom_call.1} parent=71 // pred_fallthru
          _
        // Predicated region
        $region93: #{tpu_custom_call.1} parent=71 // pred_check
          %p500 = pneg %p243
        $region94: #{tpu_custom_call.1} parent=71 // pred_check_branch
          %502 = sbr.rel (%p500) target = $region96
        $region95: #{tpu_custom_call.1} parent=71 // pred_region
          %503 = dma.done [#allocation13], 2048
        $region96: #{tpu_custom_call.1} parent=71 // pred_fallthru
          _
        // Predicated region
        $region97: #{tpu_custom_call.1} parent=71 // pred_check
          %p504 = pneg %p285
        $region98: #{tpu_custom_call.1} parent=71 // pred_check_branch
          %506 = sbr.rel (%p504) target = $region100
        $region99: #{tpu_custom_call.1} parent=71 // pred_region
          %507 = dma.done [#allocation13], 1024
        $region100: #{tpu_custom_call.1} parent=71 // pred_fallthru
          _
        %s508 = sand.u32 %s41, 1
        %s509 = scalar_lea.sflag [#allocation4], %s508
        %s510 = sand.u32 %s41, 1
        %s511 = smul.addr %s510, 128
        %s512 = scalar_lea.vmem [#allocation3], %s511
        %p513 = pneg %p54
        %p514 = pneg %p51
        %p515 = pneg %p75
        %p516 = pneg %p72
        %p517 = pneg %p96
        %p518 = pneg %p93
        %p519 = pneg %p117
        %p520 = pneg %p114
        %p521 = pneg %p138
        %p522 = pneg %p135
        %p523 = pneg %p159
        %p524 = pneg %p156
        %p525 = pneg %p180
        %p526 = pneg %p177
        %p527 = pneg %p201
        %p528 = pneg %p198
        %p529 = pneg %p222
        %p530 = pneg %p219
        %p531 = pneg %p243
        %p532 = pneg %p240
        %p533 = pneg %p264
        %p534 = pneg %p261
        %p535 = pneg %p285
        %p536 = pneg %p282
        %p537 = pneg %p306
        %p538 = pneg %p303
        %p539 = pneg %p332
        %p540 = pneg %p329
        %s541 = sand.u32 %s319, 1
        %s542 = scalar_lea.sflag [#allocation5], %s541
        %s543 = sand.u32 %s319, 1
        %s544 = smul.addr %s543, 128
        %s545 = scalar_lea.vmem [#allocation15], %s544
        %v547 = vld [vmem:[%s479] sm:$0xf]
        %v548 = vld [vmem:[%s479 + $0x4] sm:$0xf]
        %v549 = vld [vmem:[%s479 + $0x8] sm:$0xf]
        %v550 = vld [vmem:[%s479 + $0xc] sm:$0xf]
        %v551 = vld [vmem:[%s479 + $0x10] sm:$0xf]
        %v552 = vld [vmem:[%s479 + $0x14] sm:$0xf]
        %v553 = vld [vmem:[%s479 + $0x18] sm:$0xf]
        %v554 = vld [vmem:[%s479 + $0x1c] sm:$0xf]
        %v555 = vld [vmem:[%s479 + $0x20] sm:$0xf]
        %v556 = vld [vmem:[%s479 + $0x24] sm:$0xf]
        %v557 = vld [vmem:[%s479 + $0x28] sm:$0xf]
        %v558 = vld [vmem:[%s479 + $0x2c] sm:$0xf]
        %v559 = vld [vmem:[%s479 + $0x30] sm:$0xf]
        %v560 = vld [vmem:[%s479 + $0x34] sm:$0xf]
        %v561 = vld [vmem:[%s479 + $0x38] sm:$0xf]
        %v562 = vld [vmem:[%s479 + $0x3c] sm:$0xf]
        %v563 = vld [vmem:[%s479 + $0x40] sm:$0xf]
        %v564 = vld [vmem:[%s479 + $0x44] sm:$0xf]
        %v565 = vld [vmem:[%s479 + $0x48] sm:$0xf]
        %v566 = vld [vmem:[%s479 + $0x4c] sm:$0xf]
        %v567 = vld [vmem:[%s479 + $0x50] sm:$0xf]
        %v568 = vld [vmem:[%s479 + $0x54] sm:$0xf]
        %v569 = vld [vmem:[%s479 + $0x58] sm:$0xf]
        %v570 = vld [vmem:[%s479 + $0x5c] sm:$0xf]
        %v571 = vld [vmem:[%s479 + $0x60] sm:$0xf]
        %v572 = vld [vmem:[%s479 + $0x64] sm:$0xf]
        %v573 = vld [vmem:[%s479 + $0x68] sm:$0xf]
        %v574 = vld [vmem:[%s479 + $0x6c] sm:$0xf]
        %v575 = vld [vmem:[%s479 + $0x70] sm:$0xf]
        %v576 = vld [vmem:[%s479 + $0x74] sm:$0xf]
        %v577 = vld [vmem:[%s479 + $0x78] sm:$0xf]
        %v578 = vld [vmem:[%s479 + $0x7c] sm:$0xf]
        %v579 = vld [vmem:[#allocation6] sm:$0xf]
        %v580 = vld [vmem:[#allocation6 + $0x4] sm:$0xf]
        %v581 = vld [vmem:[#allocation6 + $0x8] sm:$0xf]
        %v582 = vld [vmem:[#allocation6 + $0xc] sm:$0xf]
        %v583 = vld [vmem:[#allocation6 + $0x10] sm:$0xf]
        %v584 = vld [vmem:[#allocation6 + $0x14] sm:$0xf]
        %v585 = vld [vmem:[#allocation6 + $0x18] sm:$0xf]
        %v586 = vld [vmem:[#allocation6 + $0x1c] sm:$0xf]
        %v587 = vld [vmem:[#allocation6 + $0x20] sm:$0xf]
        %v588 = vld [vmem:[#allocation6 + $0x24] sm:$0xf]
        %v589 = vld [vmem:[#allocation6 + $0x28] sm:$0xf]
        %v590 = vld [vmem:[#allocation6 + $0x2c] sm:$0xf]
        %v591 = vld [vmem:[#allocation6 + $0x30] sm:$0xf]
        %v592 = vld [vmem:[#allocation6 + $0x34] sm:$0xf]
        %v593 = vld [vmem:[#allocation6 + $0x38] sm:$0xf]
        %v594 = vld [vmem:[#allocation6 + $0x3c] sm:$0xf]
        %v595 = vld [vmem:[%s2] sm:$0x1]
        %v597 = vlaneseq
        %v598 = vshrl.u32 %v597, 7
        %v599 = vsub.s32 0, %v598
        %v600 = vrot.slane %v595, %v599
        %v634 = vunpack.c.l.b16 %v547
        %v635 = vunpack.c.l.b16 %v548
        %v636 = vunpack.c.l.b16 %v549
        %v637 = vunpack.c.l.b16 %v550
        %v638 = vunpack.c.l.b16 %v551
        %v639 = vunpack.c.l.b16 %v552
        %v640 = vunpack.c.l.b16 %v553
        %v641 = vunpack.c.l.b16 %v554
        %v642 = vunpack.c.l.b16 %v555
        %v643 = vunpack.c.l.b16 %v556
        %v644 = vunpack.c.l.b16 %v557
        %v645 = vunpack.c.l.b16 %v558
        %v646 = vunpack.c.l.b16 %v559
        %v647 = vunpack.c.l.b16 %v560
        %v648 = vunpack.c.l.b16 %v561
        %v649 = vunpack.c.l.b16 %v562
        %v650 = vunpack.c.l.b16 %v563
        %v651 = vunpack.c.l.b16 %v564
        %v652 = vunpack.c.l.b16 %v565
        %v653 = vunpack.c.l.b16 %v566
        %v654 = vunpack.c.l.b16 %v567
        %v655 = vunpack.c.l.b16 %v568
        %v656 = vunpack.c.l.b16 %v569
        %v657 = vunpack.c.l.b16 %v570
        %v658 = vunpack.c.l.b16 %v571
        %v659 = vunpack.c.l.b16 %v572
        %v660 = vunpack.c.l.b16 %v573
        %v661 = vunpack.c.l.b16 %v574
        %v662 = vunpack.c.l.b16 %v575
        %v663 = vunpack.c.l.b16 %v576
        %v664 = vunpack.c.l.b16 %v577
        %v665 = vunpack.c.l.b16 %v578
        %v666 = vpack.c.b16 %v635, %v634
        %v667 = vpack.c.b16 %v637, %v636
        %v668 = vpack.c.b16 %v639, %v638
        %v669 = vpack.c.b16 %v641, %v640
        %v670 = vpack.c.b16 %v643, %v642
        %v671 = vpack.c.b16 %v645, %v644
        %v672 = vpack.c.b16 %v647, %v646
        %v673 = vpack.c.b16 %v649, %v648
        %v674 = vpack.c.b16 %v651, %v650
        %v675 = vpack.c.b16 %v653, %v652
        %v676 = vpack.c.b16 %v655, %v654
        %v677 = vpack.c.b16 %v657, %v656
        %v678 = vpack.c.b16 %v659, %v658
        %v679 = vpack.c.b16 %v661, %v660
        %v680 = vpack.c.b16 %v663, %v662
        %v681 = vpack.c.b16 %v665, %v664
        %v714 = vunpack.c.l.b16 %v579
        %v715 = vunpack.c.l.b16 %v580
        %v716 = vunpack.c.l.b16 %v581
        %v717 = vunpack.c.l.b16 %v582
        %v718 = vunpack.c.l.b16 %v583
        %v719 = vunpack.c.l.b16 %v584
        %v720 = vunpack.c.l.b16 %v585
        %v721 = vunpack.c.l.b16 %v586
        %v722 = vunpack.c.l.b16 %v587
        %v723 = vunpack.c.l.b16 %v588
        %v724 = vunpack.c.l.b16 %v589
        %v725 = vunpack.c.l.b16 %v590
        %v726 = vunpack.c.l.b16 %v591
        %v727 = vunpack.c.l.b16 %v592
        %v728 = vunpack.c.l.b16 %v593
        %v729 = vunpack.c.l.b16 %v594
        %v730 = vpack.c.b16 %v715, %v714
        %v731 = vpack.c.b16 %v717, %v716
        %v732 = vpack.c.b16 %v719, %v718
        %v733 = vpack.c.b16 %v721, %v720
        %v734 = vpack.c.b16 %v723, %v722
        %v735 = vpack.c.b16 %v725, %v724
        %v736 = vpack.c.b16 %v727, %v726
        %v737 = vpack.c.b16 %v729, %v728
        %746 = vmatprep.subr.bf16.mxu0 0
        %747 = vmatpush1.bf16.msra.mxu0 %v730
        %748 = vmatprep.subr.bf16.mxu0 0
        %749 = vmatpush1.bf16.msra.mxu0 %v731
        %750 = vmatprep.subr.bf16.mxu0 0
        %751 = vmatpush1.bf16.msra.mxu0 %v732
        %752 = vmatprep.subr.bf16.mxu0 0
        %753 = vmatpush1.bf16.msra.mxu0 %v733
        %754 = vmatprep.subr.bf16.mxu0 0
        %755 = vmatpush1.bf16.msra.mxu0 %v734
        %756 = vmatprep.subr.bf16.mxu0 0
        %757 = vmatpush1.bf16.msra.mxu0 %v735
        %758 = vmatprep.subr.bf16.mxu0 0
        %759 = vmatpush1.bf16.msra.mxu0 %v736
        %760 = vmatprep.subr.bf16.mxu0 0
        %761 = vmatpush1.bf16.msra.mxu0 %v737
        %762 = vmatprep.subr.bf16.mxu0 0
        %763 = vmatpush1.bf16.msra.mxu0 0
        %764 = vmatprep.subr.bf16.mxu0 0
        %765 = vmatpush1.bf16.msra.mxu0 0
        %766 = vmatprep.subr.bf16.mxu0 0
        %767 = vmatpush1.bf16.msra.mxu0 0
        %768 = vmatprep.subr.bf16.mxu0 0
        %769 = vmatpush1.bf16.msra.mxu0 0
        %770 = vmatprep.subr.bf16.mxu0 0
        %771 = vmatpush1.bf16.msra.mxu0 0
        %772 = vmatprep.subr.bf16.mxu0 0
        %773 = vmatpush1.bf16.msra.mxu0 0
        %774 = vmatprep.subr.bf16.mxu0 0
        %775 = vmatpush1.bf16.msra.mxu0 0
        %776 = vmatprep.subr.bf16.mxu0 0
        %777 = vmatpush1.bf16.msra.mxu0 0
        %778 = vmatprep.mubr.bf16.mxu0 0
        %779 = vmatmul.mubr.bf16.gmra.mrb[0].mxu0 %v666
        %v780 = vpop.f32.mrb[0].mxu0
        %v781 = vadd.f32 %v600, %v780
        %v782 = vpop.f32.mrb[0].mxu0
        %v783 = vpop.f32.mrb[0].mxu0
        %v784 = vadd.f32 %v600, %v783
        %v785 = vpop.f32.mrb[0].mxu0
        %786 = vmatprep.mubr.bf16.mxu0 0
        %787 = vmatmul.mubr.bf16.gmra.mrb[0].mxu0 %v667
        %v788 = vpop.f32.mrb[0].mxu0
        %v789 = vadd.f32 %v600, %v788
        %v790 = vpop.f32.mrb[0].mxu0
        %v791 = vpop.f32.mrb[0].mxu0
        %v792 = vadd.f32 %v600, %v791
        %v793 = vpop.f32.mrb[0].mxu0
        %794 = vmatprep.mubr.bf16.mxu0 0
        %795 = vmatmul.mubr.bf16.gmra.mrb[0].mxu0 %v668
        %v796 = vpop.f32.mrb[0].mxu0
        %v797 = vadd.f32 %v600, %v796
        %v798 = vpop.f32.mrb[0].mxu0
        %v799 = vpop.f32.mrb[0].mxu0
        %v800 = vadd.f32 %v600, %v799
        %v801 = vpop.f32.mrb[0].mxu0
        %802 = vmatprep.mubr.bf16.mxu0 0
        %803 = vmatmul.mubr.bf16.gmra.mrb[0].mxu0 %v669
        %v804 = vpop.f32.mrb[0].mxu0
        %v805 = vadd.f32 %v600, %v804
        %v806 = vpop.f32.mrb[0].mxu0
        %v807 = vpop.f32.mrb[0].mxu0
        %v808 = vadd.f32 %v600, %v807
        %v809 = vpop.f32.mrb[0].mxu0
        %810 = vmatprep.mubr.bf16.mxu0 0
        %811 = vmatmul.mubr.bf16.gmra.mrb[0].mxu0 %v670
        %v812 = vpop.f32.mrb[0].mxu0
        %v813 = vadd.f32 %v600, %v812
        %v814 = vpop.f32.mrb[0].mxu0
        %v815 = vpop.f32.mrb[0].mxu0
        %v816 = vadd.f32 %v600, %v815
        %v817 = vpop.f32.mrb[0].mxu0
        %818 = vmatprep.mubr.bf16.mxu0 0
        %819 = vmatmul.mubr.bf16.gmra.mrb[0].mxu0 %v671
        %v820 = vpop.f32.mrb[0].mxu0
        %v821 = vadd.f32 %v600, %v820
        %v822 = vpop.f32.mrb[0].mxu0
        %v823 = vpop.f32.mrb[0].mxu0
        %v824 = vadd.f32 %v600, %v823
        %v825 = vpop.f32.mrb[0].mxu0
        %826 = vmatprep.mubr.bf16.mxu0 0
        %827 = vmatmul.mubr.bf16.gmra.mrb[0].mxu0 %v672
        %v828 = vpop.f32.mrb[0].mxu0
        %v829 = vadd.f32 %v600, %v828
        %v830 = vpop.f32.mrb[0].mxu0
        %v831 = vpop.f32.mrb[0].mxu0
        %v832 = vadd.f32 %v600, %v831
        %v833 = vpop.f32.mrb[0].mxu0
        %834 = vmatprep.mubr.bf16.mxu0 0
        %835 = vmatmul.mubr.bf16.gmra.mrb[0].mxu0 %v673
        %v836 = vpop.f32.mrb[0].mxu0
        %v837 = vadd.f32 %v600, %v836
        %v838 = vpop.f32.mrb[0].mxu0
        %v839 = vpop.f32.mrb[0].mxu0
        %v840 = vadd.f32 %v600, %v839
        %v841 = vpop.f32.mrb[0].mxu0
        %842 = vmatprep.mubr.bf16.mxu0 0
        %843 = vmatmul.mubr.bf16.gmra.mrb[0].mxu0 %v674
        %v844 = vpop.f32.mrb[0].mxu0
        %v845 = vadd.f32 %v600, %v844
        %v846 = vpop.f32.mrb[0].mxu0
        %v847 = vpop.f32.mrb[0].mxu0
        %v848 = vadd.f32 %v600, %v847
        %v849 = vpop.f32.mrb[0].mxu0
        %850 = vmatprep.mubr.bf16.mxu0 0
        %851 = vmatmul.mubr.bf16.gmra.mrb[0].mxu0 %v675
        %v852 = vpop.f32.mrb[0].mxu0
        %v853 = vadd.f32 %v600, %v852
        %v854 = vpop.f32.mrb[0].mxu0
        %v855 = vpop.f32.mrb[0].mxu0
        %v856 = vadd.f32 %v600, %v855
        %v857 = vpop.f32.mrb[0].mxu0
        %858 = vmatprep.mubr.bf16.mxu0 0
        %859 = vmatmul.mubr.bf16.gmra.mrb[0].mxu0 %v676
        %v860 = vpop.f32.mrb[0].mxu0
        %v861 = vadd.f32 %v600, %v860
        %v862 = vpop.f32.mrb[0].mxu0
        %v863 = vpop.f32.mrb[0].mxu0
        %v864 = vadd.f32 %v600, %v863
        %v865 = vpop.f32.mrb[0].mxu0
        %866 = vmatprep.mubr.bf16.mxu0 0
        %867 = vmatmul.mubr.bf16.gmra.mrb[0].mxu0 %v677
        %v868 = vpop.f32.mrb[0].mxu0
        %v869 = vadd.f32 %v600, %v868
        %v870 = vpop.f32.mrb[0].mxu0
        %v871 = vpop.f32.mrb[0].mxu0
        %v872 = vadd.f32 %v600, %v871
        %v873 = vpop.f32.mrb[0].mxu0
        %874 = vmatprep.mubr.bf16.mxu0 0
        %875 = vmatmul.mubr.bf16.gmra.mrb[0].mxu0 %v678
        %v876 = vpop.f32.mrb[0].mxu0
        %v877 = vadd.f32 %v600, %v876
        %v878 = vpop.f32.mrb[0].mxu0
        %v879 = vpop.f32.mrb[0].mxu0
        %v880 = vadd.f32 %v600, %v879
        %v881 = vpop.f32.mrb[0].mxu0
        %882 = vmatprep.mubr.bf16.mxu0 0
        %883 = vmatmul.mubr.bf16.gmra.mrb[0].mxu0 %v679
        %v884 = vpop.f32.mrb[0].mxu0
        %v885 = vadd.f32 %v600, %v884
        %v886 = vpop.f32.mrb[0].mxu0
        %v887 = vpop.f32.mrb[0].mxu0
        %v888 = vadd.f32 %v600, %v887
        %v889 = vpop.f32.mrb[0].mxu0
        %890 = vmatprep.mubr.bf16.mxu0 0
        %891 = vmatmul.mubr.bf16.gmra.mrb[0].mxu0 %v680
        %v892 = vpop.f32.mrb[0].mxu0
        %v893 = vadd.f32 %v600, %v892
        %v894 = vpop.f32.mrb[0].mxu0
        %v895 = vpop.f32.mrb[0].mxu0
        %v896 = vadd.f32 %v600, %v895
        %v897 = vpop.f32.mrb[0].mxu0
        %898 = vmatprep.mubr.bf16.mxu0 0
        %899 = vmatmul.mubr.bf16.gmra.mrb[0].mxu0 %v681
        %v900 = vpop.f32.mrb[0].mxu0
        %v901 = vadd.f32 %v600, %v900
        %v902 = vpop.f32.mrb[0].mxu0
        %v903 = vpop.f32.mrb[0].mxu0
        %v904 = vadd.f32 %v600, %v903
        %v905 = vpop.f32.mrb[0].mxu0
        %906 = vdwg.mxu0
        %v907 = vmax.f32 %v781, 0.0
        %v908 = vmax.f32 %v784, 0.0
        %v909 = vmax.f32 %v789, 0.0
        %v910 = vmax.f32 %v792, 0.0
        %v911 = vmax.f32 %v797, 0.0
        %v912 = vmax.f32 %v800, 0.0
        %v913 = vmax.f32 %v805, 0.0
        %v914 = vmax.f32 %v808, 0.0
        %v915 = vmax.f32 %v813, 0.0
        %v916 = vmax.f32 %v816, 0.0
        %v917 = vmax.f32 %v821, 0.0
        %v918 = vmax.f32 %v824, 0.0
        %v919 = vmax.f32 %v829, 0.0
        %v920 = vmax.f32 %v832, 0.0
        %v921 = vmax.f32 %v837, 0.0
        %v922 = vmax.f32 %v840, 0.0
        %v923 = vmax.f32 %v845, 0.0
        %v924 = vmax.f32 %v848, 0.0
        %v925 = vmax.f32 %v853, 0.0
        %v926 = vmax.f32 %v856, 0.0
        %v927 = vmax.f32 %v861, 0.0
        %v928 = vmax.f32 %v864, 0.0
        %v929 = vmax.f32 %v869, 0.0
        %v930 = vmax.f32 %v872, 0.0
        %v931 = vmax.f32 %v877, 0.0
        %v932 = vmax.f32 %v880, 0.0
        %v933 = vmax.f32 %v885, 0.0
        %v934 = vmax.f32 %v888, 0.0
        %v935 = vmax.f32 %v893, 0.0
        %v936 = vmax.f32 %v896, 0.0
        %v937 = vmax.f32 %v901, 0.0
        %v938 = vmax.f32 %v904, 0.0
        %939 = vst [vmem:[#allocation2] sm:$0xff] 0.0
        %940 = vst [vmem:[#allocation2 + $0x8] sm:$0xff] 0.0
        %941 = vst [vmem:[#allocation2 + $0x10] sm:$0x3] 0.0
        %942 = vst [vmem:[#allocation2 + $0x18] sm:$0xff] 0.0
        %943 = vst [vmem:[#allocation2 + $0x20] sm:$0xff] 0.0
        %944 = vst [vmem:[#allocation2 + $0x28] sm:$0x3] 0.0
        %945 = vst [vmem:[#allocation2 + $0x30] sm:$0xff] 0.0
        %946 = vst [vmem:[#allocation2 + $0x38] sm:$0xff] 0.0
        %947 = vst [vmem:[#allocation2 + $0x40] sm:$0x3] 0.0
        %948 = vst [vmem:[#allocation2 + $0x48] sm:$0xff] 0.0
        %949 = vst [vmem:[#allocation2 + $0x50] sm:$0xff] 0.0
        %950 = vst [vmem:[#allocation2 + $0x58] sm:$0x3] 0.0
        %951 = vst [vmem:[#allocation2 + $0x60] sm:$0xff] 0.0
        %952 = vst [vmem:[#allocation2 + $0x68] sm:$0xff] 0.0
        %953 = vst [vmem:[#allocation2 + $0x70] sm:$0x3] 0.0
        %954 = vst [vmem:[#allocation2 + $0x78] sm:$0xff] 0.0
        %955 = vst [vmem:[#allocation2 + $0x80] sm:$0xff] 0.0
        %956 = vst [vmem:[#allocation2 + $0x88] sm:$0x3] 0.0
        %957 = vst [vmem:[#allocation2 + $0x90] sm:$0xff] 0.0
        %958 = vst [vmem:[#allocation2 + $0x98] sm:$0xff] 0.0
        %959 = vst [vmem:[#allocation2 + $0xa0] sm:$0x3] 0.0
        %960 = vst [vmem:[#allocation2 + $0xa8] sm:$0xff] 0.0
        %961 = vst [vmem:[#allocation2 + $0xb0] sm:$0xff] 0.0
        %962 = vst [vmem:[#allocation2 + $0xb8] sm:$0x3] 0.0
        %963 = vst [vmem:[#allocation2 + $0xc0] sm:$0xff] 0.0
        %964 = vst [vmem:[#allocation2 + $0xc8] sm:$0xff] 0.0
        %965 = vst [vmem:[#allocation2 + $0xd0] sm:$0x3] 0.0
        %966 = vst [vmem:[#allocation2 + $0xd8] sm:$0xff] 0.0
        %967 = vst [vmem:[#allocation2 + $0xe0] sm:$0xff] 0.0
        %968 = vst [vmem:[#allocation2 + $0xe8] sm:$0x3] 0.0
        %969 = vst [vmem:[#allocation2 + $0xf0] sm:$0xff] 0.0
        %970 = vst [vmem:[#allocation2 + $0xf8] sm:$0xff] 0.0
        %971 = vst [vmem:[#allocation2 + $0x100] sm:$0x3] 0.0
        %972 = vst [vmem:[#allocation2 + $0x108] sm:$0xff] 0.0
        %973 = vst [vmem:[#allocation2 + $0x110] sm:$0xff] 0.0
        %974 = vst [vmem:[#allocation2 + $0x118] sm:$0x3] 0.0
        %975 = vst [vmem:[#allocation2 + $0x120] sm:$0xff] 0.0
        %976 = vst [vmem:[#allocation2 + $0x128] sm:$0xff] 0.0
        %977 = vst [vmem:[#allocation2 + $0x130] sm:$0x3] 0.0
        %978 = vst [vmem:[#allocation2 + $0x138] sm:$0xff] 0.0
        %979 = vst [vmem:[#allocation2 + $0x140] sm:$0xff] 0.0
        %980 = vst [vmem:[#allocation2 + $0x148] sm:$0x3] 0.0
        %981 = vst [vmem:[#allocation2 + $0x150] sm:$0xff] 0.0
        %982 = vst [vmem:[#allocation2 + $0x158] sm:$0xff] 0.0
        %983 = vst [vmem:[#allocation2 + $0x160] sm:$0x3] 0.0
        %984 = vst [vmem:[#allocation2 + $0x168] sm:$0xff] 0.0
        %985 = vst [vmem:[#allocation2 + $0x170] sm:$0xff] 0.0
        %986 = vst [vmem:[#allocation2 + $0x178] sm:$0x3] 0.0
        %987 = vst [vmem:[#allocation2 + $0x180] sm:$0xff] 0.0
        %988 = vst [vmem:[#allocation2 + $0x188] sm:$0xff] 0.0
        %989 = vst [vmem:[#allocation2 + $0x190] sm:$0x3] 0.0
        %990 = vst [vmem:[#allocation2 + $0x198] sm:$0xff] 0.0
        %991 = vst [vmem:[#allocation2 + $0x1a0] sm:$0xff] 0.0
        %992 = vst [vmem:[#allocation2 + $0x1a8] sm:$0x3] 0.0
        %s993 = scalar_lea.vmem [#allocation2], 24
        %994 = vst [vmem:[%s993 + $0x1] sm:$0xff] %v907
        %995 = vst [vmem:[%s993 + $0x9] sm:$0xff] %v908
        %996 = vst [vmem:[%s993 + $0x19] sm:$0xff] %v909
        %997 = vst [vmem:[%s993 + $0x21] sm:$0xff] %v910
        %998 = vst [vmem:[%s993 + $0x31] sm:$0xff] %v911
        %999 = vst [vmem:[%s993 + $0x39] sm:$0xff] %v912
        %1000 = vst [vmem:[%s993 + $0x49] sm:$0xff] %v913
        %1001 = vst [vmem:[%s993 + $0x51] sm:$0xff] %v914
        %1002 = vst [vmem:[%s993 + $0x61] sm:$0xff] %v915
        %1003 = vst [vmem:[%s993 + $0x69] sm:$0xff] %v916
        %1004 = vst [vmem:[%s993 + $0x79] sm:$0xff] %v917
        %1005 = vst [vmem:[%s993 + $0x81] sm:$0xff] %v918
        %1006 = vst [vmem:[%s993 + $0x91] sm:$0xff] %v919
        %1007 = vst [vmem:[%s993 + $0x99] sm:$0xff] %v920
        %1008 = vst [vmem:[%s993 + $0xa9] sm:$0xff] %v921
        %1009 = vst [vmem:[%s993 + $0xb1] sm:$0xff] %v922
        %1010 = vst [vmem:[%s993 + $0xc1] sm:$0xff] %v923
        %1011 = vst [vmem:[%s993 + $0xc9] sm:$0xff] %v924
        %1012 = vst [vmem:[%s993 + $0xd9] sm:$0xff] %v925
        %1013 = vst [vmem:[%s993 + $0xe1] sm:$0xff] %v926
        %1014 = vst [vmem:[%s993 + $0xf1] sm:$0xff] %v927
        %1015 = vst [vmem:[%s993 + $0xf9] sm:$0xff] %v928
        %1016 = vst [vmem:[%s993 + $0x109] sm:$0xff] %v929
        %1017 = vst [vmem:[%s993 + $0x111] sm:$0xff] %v930
        %1018 = vst [vmem:[%s993 + $0x121] sm:$0xff] %v931
        %1019 = vst [vmem:[%s993 + $0x129] sm:$0xff] %v932
        %1020 = vst [vmem:[%s993 + $0x139] sm:$0xff] %v933
        %1021 = vst [vmem:[%s993 + $0x141] sm:$0xff] %v934
        %1022 = vst [vmem:[%s993 + $0x151] sm:$0xff] %v935
        %1023 = vst [vmem:[%s993 + $0x159] sm:$0xff] %v936
        %1024 = vst [vmem:[%s993 + $0x169] sm:$0xff] %v937
        %1025 = vst [vmem:[%s993 + $0x171] sm:$0xff] %v938
        %v1026 = vld [vmem:[#allocation2] sm:$0xff]
        %v1027 = vld [vmem:[#allocation2 + $0x8] sm:$0xff]
        %v1028 = vld [vmem:[#allocation2 + $0x18] sm:$0xff]
        %v1029 = vld [vmem:[#allocation2 + $0x20] sm:$0xff]
        %v1030 = vld [vmem:[#allocation2 + $0x30] sm:$0xff]
        %v1031 = vld [vmem:[#allocation2 + $0x38] sm:$0xff]
        %v1032 = vld [vmem:[#allocation2 + $0x48] sm:$0xff]
        %v1033 = vld [vmem:[#allocation2 + $0x50] sm:$0xff]
        %v1034 = vld [vmem:[#allocation2 + $0x60] sm:$0xff]
        %v1035 = vld [vmem:[#allocation2 + $0x68] sm:$0xff]
        %v1036 = vld [vmem:[#allocation2 + $0x78] sm:$0xff]
        %v1037 = vld [vmem:[#allocation2 + $0x80] sm:$0xff]
        %v1038 = vld [vmem:[#allocation2 + $0x90] sm:$0xff]
        %v1039 = vld [vmem:[#allocation2 + $0x98] sm:$0xff]
        %v1040 = vld [vmem:[#allocation2 + $0xa8] sm:$0xff]
        %v1041 = vld [vmem:[#allocation2 + $0xb0] sm:$0xff]
        %v1042 = vld [vmem:[#allocation2 + $0xc0] sm:$0xff]
        %v1043 = vld [vmem:[#allocation2 + $0xc8] sm:$0xff]
        %v1044 = vld [vmem:[#allocation2 + $0xd8] sm:$0xff]
        %v1045 = vld [vmem:[#allocation2 + $0xe0] sm:$0xff]
        %v1046 = vld [vmem:[#allocation2 + $0xf0] sm:$0xff]
        %v1047 = vld [vmem:[#allocation2 + $0xf8] sm:$0xff]
        %v1048 = vld [vmem:[#allocation2 + $0x108] sm:$0xff]
        %v1049 = vld [vmem:[#allocation2 + $0x110] sm:$0xff]
        %v1050 = vld [vmem:[#allocation2 + $0x120] sm:$0xff]
        %v1051 = vld [vmem:[#allocation2 + $0x128] sm:$0xff]
        %v1052 = vld [vmem:[#allocation2 + $0x138] sm:$0xff]
        %v1053 = vld [vmem:[#allocation2 + $0x140] sm:$0xff]
        %v1054 = vld [vmem:[#allocation2 + $0x150] sm:$0xff]
        %v1055 = vld [vmem:[#allocation2 + $0x158] sm:$0xff]
        %v1056 = vld [vmem:[#allocation2 + $0x168] sm:$0xff]
        %v1057 = vld [vmem:[#allocation2 + $0x170] sm:$0xff]
        %v1058 = vpack.c.bf16 %v1027, %v1026
        %v1059 = vpack.c.bf16 %v1029, %v1028
        %v1060 = vpack.c.bf16 %v1031, %v1030
        %v1061 = vpack.c.bf16 %v1033, %v1032
        %v1062 = vpack.c.bf16 %v1035, %v1034
        %v1063 = vpack.c.bf16 %v1037, %v1036
        %v1064 = vpack.c.bf16 %v1039, %v1038
        %v1065 = vpack.c.bf16 %v1041, %v1040
        %v1066 = vpack.c.bf16 %v1043, %v1042
        %v1067 = vpack.c.bf16 %v1045, %v1044
        %v1068 = vpack.c.bf16 %v1047, %v1046
        %v1069 = vpack.c.bf16 %v1049, %v1048
        %v1070 = vpack.c.bf16 %v1051, %v1050
        %v1071 = vpack.c.bf16 %v1053, %v1052
        %v1072 = vpack.c.bf16 %v1055, %v1054
        %v1073 = vpack.c.bf16 %v1057, %v1056
        %v1074 = vld [vmem:[#allocation2 + $0x1] sm:$0xff]
        %v1075 = vld [vmem:[#allocation2 + $0x9] sm:$0xff]
        %v1076 = vld [vmem:[#allocation2 + $0x19] sm:$0xff]
        %v1077 = vld [vmem:[#allocation2 + $0x21] sm:$0xff]
        %v1078 = vld [vmem:[#allocation2 + $0x31] sm:$0xff]
        %v1079 = vld [vmem:[#allocation2 + $0x39] sm:$0xff]
        %v1080 = vld [vmem:[#allocation2 + $0x49] sm:$0xff]
        %v1081 = vld [vmem:[#allocation2 + $0x51] sm:$0xff]
        %v1082 = vld [vmem:[#allocation2 + $0x61] sm:$0xff]
        %v1083 = vld [vmem:[#allocation2 + $0x69] sm:$0xff]
        %v1084 = vld [vmem:[#allocation2 + $0x79] sm:$0xff]
        %v1085 = vld [vmem:[#allocation2 + $0x81] sm:$0xff]
        %v1086 = vld [vmem:[#allocation2 + $0x91] sm:$0xff]
        %v1087 = vld [vmem:[#allocation2 + $0x99] sm:$0xff]
        %v1088 = vld [vmem:[#allocation2 + $0xa9] sm:$0xff]
        %v1089 = vld [vmem:[#allocation2 + $0xb1] sm:$0xff]
        %v1090 = vld [vmem:[#allocation2 + $0xc1] sm:$0xff]
        %v1091 = vld [vmem:[#allocation2 + $0xc9] sm:$0xff]
        %v1092 = vld [vmem:[#allocation2 + $0xd9] sm:$0xff]
        %v1093 = vld [vmem:[#allocation2 + $0xe1] sm:$0xff]
        %v1094 = vld [vmem:[#allocation2 + $0xf1] sm:$0xff]
        %v1095 = vld [vmem:[#allocation2 + $0xf9] sm:$0xff]
        %v1096 = vld [vmem:[#allocation2 + $0x109] sm:$0xff]
        %v1097 = vld [vmem:[#allocation2 + $0x111] sm:$0xff]
        %v1098 = vld [vmem:[#allocation2 + $0x121] sm:$0xff]
        %v1099 = vld [vmem:[#allocation2 + $0x129] sm:$0xff]
        %v1100 = vld [vmem:[#allocation2 + $0x139] sm:$0xff]
        %v1101 = vld [vmem:[#allocation2 + $0x141] sm:$0xff]
        %v1102 = vld [vmem:[#allocation2 + $0x151] sm:$0xff]
        %v1103 = vld [vmem:[#allocation2 + $0x159] sm:$0xff]
        %v1104 = vld [vmem:[#allocation2 + $0x169] sm:$0xff]
        %v1105 = vld [vmem:[#allocation2 + $0x171] sm:$0xff]
        %v1106 = vpack.c.bf16 %v1075, %v1074
        %v1107 = vpack.c.bf16 %v1077, %v1076
        %v1108 = vpack.c.bf16 %v1079, %v1078
        %v1109 = vpack.c.bf16 %v1081, %v1080
        %v1110 = vpack.c.bf16 %v1083, %v1082
        %v1111 = vpack.c.bf16 %v1085, %v1084
        %v1112 = vpack.c.bf16 %v1087, %v1086
        %v1113 = vpack.c.bf16 %v1089, %v1088
        %v1114 = vpack.c.bf16 %v1091, %v1090
        %v1115 = vpack.c.bf16 %v1093, %v1092
        %v1116 = vpack.c.bf16 %v1095, %v1094
        %v1117 = vpack.c.bf16 %v1097, %v1096
        %v1118 = vpack.c.bf16 %v1099, %v1098
        %v1119 = vpack.c.bf16 %v1101, %v1100
        %v1120 = vpack.c.bf16 %v1103, %v1102
        %v1121 = vpack.c.bf16 %v1105, %v1104
        %v1122 = vld [vmem:[#allocation2 + $0x2] sm:$0xff]
        %v1123 = vld [vmem:[#allocation2 + $0xa] sm:$0xff]
        %v1124 = vld [vmem:[#allocation2 + $0x1a] sm:$0xff]
        %v1125 = vld [vmem:[#allocation2 + $0x22] sm:$0xff]
        %v1126 = vld [vmem:[#allocation2 + $0x32] sm:$0xff]
        %v1127 = vld [vmem:[#allocation2 + $0x3a] sm:$0xff]
        %v1128 = vld [vmem:[#allocation2 + $0x4a] sm:$0xff]
        %v1129 = vld [vmem:[#allocation2 + $0x52] sm:$0xff]
        %v1130 = vld [vmem:[#allocation2 + $0x62] sm:$0xff]
        %v1131 = vld [vmem:[#allocation2 + $0x6a] sm:$0xff]
        %v1132 = vld [vmem:[#allocation2 + $0x7a] sm:$0xff]
        %v1133 = vld [vmem:[#allocation2 + $0x82] sm:$0xff]
        %v1134 = vld [vmem:[#allocation2 + $0x92] sm:$0xff]
        %v1135 = vld [vmem:[#allocation2 + $0x9a] sm:$0xff]
        %v1136 = vld [vmem:[#allocation2 + $0xaa] sm:$0xff]
        %v1137 = vld [vmem:[#allocation2 + $0xb2] sm:$0xff]
        %v1138 = vld [vmem:[#allocation2 + $0xc2] sm:$0xff]
        %v1139 = vld [vmem:[#allocation2 + $0xca] sm:$0xff]
        %v1140 = vld [vmem:[#allocation2 + $0xda] sm:$0xff]
        %v1141 = vld [vmem:[#allocation2 + $0xe2] sm:$0xff]
        %v1142 = vld [vmem:[#allocation2 + $0xf2] sm:$0xff]
        %v1143 = vld [vmem:[#allocation2 + $0xfa] sm:$0xff]
        %v1144 = vld [vmem:[#allocation2 + $0x10a] sm:$0xff]
        %v1145 = vld [vmem:[#allocation2 + $0x112] sm:$0xff]
        %v1146 = vld [vmem:[#allocation2 + $0x122] sm:$0xff]
        %v1147 = vld [vmem:[#allocation2 + $0x12a] sm:$0xff]
        %v1148 = vld [vmem:[#allocation2 + $0x13a] sm:$0xff]
        %v1149 = vld [vmem:[#allocation2 + $0x142] sm:$0xff]
        %v1150 = vld [vmem:[#allocation2 + $0x152] sm:$0xff]
        %v1151 = vld [vmem:[#allocation2 + $0x15a] sm:$0xff]
        %v1152 = vld [vmem:[#allocation2 + $0x16a] sm:$0xff]
        %v1153 = vld [vmem:[#allocation2 + $0x172] sm:$0xff]
        %v1154 = vpack.c.bf16 %v1123, %v1122
        %v1155 = vpack.c.bf16 %v1125, %v1124
        %v1156 = vpack.c.bf16 %v1127, %v1126
        %v1157 = vpack.c.bf16 %v1129, %v1128
        %v1158 = vpack.c.bf16 %v1131, %v1130
        %v1159 = vpack.c.bf16 %v1133, %v1132
        %v1160 = vpack.c.bf16 %v1135, %v1134
        %v1161 = vpack.c.bf16 %v1137, %v1136
        %v1162 = vpack.c.bf16 %v1139, %v1138
        %v1163 = vpack.c.bf16 %v1141, %v1140
        %v1164 = vpack.c.bf16 %v1143, %v1142
        %v1165 = vpack.c.bf16 %v1145, %v1144
        %v1166 = vpack.c.bf16 %v1147, %v1146
        %v1167 = vpack.c.bf16 %v1149, %v1148
        %v1168 = vpack.c.bf16 %v1151, %v1150
        %v1169 = vpack.c.bf16 %v1153, %v1152
        %v1170 = vld [vmem:[%s993] sm:$0xff]
        %v1171 = vld [vmem:[%s993 + $0x8] sm:$0xff]
        %v1172 = vld [vmem:[%s993 + $0x18] sm:$0xff]
        %v1173 = vld [vmem:[%s993 + $0x20] sm:$0xff]
        %v1174 = vld [vmem:[%s993 + $0x30] sm:$0xff]
        %v1175 = vld [vmem:[%s993 + $0x38] sm:$0xff]
        %v1176 = vld [vmem:[%s993 + $0x48] sm:$0xff]
        %v1177 = vld [vmem:[%s993 + $0x50] sm:$0xff]
        %v1178 = vld [vmem:[%s993 + $0x60] sm:$0xff]
        %v1179 = vld [vmem:[%s993 + $0x68] sm:$0xff]
        %v1180 = vld [vmem:[%s993 + $0x78] sm:$0xff]
        %v1181 = vld [vmem:[%s993 + $0x80] sm:$0xff]
        %v1182 = vld [vmem:[%s993 + $0x90] sm:$0xff]
        %v1183 = vld [vmem:[%s993 + $0x98] sm:$0xff]
        %v1184 = vld [vmem:[%s993 + $0xa8] sm:$0xff]
        %v1185 = vld [vmem:[%s993 + $0xb0] sm:$0xff]
        %v1186 = vld [vmem:[%s993 + $0xc0] sm:$0xff]
        %v1187 = vld [vmem:[%s993 + $0xc8] sm:$0xff]
        %v1188 = vld [vmem:[%s993 + $0xd8] sm:$0xff]
        %v1189 = vld [vmem:[%s993 + $0xe0] sm:$0xff]
        %v1190 = vld [vmem:[%s993 + $0xf0] sm:$0xff]
        %v1191 = vld [vmem:[%s993 + $0xf8] sm:$0xff]
        %v1192 = vld [vmem:[%s993 + $0x108] sm:$0xff]
        %v1193 = vld [vmem:[%s993 + $0x110] sm:$0xff]
        %v1194 = vld [vmem:[%s993 + $0x120] sm:$0xff]
        %v1195 = vld [vmem:[%s993 + $0x128] sm:$0xff]
        %v1196 = vld [vmem:[%s993 + $0x138] sm:$0xff]
        %v1197 = vld [vmem:[%s993 + $0x140] sm:$0xff]
        %v1198 = vld [vmem:[%s993 + $0x150] sm:$0xff]
        %v1199 = vld [vmem:[%s993 + $0x158] sm:$0xff]
        %v1200 = vld [vmem:[%s993 + $0x168] sm:$0xff]
        %v1201 = vld [vmem:[%s993 + $0x170] sm:$0xff]
        %v1202 = vpack.c.bf16 %v1171, %v1170
        %v1203 = vpack.c.bf16 %v1173, %v1172
        %v1204 = vpack.c.bf16 %v1175, %v1174
        %v1205 = vpack.c.bf16 %v1177, %v1176
        %v1206 = vpack.c.bf16 %v1179, %v1178
        %v1207 = vpack.c.bf16 %v1181, %v1180
        %v1208 = vpack.c.bf16 %v1183, %v1182
        %v1209 = vpack.c.bf16 %v1185, %v1184
        %v1210 = vpack.c.bf16 %v1187, %v1186
        %v1211 = vpack.c.bf16 %v1189, %v1188
        %v1212 = vpack.c.bf16 %v1191, %v1190
        %v1213 = vpack.c.bf16 %v1193, %v1192
        %v1214 = vpack.c.bf16 %v1195, %v1194
        %v1215 = vpack.c.bf16 %v1197, %v1196
        %v1216 = vpack.c.bf16 %v1199, %v1198
        %v1217 = vpack.c.bf16 %v1201, %v1200
        %v1218 = vld [vmem:[%s993 + $0x1] sm:$0xff]
        %v1219 = vld [vmem:[%s993 + $0x9] sm:$0xff]
        %v1220 = vld [vmem:[%s993 + $0x19] sm:$0xff]
        %v1221 = vld [vmem:[%s993 + $0x21] sm:$0xff]
        %v1222 = vld [vmem:[%s993 + $0x31] sm:$0xff]
        %v1223 = vld [vmem:[%s993 + $0x39] sm:$0xff]
        %v1224 = vld [vmem:[%s993 + $0x49] sm:$0xff]
        %v1225 = vld [vmem:[%s993 + $0x51] sm:$0xff]
        %v1226 = vld [vmem:[%s993 + $0x61] sm:$0xff]
        %v1227 = vld [vmem:[%s993 + $0x69] sm:$0xff]
        %v1228 = vld [vmem:[%s993 + $0x79] sm:$0xff]
        %v1229 = vld [vmem:[%s993 + $0x81] sm:$0xff]
        %v1230 = vld [vmem:[%s993 + $0x91] sm:$0xff]
        %v1231 = vld [vmem:[%s993 + $0x99] sm:$0xff]
        %v1232 = vld [vmem:[%s993 + $0xa9] sm:$0xff]
        %v1233 = vld [vmem:[%s993 + $0xb1] sm:$0xff]
        %v1234 = vld [vmem:[%s993 + $0xc1] sm:$0xff]
        %v1235 = vld [vmem:[%s993 + $0xc9] sm:$0xff]
        %v1236 = vld [vmem:[%s993 + $0xd9] sm:$0xff]
        %v1237 = vld [vmem:[%s993 + $0xe1] sm:$0xff]
        %v1238 = vld [vmem:[%s993 + $0xf1] sm:$0xff]
        %v1239 = vld [vmem:[%s993 + $0xf9] sm:$0xff]
        %v1240 = vld [vmem:[%s993 + $0x109] sm:$0xff]
        %v1241 = vld [vmem:[%s993 + $0x111] sm:$0xff]
        %v1242 = vld [vmem:[%s993 + $0x121] sm:$0xff]
        %v1243 = vld [vmem:[%s993 + $0x129] sm:$0xff]
        %v1244 = vld [vmem:[%s993 + $0x139] sm:$0xff]
        %v1245 = vld [vmem:[%s993 + $0x141] sm:$0xff]
        %v1246 = vld [vmem:[%s993 + $0x151] sm:$0xff]
        %v1247 = vld [vmem:[%s993 + $0x159] sm:$0xff]
        %v1248 = vld [vmem:[%s993 + $0x169] sm:$0xff]
        %v1249 = vld [vmem:[%s993 + $0x171] sm:$0xff]
        %v1250 = vpack.c.bf16 %v1219, %v1218
        %v1251 = vpack.c.bf16 %v1221, %v1220
        %v1252 = vpack.c.bf16 %v1223, %v1222
        %v1253 = vpack.c.bf16 %v1225, %v1224
        %v1254 = vpack.c.bf16 %v1227, %v1226
        %v1255 = vpack.c.bf16 %v1229, %v1228
        %v1256 = vpack.c.bf16 %v1231, %v1230
        %v1257 = vpack.c.bf16 %v1233, %v1232
        %v1258 = vpack.c.bf16 %v1235, %v1234
        %v1259 = vpack.c.bf16 %v1237, %v1236
        %v1260 = vpack.c.bf16 %v1239, %v1238
        %v1261 = vpack.c.bf16 %v1241, %v1240
        %v1262 = vpack.c.bf16 %v1243, %v1242
        %v1263 = vpack.c.bf16 %v1245, %v1244
        %v1264 = vpack.c.bf16 %v1247, %v1246
        %v1265 = vpack.c.bf16 %v1249, %v1248
        %v1266 = vld [vmem:[%s993 + $0x2] sm:$0xff]
        %v1267 = vld [vmem:[%s993 + $0xa] sm:$0xff]
        %v1268 = vld [vmem:[%s993 + $0x1a] sm:$0xff]
        %v1269 = vld [vmem:[%s993 + $0x22] sm:$0xff]
        %v1270 = vld [vmem:[%s993 + $0x32] sm:$0xff]
        %v1271 = vld [vmem:[%s993 + $0x3a] sm:$0xff]
        %v1272 = vld [vmem:[%s993 + $0x4a] sm:$0xff]
        %v1273 = vld [vmem:[%s993 + $0x52] sm:$0xff]
        %v1274 = vld [vmem:[%s993 + $0x62] sm:$0xff]
        %v1275 = vld [vmem:[%s993 + $0x6a] sm:$0xff]
        %v1276 = vld [vmem:[%s993 + $0x7a] sm:$0xff]
        %v1277 = vld [vmem:[%s993 + $0x82] sm:$0xff]
        %v1278 = vld [vmem:[%s993 + $0x92] sm:$0xff]
        %v1279 = vld [vmem:[%s993 + $0x9a] sm:$0xff]
        %v1280 = vld [vmem:[%s993 + $0xaa] sm:$0xff]
        %v1281 = vld [vmem:[%s993 + $0xb2] sm:$0xff]
        %v1282 = vld [vmem:[%s993 + $0xc2] sm:$0xff]
        %v1283 = vld [vmem:[%s993 + $0xca] sm:$0xff]
        %v1284 = vld [vmem:[%s993 + $0xda] sm:$0xff]
        %v1285 = vld [vmem:[%s993 + $0xe2] sm:$0xff]
        %v1286 = vld [vmem:[%s993 + $0xf2] sm:$0xff]
        %v1287 = vld [vmem:[%s993 + $0xfa] sm:$0xff]
        %v1288 = vld [vmem:[%s993 + $0x10a] sm:$0xff]
        %v1289 = vld [vmem:[%s993 + $0x112] sm:$0xff]
        %v1290 = vld [vmem:[%s993 + $0x122] sm:$0xff]
        %v1291 = vld [vmem:[%s993 + $0x12a] sm:$0xff]
        %v1292 = vld [vmem:[%s993 + $0x13a] sm:$0xff]
        %v1293 = vld [vmem:[%s993 + $0x142] sm:$0xff]
        %v1294 = vld [vmem:[%s993 + $0x152] sm:$0xff]
        %v1295 = vld [vmem:[%s993 + $0x15a] sm:$0xff]
        %v1296 = vld [vmem:[%s993 + $0x16a] sm:$0xff]
        %v1297 = vld [vmem:[%s993 + $0x172] sm:$0xff]
        %v1298 = vpack.c.bf16 %v1267, %v1266
        %v1299 = vpack.c.bf16 %v1269, %v1268
        %v1300 = vpack.c.bf16 %v1271, %v1270
        %v1301 = vpack.c.bf16 %v1273, %v1272
        %v1302 = vpack.c.bf16 %v1275, %v1274
        %v1303 = vpack.c.bf16 %v1277, %v1276
        %v1304 = vpack.c.bf16 %v1279, %v1278
        %v1305 = vpack.c.bf16 %v1281, %v1280
        %v1306 = vpack.c.bf16 %v1283, %v1282
        %v1307 = vpack.c.bf16 %v1285, %v1284
        %v1308 = vpack.c.bf16 %v1287, %v1286
        %v1309 = vpack.c.bf16 %v1289, %v1288
        %v1310 = vpack.c.bf16 %v1291, %v1290
        %v1311 = vpack.c.bf16 %v1293, %v1292
        %v1312 = vpack.c.bf16 %v1295, %v1294
        %v1313 = vpack.c.bf16 %v1297, %v1296
        %s1314 = scalar_lea.vmem [#allocation2], 48
        %v1315 = vld [vmem:[%s1314] sm:$0xff]
        %v1316 = vld [vmem:[%s1314 + $0x8] sm:$0xff]
        %v1317 = vld [vmem:[%s1314 + $0x18] sm:$0xff]
        %v1318 = vld [vmem:[%s1314 + $0x20] sm:$0xff]
        %v1319 = vld [vmem:[%s1314 + $0x30] sm:$0xff]
        %v1320 = vld [vmem:[%s1314 + $0x38] sm:$0xff]
        %v1321 = vld [vmem:[%s1314 + $0x48] sm:$0xff]
        %v1322 = vld [vmem:[%s1314 + $0x50] sm:$0xff]
        %v1323 = vld [vmem:[%s1314 + $0x60] sm:$0xff]
        %v1324 = vld [vmem:[%s1314 + $0x68] sm:$0xff]
        %v1325 = vld [vmem:[%s1314 + $0x78] sm:$0xff]
        %v1326 = vld [vmem:[%s1314 + $0x80] sm:$0xff]
        %v1327 = vld [vmem:[%s1314 + $0x90] sm:$0xff]
        %v1328 = vld [vmem:[%s1314 + $0x98] sm:$0xff]
        %v1329 = vld [vmem:[%s1314 + $0xa8] sm:$0xff]
        %v1330 = vld [vmem:[%s1314 + $0xb0] sm:$0xff]
        %v1331 = vld [vmem:[%s1314 + $0xc0] sm:$0xff]
        %v1332 = vld [vmem:[%s1314 + $0xc8] sm:$0xff]
        %v1333 = vld [vmem:[%s1314 + $0xd8] sm:$0xff]
        %v1334 = vld [vmem:[%s1314 + $0xe0] sm:$0xff]
        %v1335 = vld [vmem:[%s1314 + $0xf0] sm:$0xff]
        %v1336 = vld [vmem:[%s1314 + $0xf8] sm:$0xff]
        %v1337 = vld [vmem:[%s1314 + $0x108] sm:$0xff]
        %v1338 = vld [vmem:[%s1314 + $0x110] sm:$0xff]
        %v1339 = vld [vmem:[%s1314 + $0x120] sm:$0xff]
        %v1340 = vld [vmem:[%s1314 + $0x128] sm:$0xff]
        %v1341 = vld [vmem:[%s1314 + $0x138] sm:$0xff]
        %v1342 = vld [vmem:[%s1314 + $0x140] sm:$0xff]
        %v1343 = vld [vmem:[%s1314 + $0x150] sm:$0xff]
        %v1344 = vld [vmem:[%s1314 + $0x158] sm:$0xff]
        %v1345 = vld [vmem:[%s1314 + $0x168] sm:$0xff]
        %v1346 = vld [vmem:[%s1314 + $0x170] sm:$0xff]
        %v1347 = vpack.c.bf16 %v1316, %v1315
        %v1348 = vpack.c.bf16 %v1318, %v1317
        %v1349 = vpack.c.bf16 %v1320, %v1319
        %v1350 = vpack.c.bf16 %v1322, %v1321
        %v1351 = vpack.c.bf16 %v1324, %v1323
        %v1352 = vpack.c.bf16 %v1326, %v1325
        %v1353 = vpack.c.bf16 %v1328, %v1327
        %v1354 = vpack.c.bf16 %v1330, %v1329
        %v1355 = vpack.c.bf16 %v1332, %v1331
        %v1356 = vpack.c.bf16 %v1334, %v1333
        %v1357 = vpack.c.bf16 %v1336, %v1335
        %v1358 = vpack.c.bf16 %v1338, %v1337
        %v1359 = vpack.c.bf16 %v1340, %v1339
        %v1360 = vpack.c.bf16 %v1342, %v1341
        %v1361 = vpack.c.bf16 %v1344, %v1343
        %v1362 = vpack.c.bf16 %v1346, %v1345
        %v1363 = vld [vmem:[%s1314 + $0x1] sm:$0xff]
        %v1364 = vld [vmem:[%s1314 + $0x9] sm:$0xff]
        %v1365 = vld [vmem:[%s1314 + $0x19] sm:$0xff]
        %v1366 = vld [vmem:[%s1314 + $0x21] sm:$0xff]
        %v1367 = vld [vmem:[%s1314 + $0x31] sm:$0xff]
        %v1368 = vld [vmem:[%s1314 + $0x39] sm:$0xff]
        %v1369 = vld [vmem:[%s1314 + $0x49] sm:$0xff]
        %v1370 = vld [vmem:[%s1314 + $0x51] sm:$0xff]
        %v1371 = vld [vmem:[%s1314 + $0x61] sm:$0xff]
        %v1372 = vld [vmem:[%s1314 + $0x69] sm:$0xff]
        %v1373 = vld [vmem:[%s1314 + $0x79] sm:$0xff]
        %v1374 = vld [vmem:[%s1314 + $0x81] sm:$0xff]
        %v1375 = vld [vmem:[%s1314 + $0x91] sm:$0xff]
        %v1376 = vld [vmem:[%s1314 + $0x99] sm:$0xff]
        %v1377 = vld [vmem:[%s1314 + $0xa9] sm:$0xff]
        %v1378 = vld [vmem:[%s1314 + $0xb1] sm:$0xff]
        %v1379 = vld [vmem:[%s1314 + $0xc1] sm:$0xff]
        %v1380 = vld [vmem:[%s1314 + $0xc9] sm:$0xff]
        %v1381 = vld [vmem:[%s1314 + $0xd9] sm:$0xff]
        %v1382 = vld [vmem:[%s1314 + $0xe1] sm:$0xff]
        %v1383 = vld [vmem:[%s1314 + $0xf1] sm:$0xff]
        %v1384 = vld [vmem:[%s1314 + $0xf9] sm:$0xff]
        %v1385 = vld [vmem:[%s1314 + $0x109] sm:$0xff]
        %v1386 = vld [vmem:[%s1314 + $0x111] sm:$0xff]
        %v1387 = vld [vmem:[%s1314 + $0x121] sm:$0xff]
        %v1388 = vld [vmem:[%s1314 + $0x129] sm:$0xff]
        %v1389 = vld [vmem:[%s1314 + $0x139] sm:$0xff]
        %v1390 = vld [vmem:[%s1314 + $0x141] sm:$0xff]
        %v1391 = vld [vmem:[%s1314 + $0x151] sm:$0xff]
        %v1392 = vld [vmem:[%s1314 + $0x159] sm:$0xff]
        %v1393 = vld [vmem:[%s1314 + $0x169] sm:$0xff]
        %v1394 = vld [vmem:[%s1314 + $0x171] sm:$0xff]
        %v1395 = vpack.c.bf16 %v1364, %v1363
        %v1396 = vpack.c.bf16 %v1366, %v1365
        %v1397 = vpack.c.bf16 %v1368, %v1367
        %v1398 = vpack.c.bf16 %v1370, %v1369
        %v1399 = vpack.c.bf16 %v1372, %v1371
        %v1400 = vpack.c.bf16 %v1374, %v1373
        %v1401 = vpack.c.bf16 %v1376, %v1375
        %v1402 = vpack.c.bf16 %v1378, %v1377
        %v1403 = vpack.c.bf16 %v1380, %v1379
        %v1404 = vpack.c.bf16 %v1382, %v1381
        %v1405 = vpack.c.bf16 %v1384, %v1383
        %v1406 = vpack.c.bf16 %v1386, %v1385
        %v1407 = vpack.c.bf16 %v1388, %v1387
        %v1408 = vpack.c.bf16 %v1390, %v1389
        %v1409 = vpack.c.bf16 %v1392, %v1391
        %v1410 = vpack.c.bf16 %v1394, %v1393
        %v1411 = vld [vmem:[%s1314 + $0x2] sm:$0xff]
        %v1412 = vld [vmem:[%s1314 + $0xa] sm:$0xff]
        %v1413 = vld [vmem:[%s1314 + $0x1a] sm:$0xff]
        %v1414 = vld [vmem:[%s1314 + $0x22] sm:$0xff]
        %v1415 = vld [vmem:[%s1314 + $0x32] sm:$0xff]
        %v1416 = vld [vmem:[%s1314 + $0x3a] sm:$0xff]
        %v1417 = vld [vmem:[%s1314 + $0x4a] sm:$0xff]
        %v1418 = vld [vmem:[%s1314 + $0x52] sm:$0xff]
        %v1419 = vld [vmem:[%s1314 + $0x62] sm:$0xff]
        %v1420 = vld [vmem:[%s1314 + $0x6a] sm:$0xff]
        %v1421 = vld [vmem:[%s1314 + $0x7a] sm:$0xff]
        %v1422 = vld [vmem:[%s1314 + $0x82] sm:$0xff]
        %v1423 = vld [vmem:[%s1314 + $0x92] sm:$0xff]
        %v1424 = vld [vmem:[%s1314 + $0x9a] sm:$0xff]
        %v1425 = vld [vmem:[%s1314 + $0xaa] sm:$0xff]
        %v1426 = vld [vmem:[%s1314 + $0xb2] sm:$0xff]
        %v1427 = vld [vmem:[%s1314 + $0xc2] sm:$0xff]
        %v1428 = vld [vmem:[%s1314 + $0xca] sm:$0xff]
        %v1429 = vld [vmem:[%s1314 + $0xda] sm:$0xff]
        %v1430 = vld [vmem:[%s1314 + $0xe2] sm:$0xff]
        %v1431 = vld [vmem:[%s1314 + $0xf2] sm:$0xff]
        %v1432 = vld [vmem:[%s1314 + $0xfa] sm:$0xff]
        %v1433 = vld [vmem:[%s1314 + $0x10a] sm:$0xff]
        %v1434 = vld [vmem:[%s1314 + $0x112] sm:$0xff]
        %v1435 = vld [vmem:[%s1314 + $0x122] sm:$0xff]
        %v1436 = vld [vmem:[%s1314 + $0x12a] sm:$0xff]
        %v1437 = vld [vmem:[%s1314 + $0x13a] sm:$0xff]
        %v1438 = vld [vmem:[%s1314 + $0x142] sm:$0xff]
        %v1439 = vld [vmem:[%s1314 + $0x152] sm:$0xff]
        %v1440 = vld [vmem:[%s1314 + $0x15a] sm:$0xff]
        %v1441 = vld [vmem:[%s1314 + $0x16a] sm:$0xff]
        %v1442 = vld [vmem:[%s1314 + $0x172] sm:$0xff]
        %v1443 = vpack.c.bf16 %v1412, %v1411
        %v1444 = vpack.c.bf16 %v1414, %v1413
        %v1445 = vpack.c.bf16 %v1416, %v1415
        %v1446 = vpack.c.bf16 %v1418, %v1417
        %v1447 = vpack.c.bf16 %v1420, %v1419
        %v1448 = vpack.c.bf16 %v1422, %v1421
        %v1449 = vpack.c.bf16 %v1424, %v1423
        %v1450 = vpack.c.bf16 %v1426, %v1425
        %v1451 = vpack.c.bf16 %v1428, %v1427
        %v1452 = vpack.c.bf16 %v1430, %v1429
        %v1453 = vpack.c.bf16 %v1432, %v1431
        %v1454 = vpack.c.bf16 %v1434, %v1433
        %v1455 = vpack.c.bf16 %v1436, %v1435
        %v1456 = vpack.c.bf16 %v1438, %v1437
        %v1457 = vpack.c.bf16 %v1440, %v1439
        %v1458 = vpack.c.bf16 %v1442, %v1441
        %v1459 = vld [vmem:[#allocation8] sm:$0xf]
        %v1460 = vld [vmem:[#allocation8 + $0x4] sm:$0xf]
        %v1461 = vld [vmem:[#allocation8 + $0x8] sm:$0xf]
        %v1462 = vld [vmem:[#allocation8 + $0xc] sm:$0xf]
        %v1463 = vld [vmem:[#allocation8 + $0x10] sm:$0xf]
        %v1464 = vld [vmem:[#allocation8 + $0x14] sm:$0xf]
        %v1465 = vld [vmem:[#allocation8 + $0x18] sm:$0xf]
        %v1466 = vld [vmem:[#allocation8 + $0x1c] sm:$0xf]
        %v1467 = vld [vmem:[#allocation8 + $0x20] sm:$0xf]
        %v1468 = vld [vmem:[#allocation8 + $0x24] sm:$0xf]
        %v1469 = vld [vmem:[#allocation8 + $0x28] sm:$0xf]
        %v1470 = vld [vmem:[#allocation8 + $0x2c] sm:$0xf]
        %v1471 = vld [vmem:[#allocation8 + $0x30] sm:$0xf]
        %v1472 = vld [vmem:[#allocation8 + $0x34] sm:$0xf]
        %v1473 = vld [vmem:[#allocation8 + $0x38] sm:$0xf]
        %v1474 = vld [vmem:[#allocation8 + $0x3c] sm:$0xf]
        %v1475 = vld [vmem:[#allocation8 + $0x40] sm:$0xf]
        %v1476 = vld [vmem:[#allocation8 + $0x44] sm:$0xf]
        %v1477 = vld [vmem:[#allocation8 + $0x48] sm:$0xf]
        %v1478 = vld [vmem:[#allocation8 + $0x4c] sm:$0xf]
        %v1479 = vld [vmem:[#allocation8 + $0x50] sm:$0xf]
        %v1480 = vld [vmem:[#allocation8 + $0x54] sm:$0xf]
        %v1481 = vld [vmem:[#allocation8 + $0x58] sm:$0xf]
        %v1482 = vld [vmem:[#allocation8 + $0x5c] sm:$0xf]
        %v1483 = vld [vmem:[#allocation8 + $0x60] sm:$0xf]
        %v1484 = vld [vmem:[#allocation8 + $0x64] sm:$0xf]
        %v1485 = vld [vmem:[#allocation8 + $0x68] sm:$0xf]
        %v1486 = vld [vmem:[#allocation8 + $0x6c] sm:$0xf]
        %v1487 = vld [vmem:[#allocation8 + $0x70] sm:$0xf]
        %v1488 = vld [vmem:[#allocation8 + $0x74] sm:$0xf]
        %v1489 = vld [vmem:[#allocation8 + $0x78] sm:$0xf]
        %v1490 = vld [vmem:[#allocation8 + $0x7c] sm:$0xf]
        %v1491 = vld [vmem:[#allocation8 + $0x80] sm:$0xf]
        %v1492 = vld [vmem:[#allocation8 + $0x84] sm:$0xf]
        %v1493 = vld [vmem:[#allocation8 + $0x88] sm:$0xf]
        %v1494 = vld [vmem:[#allocation8 + $0x8c] sm:$0xf]
        %v1495 = vld [vmem:[#allocation8 + $0x90] sm:$0xf]
        %v1496 = vld [vmem:[#allocation8 + $0x94] sm:$0xf]
        %v1497 = vld [vmem:[#allocation8 + $0x98] sm:$0xf]
        %v1498 = vld [vmem:[#allocation8 + $0x9c] sm:$0xf]
        %v1499 = vld [vmem:[#allocation8 + $0xa0] sm:$0xf]
        %v1500 = vld [vmem:[#allocation8 + $0xa4] sm:$0xf]
        %v1501 = vld [vmem:[#allocation8 + $0xa8] sm:$0xf]
        %v1502 = vld [vmem:[#allocation8 + $0xac] sm:$0xf]
        %v1503 = vld [vmem:[#allocation8 + $0xb0] sm:$0xf]
        %v1504 = vld [vmem:[#allocation8 + $0xb4] sm:$0xf]
        %v1505 = vld [vmem:[#allocation8 + $0xb8] sm:$0xf]
        %v1506 = vld [vmem:[#allocation8 + $0xbc] sm:$0xf]
        %v1507 = vld [vmem:[#allocation8 + $0xc0] sm:$0xf]
        %v1508 = vld [vmem:[#allocation8 + $0xc4] sm:$0xf]
        %v1509 = vld [vmem:[#allocation8 + $0xc8] sm:$0xf]
        %v1510 = vld [vmem:[#allocation8 + $0xcc] sm:$0xf]
        %v1511 = vld [vmem:[#allocation8 + $0xd0] sm:$0xf]
        %v1512 = vld [vmem:[#allocation8 + $0xd4] sm:$0xf]
        %v1513 = vld [vmem:[#allocation8 + $0xd8] sm:$0xf]
        %v1514 = vld [vmem:[#allocation8 + $0xdc] sm:$0xf]
        %v1515 = vld [vmem:[#allocation8 + $0xe0] sm:$0xf]
        %v1516 = vld [vmem:[#allocation8 + $0xe4] sm:$0xf]
        %v1517 = vld [vmem:[#allocation8 + $0xe8] sm:$0xf]
        %v1518 = vld [vmem:[#allocation8 + $0xec] sm:$0xf]
        %v1519 = vld [vmem:[#allocation8 + $0xf0] sm:$0xf]
        %v1520 = vld [vmem:[#allocation8 + $0xf4] sm:$0xf]
        %v1521 = vld [vmem:[#allocation8 + $0xf8] sm:$0xf]
        %v1522 = vld [vmem:[#allocation8 + $0xfc] sm:$0xf]
        %v1523 = vld [vmem:[#allocation8 + $0x100] sm:$0xf]
        %v1524 = vld [vmem:[#allocation8 + $0x104] sm:$0xf]
        %v1525 = vld [vmem:[#allocation8 + $0x108] sm:$0xf]
        %v1526 = vld [vmem:[#allocation8 + $0x10c] sm:$0xf]
        %v1527 = vld [vmem:[#allocation8 + $0x110] sm:$0xf]
        %v1528 = vld [vmem:[#allocation8 + $0x114] sm:$0xf]
        %v1529 = vld [vmem:[#allocation8 + $0x118] sm:$0xf]
        %v1530 = vld [vmem:[#allocation8 + $0x11c] sm:$0xf]
        %v1531 = vld [vmem:[#allocation8 + $0x120] sm:$0xf]
        %v1532 = vld [vmem:[#allocation8 + $0x124] sm:$0xf]
        %v1533 = vld [vmem:[#allocation8 + $0x128] sm:$0xf]
        %v1534 = vld [vmem:[#allocation8 + $0x12c] sm:$0xf]
        %v1535 = vld [vmem:[#allocation8 + $0x130] sm:$0xf]
        %v1536 = vld [vmem:[#allocation8 + $0x134] sm:$0xf]
        %v1537 = vld [vmem:[#allocation8 + $0x138] sm:$0xf]
        %v1538 = vld [vmem:[#allocation8 + $0x13c] sm:$0xf]
        %v1539 = vld [vmem:[#allocation8 + $0x140] sm:$0xf]
        %v1540 = vld [vmem:[#allocation8 + $0x144] sm:$0xf]
        %v1541 = vld [vmem:[#allocation8 + $0x148] sm:$0xf]
        %v1542 = vld [vmem:[#allocation8 + $0x14c] sm:$0xf]
        %v1543 = vld [vmem:[#allocation8 + $0x150] sm:$0xf]
        %v1544 = vld [vmem:[#allocation8 + $0x154] sm:$0xf]
        %v1545 = vld [vmem:[#allocation8 + $0x158] sm:$0xf]
        %v1546 = vld [vmem:[#allocation8 + $0x15c] sm:$0xf]
        %v1547 = vld [vmem:[#allocation8 + $0x160] sm:$0xf]
        %v1548 = vld [vmem:[#allocation8 + $0x164] sm:$0xf]
        %v1549 = vld [vmem:[#allocation8 + $0x168] sm:$0xf]
        %v1550 = vld [vmem:[#allocation8 + $0x16c] sm:$0xf]
        %v1551 = vld [vmem:[#allocation8 + $0x170] sm:$0xf]
        %v1552 = vld [vmem:[#allocation8 + $0x174] sm:$0xf]
        %v1553 = vld [vmem:[#allocation8 + $0x178] sm:$0xf]
        %v1554 = vld [vmem:[#allocation8 + $0x17c] sm:$0xf]
        %v1555 = vld [vmem:[#allocation8 + $0x180] sm:$0xf]
        %v1556 = vld [vmem:[#allocation8 + $0x184] sm:$0xf]
        %v1557 = vld [vmem:[#allocation8 + $0x188] sm:$0xf]
        %v1558 = vld [vmem:[#allocation8 + $0x18c] sm:$0xf]
        %v1559 = vld [vmem:[#allocation8 + $0x190] sm:$0xf]
        %v1560 = vld [vmem:[#allocation8 + $0x194] sm:$0xf]
        %v1561 = vld [vmem:[#allocation8 + $0x198] sm:$0xf]
        %v1562 = vld [vmem:[#allocation8 + $0x19c] sm:$0xf]
        %v1563 = vld [vmem:[#allocation8 + $0x1a0] sm:$0xf]
        %v1564 = vld [vmem:[#allocation8 + $0x1a4] sm:$0xf]
        %v1565 = vld [vmem:[#allocation8 + $0x1a8] sm:$0xf]
        %v1566 = vld [vmem:[#allocation8 + $0x1ac] sm:$0xf]
        %v1567 = vld [vmem:[#allocation8 + $0x1b0] sm:$0xf]
        %v1568 = vld [vmem:[#allocation8 + $0x1b4] sm:$0xf]
        %v1569 = vld [vmem:[#allocation8 + $0x1b8] sm:$0xf]
        %v1570 = vld [vmem:[#allocation8 + $0x1bc] sm:$0xf]
        %v1571 = vld [vmem:[#allocation8 + $0x1c0] sm:$0xf]
        %v1572 = vld [vmem:[#allocation8 + $0x1c4] sm:$0xf]
        %v1573 = vld [vmem:[#allocation8 + $0x1c8] sm:$0xf]
        %v1574 = vld [vmem:[#allocation8 + $0x1cc] sm:$0xf]
        %v1575 = vld [vmem:[#allocation8 + $0x1d0] sm:$0xf]
        %v1576 = vld [vmem:[#allocation8 + $0x1d4] sm:$0xf]
        %v1577 = vld [vmem:[#allocation8 + $0x1d8] sm:$0xf]
        %v1578 = vld [vmem:[#allocation8 + $0x1dc] sm:$0xf]
        %v1579 = vld [vmem:[#allocation8 + $0x1e0] sm:$0xf]
        %v1580 = vld [vmem:[#allocation8 + $0x1e4] sm:$0xf]
        %v1581 = vld [vmem:[#allocation8 + $0x1e8] sm:$0xf]
        %v1582 = vld [vmem:[#allocation8 + $0x1ec] sm:$0xf]
        %v1583 = vld [vmem:[#allocation8 + $0x1f0] sm:$0xf]
        %v1584 = vld [vmem:[#allocation8 + $0x1f4] sm:$0xf]
        %v1585 = vld [vmem:[#allocation8 + $0x1f8] sm:$0xf]
        %v1586 = vld [vmem:[#allocation8 + $0x1fc] sm:$0xf]
        %v1587 = vld [vmem:[#allocation8 + $0x200] sm:$0xf]
        %v1588 = vld [vmem:[#allocation8 + $0x204] sm:$0xf]
        %v1589 = vld [vmem:[#allocation8 + $0x208] sm:$0xf]
        %v1590 = vld [vmem:[#allocation8 + $0x20c] sm:$0xf]
        %v1591 = vld [vmem:[#allocation8 + $0x210] sm:$0xf]
        %v1592 = vld [vmem:[#allocation8 + $0x214] sm:$0xf]
        %v1593 = vld [vmem:[#allocation8 + $0x218] sm:$0xf]
        %v1594 = vld [vmem:[#allocation8 + $0x21c] sm:$0xf]
        %v1595 = vld [vmem:[#allocation8 + $0x220] sm:$0xf]
        %v1596 = vld [vmem:[#allocation8 + $0x224] sm:$0xf]
        %v1597 = vld [vmem:[#allocation8 + $0x228] sm:$0xf]
        %v1598 = vld [vmem:[#allocation8 + $0x22c] sm:$0xf]
        %v1599 = vld [vmem:[#allocation8 + $0x230] sm:$0xf]
        %v1600 = vld [vmem:[#allocation8 + $0x234] sm:$0xf]
        %v1601 = vld [vmem:[#allocation8 + $0x238] sm:$0xf]
        %v1602 = vld [vmem:[#allocation8 + $0x23c] sm:$0xf]
        %v1603 = vld [vmem:[%s4] sm:$0x1]
        %v1605 = vlaneseq
        %v1606 = vshrl.u32 %v1605, 7
        %v1607 = vsub.s32 0, %v1606
        %v1608 = vrot.slane %v1603, %v1607
        %v1754 = vunpack.c.l.b16 %v1459
        %v1755 = vunpack.c.l.b16 %v1460
        %v1756 = vunpack.c.l.b16 %v1461
        %v1757 = vunpack.c.l.b16 %v1462
        %v1758 = vunpack.c.l.b16 %v1463
        %v1759 = vunpack.c.l.b16 %v1464
        %v1760 = vunpack.c.l.b16 %v1465
        %v1761 = vunpack.c.l.b16 %v1466
        %v1762 = vunpack.c.l.b16 %v1467
        %v1763 = vunpack.c.l.b16 %v1468
        %v1764 = vunpack.c.l.b16 %v1469
        %v1765 = vunpack.c.l.b16 %v1470
        %v1766 = vunpack.c.l.b16 %v1471
        %v1767 = vunpack.c.l.b16 %v1472
        %v1768 = vunpack.c.l.b16 %v1473
        %v1769 = vunpack.c.l.b16 %v1474
        %v1770 = vunpack.c.l.b16 %v1475
        %v1771 = vunpack.c.l.b16 %v1476
        %v1772 = vunpack.c.l.b16 %v1477
        %v1773 = vunpack.c.l.b16 %v1478
        %v1774 = vunpack.c.l.b16 %v1479
        %v1775 = vunpack.c.l.b16 %v1480
        %v1776 = vunpack.c.l.b16 %v1481
        %v1777 = vunpack.c.l.b16 %v1482
        %v1778 = vunpack.c.l.b16 %v1483
        %v1779 = vunpack.c.l.b16 %v1484
        %v1780 = vunpack.c.l.b16 %v1485
        %v1781 = vunpack.c.l.b16 %v1486
        %v1782 = vunpack.c.l.b16 %v1487
        %v1783 = vunpack.c.l.b16 %v1488
        %v1784 = vunpack.c.l.b16 %v1489
        %v1785 = vunpack.c.l.b16 %v1490
        %v1786 = vunpack.c.l.b16 %v1491
        %v1787 = vunpack.c.l.b16 %v1492
        %v1788 = vunpack.c.l.b16 %v1493
        %v1789 = vunpack.c.l.b16 %v1494
        %v1790 = vunpack.c.l.b16 %v1495
        %v1791 = vunpack.c.l.b16 %v1496
        %v1792 = vunpack.c.l.b16 %v1497
        %v1793 = vunpack.c.l.b16 %v1498
        %v1794 = vunpack.c.l.b16 %v1499
        %v1795 = vunpack.c.l.b16 %v1500
        %v1796 = vunpack.c.l.b16 %v1501
        %v1797 = vunpack.c.l.b16 %v1502
        %v1798 = vunpack.c.l.b16 %v1503
        %v1799 = vunpack.c.l.b16 %v1504
        %v1800 = vunpack.c.l.b16 %v1505
        %v1801 = vunpack.c.l.b16 %v1506
        %v1802 = vunpack.c.l.b16 %v1507
        %v1803 = vunpack.c.l.b16 %v1508
        %v1804 = vunpack.c.l.b16 %v1509
        %v1805 = vunpack.c.l.b16 %v1510
        %v1806 = vunpack.c.l.b16 %v1511
        %v1807 = vunpack.c.l.b16 %v1512
        %v1808 = vunpack.c.l.b16 %v1513
        %v1809 = vunpack.c.l.b16 %v1514
        %v1810 = vunpack.c.l.b16 %v1515
        %v1811 = vunpack.c.l.b16 %v1516
        %v1812 = vunpack.c.l.b16 %v1517
        %v1813 = vunpack.c.l.b16 %v1518
        %v1814 = vunpack.c.l.b16 %v1519
        %v1815 = vunpack.c.l.b16 %v1520
        %v1816 = vunpack.c.l.b16 %v1521
        %v1817 = vunpack.c.l.b16 %v1522
        %v1818 = vunpack.c.l.b16 %v1523
        %v1819 = vunpack.c.l.b16 %v1524
        %v1820 = vunpack.c.l.b16 %v1525
        %v1821 = vunpack.c.l.b16 %v1526
        %v1822 = vunpack.c.l.b16 %v1527
        %v1823 = vunpack.c.l.b16 %v1528
        %v1824 = vunpack.c.l.b16 %v1529
        %v1825 = vunpack.c.l.b16 %v1530
        %v1826 = vunpack.c.l.b16 %v1531
        %v1827 = vunpack.c.l.b16 %v1532
        %v1828 = vunpack.c.l.b16 %v1533
        %v1829 = vunpack.c.l.b16 %v1534
        %v1830 = vunpack.c.l.b16 %v1535
        %v1831 = vunpack.c.l.b16 %v1536
        %v1832 = vunpack.c.l.b16 %v1537
        %v1833 = vunpack.c.l.b16 %v1538
        %v1834 = vunpack.c.l.b16 %v1539
        %v1835 = vunpack.c.l.b16 %v1540
        %v1836 = vunpack.c.l.b16 %v1541
        %v1837 = vunpack.c.l.b16 %v1542
        %v1838 = vunpack.c.l.b16 %v1543
        %v1839 = vunpack.c.l.b16 %v1544
        %v1840 = vunpack.c.l.b16 %v1545
        %v1841 = vunpack.c.l.b16 %v1546
        %v1842 = vunpack.c.l.b16 %v1547
        %v1843 = vunpack.c.l.b16 %v1548
        %v1844 = vunpack.c.l.b16 %v1549
        %v1845 = vunpack.c.l.b16 %v1550
        %v1846 = vunpack.c.l.b16 %v1551
        %v1847 = vunpack.c.l.b16 %v1552
        %v1848 = vunpack.c.l.b16 %v1553
        %v1849 = vunpack.c.l.b16 %v1554
        %v1850 = vunpack.c.l.b16 %v1555
        %v1851 = vunpack.c.l.b16 %v1556
        %v1852 = vunpack.c.l.b16 %v1557
        %v1853 = vunpack.c.l.b16 %v1558
        %v1854 = vunpack.c.l.b16 %v1559
        %v1855 = vunpack.c.l.b16 %v1560
        %v1856 = vunpack.c.l.b16 %v1561
        %v1857 = vunpack.c.l.b16 %v1562
        %v1858 = vunpack.c.l.b16 %v1563
        %v1859 = vunpack.c.l.b16 %v1564
        %v1860 = vunpack.c.l.b16 %v1565
        %v1861 = vunpack.c.l.b16 %v1566
        %v1862 = vunpack.c.l.b16 %v1567
        %v1863 = vunpack.c.l.b16 %v1568
        %v1864 = vunpack.c.l.b16 %v1569
        %v1865 = vunpack.c.l.b16 %v1570
        %v1866 = vunpack.c.l.b16 %v1571
        %v1867 = vunpack.c.l.b16 %v1572
        %v1868 = vunpack.c.l.b16 %v1573
        %v1869 = vunpack.c.l.b16 %v1574
        %v1870 = vunpack.c.l.b16 %v1575
        %v1871 = vunpack.c.l.b16 %v1576
        %v1872 = vunpack.c.l.b16 %v1577
        %v1873 = vunpack.c.l.b16 %v1578
        %v1874 = vunpack.c.l.b16 %v1579
        %v1875 = vunpack.c.l.b16 %v1580
        %v1876 = vunpack.c.l.b16 %v1581
        %v1877 = vunpack.c.l.b16 %v1582
        %v1878 = vunpack.c.l.b16 %v1583
        %v1879 = vunpack.c.l.b16 %v1584
        %v1880 = vunpack.c.l.b16 %v1585
        %v1881 = vunpack.c.l.b16 %v1586
        %v1882 = vunpack.c.l.b16 %v1587
        %v1883 = vunpack.c.l.b16 %v1588
        %v1884 = vunpack.c.l.b16 %v1589
        %v1885 = vunpack.c.l.b16 %v1590
        %v1886 = vunpack.c.l.b16 %v1591
        %v1887 = vunpack.c.l.b16 %v1592
        %v1888 = vunpack.c.l.b16 %v1593
        %v1889 = vunpack.c.l.b16 %v1594
        %v1890 = vunpack.c.l.b16 %v1595
        %v1891 = vunpack.c.l.b16 %v1596
        %v1892 = vunpack.c.l.b16 %v1597
        %v1893 = vunpack.c.l.b16 %v1598
        %v1894 = vunpack.c.l.b16 %v1599
        %v1895 = vunpack.c.l.b16 %v1600
        %v1896 = vunpack.c.l.b16 %v1601
        %v1897 = vunpack.c.l.b16 %v1602
        %v1898 = vpack.c.b16 %v1755, %v1754
        %v1899 = vpack.c.b16 %v1757, %v1756
        %v1900 = vpack.c.b16 %v1759, %v1758
        %v1901 = vpack.c.b16 %v1761, %v1760
        %v1902 = vpack.c.b16 %v1763, %v1762
        %v1903 = vpack.c.b16 %v1765, %v1764
        %v1904 = vpack.c.b16 %v1767, %v1766
        %v1905 = vpack.c.b16 %v1769, %v1768
        %v1906 = vpack.c.b16 %v1771, %v1770
        %v1907 = vpack.c.b16 %v1773, %v1772
        %v1908 = vpack.c.b16 %v1775, %v1774
        %v1909 = vpack.c.b16 %v1777, %v1776
        %v1910 = vpack.c.b16 %v1779, %v1778
        %v1911 = vpack.c.b16 %v1781, %v1780
        %v1912 = vpack.c.b16 %v1783, %v1782
        %v1913 = vpack.c.b16 %v1785, %v1784
        %v1914 = vpack.c.b16 %v1787, %v1786
        %v1915 = vpack.c.b16 %v1789, %v1788
        %v1916 = vpack.c.b16 %v1791, %v1790
        %v1917 = vpack.c.b16 %v1793, %v1792
        %v1918 = vpack.c.b16 %v1795, %v1794
        %v1919 = vpack.c.b16 %v1797, %v1796
        %v1920 = vpack.c.b16 %v1799, %v1798
        %v1921 = vpack.c.b16 %v1801, %v1800
        %v1922 = vpack.c.b16 %v1803, %v1802
        %v1923 = vpack.c.b16 %v1805, %v1804
        %v1924 = vpack.c.b16 %v1807, %v1806
        %v1925 = vpack.c.b16 %v1809, %v1808
        %v1926 = vpack.c.b16 %v1811, %v1810
        %v1927 = vpack.c.b16 %v1813, %v1812
        %v1928 = vpack.c.b16 %v1815, %v1814
        %v1929 = vpack.c.b16 %v1817, %v1816
        %v1930 = vpack.c.b16 %v1819, %v1818
        %v1931 = vpack.c.b16 %v1821, %v1820
        %v1932 = vpack.c.b16 %v1823, %v1822
        %v1933 = vpack.c.b16 %v1825, %v1824
        %v1934 = vpack.c.b16 %v1827, %v1826
        %v1935 = vpack.c.b16 %v1829, %v1828
        %v1936 = vpack.c.b16 %v1831, %v1830
        %v1937 = vpack.c.b16 %v1833, %v1832
        %v1938 = vpack.c.b16 %v1835, %v1834
        %v1939 = vpack.c.b16 %v1837, %v1836
        %v1940 = vpack.c.b16 %v1839, %v1838
        %v1941 = vpack.c.b16 %v1841, %v1840
        %v1942 = vpack.c.b16 %v1843, %v1842
        %v1943 = vpack.c.b16 %v1845, %v1844
        %v1944 = vpack.c.b16 %v1847, %v1846
        %v1945 = vpack.c.b16 %v1849, %v1848
        %v1946 = vpack.c.b16 %v1851, %v1850
        %v1947 = vpack.c.b16 %v1853, %v1852
        %v1948 = vpack.c.b16 %v1855, %v1854
        %v1949 = vpack.c.b16 %v1857, %v1856
        %v1950 = vpack.c.b16 %v1859, %v1858
        %v1951 = vpack.c.b16 %v1861, %v1860
        %v1952 = vpack.c.b16 %v1863, %v1862
        %v1953 = vpack.c.b16 %v1865, %v1864
        %v1954 = vpack.c.b16 %v1867, %v1866
        %v1955 = vpack.c.b16 %v1869, %v1868
        %v1956 = vpack.c.b16 %v1871, %v1870
        %v1957 = vpack.c.b16 %v1873, %v1872
        %v1958 = vpack.c.b16 %v1875, %v1874
        %v1959 = vpack.c.b16 %v1877, %v1876
        %v1960 = vpack.c.b16 %v1879, %v1878
        %v1961 = vpack.c.b16 %v1881, %v1880
        %v1962 = vpack.c.b16 %v1883, %v1882
        %v1963 = vpack.c.b16 %v1885, %v1884
        %v1964 = vpack.c.b16 %v1887, %v1886
        %v1965 = vpack.c.b16 %v1889, %v1888
        %v1966 = vpack.c.b16 %v1891, %v1890
        %v1967 = vpack.c.b16 %v1893, %v1892
        %v1968 = vpack.c.b16 %v1895, %v1894
        %v1969 = vpack.c.b16 %v1897, %v1896
        %2042 = vmatprep.subr.bf16.mxu0 0
        %2043 = vmatpush1.bf16.msra.mxu0 %v1898
        %2044 = vmatprep.subr.bf16.mxu0 0
        %2045 = vmatpush1.bf16.msra.mxu0 %v1899
        %2046 = vmatprep.subr.bf16.mxu0 0
        %2047 = vmatpush1.bf16.msra.mxu0 %v1900
        %2048 = vmatprep.subr.bf16.mxu0 0
        %2049 = vmatpush1.bf16.msra.mxu0 %v1901
        %2050 = vmatprep.subr.bf16.mxu0 0
        %2051 = vmatpush1.bf16.msra.mxu0 %v1902
        %2052 = vmatprep.subr.bf16.mxu0 0
        %2053 = vmatpush1.bf16.msra.mxu0 %v1903
        %2054 = vmatprep.subr.bf16.mxu0 0
        %2055 = vmatpush1.bf16.msra.mxu0 %v1904
        %2056 = vmatprep.subr.bf16.mxu0 0
        %2057 = vmatpush1.bf16.msra.mxu0 %v1905
        %2058 = vmatprep.subr.bf16.mxu0 0
        %2059 = vmatpush1.bf16.msra.mxu0 %v1906
        %2060 = vmatprep.subr.bf16.mxu0 0
        %2061 = vmatpush1.bf16.msra.mxu0 %v1907
        %2062 = vmatprep.subr.bf16.mxu0 0
        %2063 = vmatpush1.bf16.msra.mxu0 %v1908
        %2064 = vmatprep.subr.bf16.mxu0 0
        %2065 = vmatpush1.bf16.msra.mxu0 %v1909
        %2066 = vmatprep.subr.bf16.mxu0 0
        %2067 = vmatpush1.bf16.msra.mxu0 %v1910
        %2068 = vmatprep.subr.bf16.mxu0 0
        %2069 = vmatpush1.bf16.msra.mxu0 %v1911
        %2070 = vmatprep.subr.bf16.mxu0 0
        %2071 = vmatpush1.bf16.msra.mxu0 %v1912
        %2072 = vmatprep.subr.bf16.mxu0 0
        %2073 = vmatpush1.bf16.msra.mxu0 %v1913
        %2074 = vmatprep.mubr.bf16.mxu0 %v1106
        %2075 = vmatmul.mubr.bf16.gmra.mrb[0].mxu0 %v1058
        %v2076 = vpop.f32.mrb[0].mxu0
        %v2077 = vadd.f32 %v1608, %v2076
        %v2078 = vpop.f32.mrb[0].mxu0
        %v2079 = vpop.f32.mrb[0].mxu0
        %v2080 = vadd.f32 %v1608, %v2079
        %v2081 = vpop.f32.mrb[0].mxu0
        %2082 = vmatprep.mubr.bf16.mxu0 %v1107
        %2083 = vmatmul.mubr.bf16.gmra.mrb[0].mxu0 %v1059
        %v2084 = vpop.f32.mrb[0].mxu0
        %v2085 = vadd.f32 %v1608, %v2084
        %v2086 = vpop.f32.mrb[0].mxu0
        %v2087 = vpop.f32.mrb[0].mxu0
        %v2088 = vadd.f32 %v1608, %v2087
        %v2089 = vpop.f32.mrb[0].mxu0
        %2090 = vmatprep.mubr.bf16.mxu0 %v1108
        %2091 = vmatmul.mubr.bf16.gmra.mrb[0].mxu0 %v1060
        %v2092 = vpop.f32.mrb[0].mxu0
        %v2093 = vadd.f32 %v1608, %v2092
        %v2094 = vpop.f32.mrb[0].mxu0
        %v2095 = vpop.f32.mrb[0].mxu0
        %v2096 = vadd.f32 %v1608, %v2095
        %v2097 = vpop.f32.mrb[0].mxu0
        %2098 = vmatprep.mubr.bf16.mxu0 %v1109
        %2099 = vmatmul.mubr.bf16.gmra.mrb[0].mxu0 %v1061
        %v2100 = vpop.f32.mrb[0].mxu0
        %v2101 = vadd.f32 %v1608, %v2100
        %v2102 = vpop.f32.mrb[0].mxu0
        %v2103 = vpop.f32.mrb[0].mxu0
        %v2104 = vadd.f32 %v1608, %v2103
        %v2105 = vpop.f32.mrb[0].mxu0
        %2106 = vmatprep.mubr.bf16.mxu0 %v1110
        %2107 = vmatmul.mubr.bf16.gmra.mrb[0].mxu0 %v1062
        %v2108 = vpop.f32.mrb[0].mxu0
        %v2109 = vadd.f32 %v1608, %v2108
        %v2110 = vpop.f32.mrb[0].mxu0
        %v2111 = vpop.f32.mrb[0].mxu0
        %v2112 = vadd.f32 %v1608, %v2111
        %v2113 = vpop.f32.mrb[0].mxu0
        %2114 = vmatprep.mubr.bf16.mxu0 %v1111
        %2115 = vmatmul.mubr.bf16.gmra.mrb[0].mxu0 %v1063
        %v2116 = vpop.f32.mrb[0].mxu0
        %v2117 = vadd.f32 %v1608, %v2116
        %v2118 = vpop.f32.mrb[0].mxu0
        %v2119 = vpop.f32.mrb[0].mxu0
        %v2120 = vadd.f32 %v1608, %v2119
        %v2121 = vpop.f32.mrb[0].mxu0
        %2122 = vmatprep.mubr.bf16.mxu0 %v1112
        %2123 = vmatmul.mubr.bf16.gmra.mrb[0].mxu0 %v1064
        %v2124 = vpop.f32.mrb[0].mxu0
        %v2125 = vadd.f32 %v1608, %v2124
        %v2126 = vpop.f32.mrb[0].mxu0
        %v2127 = vpop.f32.mrb[0].mxu0
        %v2128 = vadd.f32 %v1608, %v2127
        %v2129 = vpop.f32.mrb[0].mxu0
        %2130 = vmatprep.mubr.bf16.mxu0 %v1113
        %2131 = vmatmul.mubr.bf16.gmra.mrb[0].mxu0 %v1065
        %v2132 = vpop.f32.mrb[0].mxu0
        %v2133 = vadd.f32 %v1608, %v2132
        %v2134 = vpop.f32.mrb[0].mxu0
        %v2135 = vpop.f32.mrb[0].mxu0
        %v2136 = vadd.f32 %v1608, %v2135
        %v2137 = vpop.f32.mrb[0].mxu0
        %2138 = vmatprep.mubr.bf16.mxu0 %v1114
        %2139 = vmatmul.mubr.bf16.gmra.mrb[0].mxu0 %v1066
        %v2140 = vpop.f32.mrb[0].mxu0
        %v2141 = vadd.f32 %v1608, %v2140
        %v2142 = vpop.f32.mrb[0].mxu0
        %v2143 = vpop.f32.mrb[0].mxu0
        %v2144 = vadd.f32 %v1608, %v2143
        %v2145 = vpop.f32.mrb[0].mxu0
        %2146 = vmatprep.mubr.bf16.mxu0 %v1115
        %2147 = vmatmul.mubr.bf16.gmra.mrb[0].mxu0 %v1067
        %v2148 = vpop.f32.mrb[0].mxu0
        %v2149 = vadd.f32 %v1608, %v2148
        %v2150 = vpop.f32.mrb[0].mxu0
        %v2151 = vpop.f32.mrb[0].mxu0
        %v2152 = vadd.f32 %v1608, %v2151
        %v2153 = vpop.f32.mrb[0].mxu0
        %2154 = vmatprep.mubr.bf16.mxu0 %v1116
        %2155 = vmatmul.mubr.bf16.gmra.mrb[0].mxu0 %v1068
        %v2156 = vpop.f32.mrb[0].mxu0
        %v2157 = vadd.f32 %v1608, %v2156
        %v2158 = vpop.f32.mrb[0].mxu0
        %v2159 = vpop.f32.mrb[0].mxu0
        %v2160 = vadd.f32 %v1608, %v2159
        %v2161 = vpop.f32.mrb[0].mxu0
        %2162 = vmatprep.mubr.bf16.mxu0 %v1117
        %2163 = vmatmul.mubr.bf16.gmra.mrb[0].mxu0 %v1069
        %v2164 = vpop.f32.mrb[0].mxu0
        %v2165 = vadd.f32 %v1608, %v2164
        %v2166 = vpop.f32.mrb[0].mxu0
        %v2167 = vpop.f32.mrb[0].mxu0
        %v2168 = vadd.f32 %v1608, %v2167
        %v2169 = vpop.f32.mrb[0].mxu0
        %2170 = vmatprep.mubr.bf16.mxu0 %v1118
        %2171 = vmatmul.mubr.bf16.gmra.mrb[0].mxu0 %v1070
        %v2172 = vpop.f32.mrb[0].mxu0
        %v2173 = vadd.f32 %v1608, %v2172
        %v2174 = vpop.f32.mrb[0].mxu0
        %v2175 = vpop.f32.mrb[0].mxu0
        %v2176 = vadd.f32 %v1608, %v2175
        %v2177 = vpop.f32.mrb[0].mxu0
        %2178 = vmatprep.mubr.bf16.mxu0 %v1119
        %2179 = vmatmul.mubr.bf16.gmra.mrb[0].mxu0 %v1071
        %v2180 = vpop.f32.mrb[0].mxu0
        %v2181 = vadd.f32 %v1608, %v2180
        %v2182 = vpop.f32.mrb[0].mxu0
        %v2183 = vpop.f32.mrb[0].mxu0
        %v2184 = vadd.f32 %v1608, %v2183
        %v2185 = vpop.f32.mrb[0].mxu0
        %2186 = vmatprep.mubr.bf16.mxu0 %v1120
        %2187 = vmatmul.mubr.bf16.gmra.mrb[0].mxu0 %v1072
        %v2188 = vpop.f32.mrb[0].mxu0
        %v2189 = vadd.f32 %v1608, %v2188
        %v2190 = vpop.f32.mrb[0].mxu0
        %v2191 = vpop.f32.mrb[0].mxu0
        %v2192 = vadd.f32 %v1608, %v2191
        %v2193 = vpop.f32.mrb[0].mxu0
        %2194 = vmatprep.mubr.bf16.mxu0 %v1121
        %2195 = vmatmul.mubr.bf16.gmra.mrb[0].mxu0 %v1073
        %v2196 = vpop.f32.mrb[0].mxu0
        %v2197 = vadd.f32 %v1608, %v2196
        %v2198 = vpop.f32.mrb[0].mxu0
        %v2199 = vpop.f32.mrb[0].mxu0
        %v2200 = vadd.f32 %v1608, %v2199
        %v2201 = vpop.f32.mrb[0].mxu0
        %2202 = vdwg.mxu0
        %2203 = vmatprep.subr.bf16.mxu0 0
        %2204 = vmatpush1.bf16.msra.mxu0 %v1914
        %2205 = vmatprep.subr.bf16.mxu0 0
        %2206 = vmatpush1.bf16.msra.mxu0 %v1915
        %2207 = vmatprep.subr.bf16.mxu0 0
        %2208 = vmatpush1.bf16.msra.mxu0 %v1916
        %2209 = vmatprep.subr.bf16.mxu0 0
        %2210 = vmatpush1.bf16.msra.mxu0 %v1917
        %2211 = vmatprep.subr.bf16.mxu0 0
        %2212 = vmatpush1.bf16.msra.mxu0 %v1918
        %2213 = vmatprep.subr.bf16.mxu0 0
        %2214 = vmatpush1.bf16.msra.mxu0 %v1919
        %2215 = vmatprep.subr.bf16.mxu0 0
        %2216 = vmatpush1.bf16.msra.mxu0 %v1920
        %2217 = vmatprep.subr.bf16.mxu0 0
        %2218 = vmatpush1.bf16.msra.mxu0 %v1921
        %2219 = vmatprep.subr.bf16.mxu0 0
        %2220 = vmatpush1.bf16.msra.mxu0 %v1922
        %2221 = vmatprep.subr.bf16.mxu0 0
        %2222 = vmatpush1.bf16.msra.mxu0 %v1923
        %2223 = vmatprep.subr.bf16.mxu0 0
        %2224 = vmatpush1.bf16.msra.mxu0 %v1924
        %2225 = vmatprep.subr.bf16.mxu0 0
        %2226 = vmatpush1.bf16.msra.mxu0 %v1925
        %2227 = vmatprep.subr.bf16.mxu0 0
        %2228 = vmatpush1.bf16.msra.mxu0 %v1926
        %2229 = vmatprep.subr.bf16.mxu0 0
        %2230 = vmatpush1.bf16.msra.mxu0 %v1927
        %2231 = vmatprep.subr.bf16.mxu0 0
        %2232 = vmatpush1.bf16.msra.mxu0 %v1928
        %2233 = vmatprep.subr.bf16.mxu0 0
        %2234 = vmatpush1.bf16.msra.mxu0 %v1929
        %2235 = vmatprep.mubr.bf16.mxu0 %v1202
        %2236 = vmatmul.mubr.bf16.gmra.mrb[0].mxu0 %v1154
        %v2237 = vpop.f32.mrb[0].mxu0
        %v2238 = vadd.f32 %v2077, %v2237
        %v2239 = vpop.f32.mrb[0].mxu0
        %v2240 = vpop.f32.mrb[0].mxu0
        %v2241 = vadd.f32 %v2080, %v2240
        %v2242 = vpop.f32.mrb[0].mxu0
        %2243 = vmatprep.mubr.bf16.mxu0 %v1203
        %2244 = vmatmul.mubr.bf16.gmra.mrb[0].mxu0 %v1155
        %v2245 = vpop.f32.mrb[0].mxu0
        %v2246 = vadd.f32 %v2085, %v2245
        %v2247 = vpop.f32.mrb[0].mxu0
        %v2248 = vpop.f32.mrb[0].mxu0
        %v2249 = vadd.f32 %v2088, %v2248
        %v2250 = vpop.f32.mrb[0].mxu0
        %2251 = vmatprep.mubr.bf16.mxu0 %v1204
        %2252 = vmatmul.mubr.bf16.gmra.mrb[0].mxu0 %v1156
        %v2253 = vpop.f32.mrb[0].mxu0
        %v2254 = vadd.f32 %v2093, %v2253
        %v2255 = vpop.f32.mrb[0].mxu0
        %v2256 = vpop.f32.mrb[0].mxu0
        %v2257 = vadd.f32 %v2096, %v2256
        %v2258 = vpop.f32.mrb[0].mxu0
        %2259 = vmatprep.mubr.bf16.mxu0 %v1205
        %2260 = vmatmul.mubr.bf16.gmra.mrb[0].mxu0 %v1157
        %v2261 = vpop.f32.mrb[0].mxu0
        %v2262 = vadd.f32 %v2101, %v2261
        %v2263 = vpop.f32.mrb[0].mxu0
        %v2264 = vpop.f32.mrb[0].mxu0
        %v2265 = vadd.f32 %v2104, %v2264
        %v2266 = vpop.f32.mrb[0].mxu0
        %2267 = vmatprep.mubr.bf16.mxu0 %v1206
        %2268 = vmatmul.mubr.bf16.gmra.mrb[0].mxu0 %v1158
        %v2269 = vpop.f32.mrb[0].mxu0
        %v2270 = vadd.f32 %v2109, %v2269
        %v2271 = vpop.f32.mrb[0].mxu0
        %v2272 = vpop.f32.mrb[0].mxu0
        %v2273 = vadd.f32 %v2112, %v2272
        %v2274 = vpop.f32.mrb[0].mxu0
        %2275 = vmatprep.mubr.bf16.mxu0 %v1207
        %2276 = vmatmul.mubr.bf16.gmra.mrb[0].mxu0 %v1159
        %v2277 = vpop.f32.mrb[0].mxu0
        %v2278 = vadd.f32 %v2117, %v2277
        %v2279 = vpop.f32.mrb[0].mxu0
        %v2280 = vpop.f32.mrb[0].mxu0
        %v2281 = vadd.f32 %v2120, %v2280
        %v2282 = vpop.f32.mrb[0].mxu0
        %2283 = vmatprep.mubr.bf16.mxu0 %v1208
        %2284 = vmatmul.mubr.bf16.gmra.mrb[0].mxu0 %v1160
        %v2285 = vpop.f32.mrb[0].mxu0
        %v2286 = vadd.f32 %v2125, %v2285
        %v2287 = vpop.f32.mrb[0].mxu0
        %v2288 = vpop.f32.mrb[0].mxu0
        %v2289 = vadd.f32 %v2128, %v2288
        %v2290 = vpop.f32.mrb[0].mxu0
        %2291 = vmatprep.mubr.bf16.mxu0 %v1209
        %2292 = vmatmul.mubr.bf16.gmra.mrb[0].mxu0 %v1161
        %v2293 = vpop.f32.mrb[0].mxu0
        %v2294 = vadd.f32 %v2133, %v2293
        %v2295 = vpop.f32.mrb[0].mxu0
        %v2296 = vpop.f32.mrb[0].mxu0
        %v2297 = vadd.f32 %v2136, %v2296
        %v2298 = vpop.f32.mrb[0].mxu0
        %2299 = vmatprep.mubr.bf16.mxu0 %v1210
        %2300 = vmatmul.mubr.bf16.gmra.mrb[0].mxu0 %v1162
        %v2301 = vpop.f32.mrb[0].mxu0
        %v2302 = vadd.f32 %v2141, %v2301
        %v2303 = vpop.f32.mrb[0].mxu0
        %v2304 = vpop.f32.mrb[0].mxu0
        %v2305 = vadd.f32 %v2144, %v2304
        %v2306 = vpop.f32.mrb[0].mxu0
        %2307 = vmatprep.mubr.bf16.mxu0 %v1211
        %2308 = vmatmul.mubr.bf16.gmra.mrb[0].mxu0 %v1163
        %v2309 = vpop.f32.mrb[0].mxu0
        %v2310 = vadd.f32 %v2149, %v2309
        %v2311 = vpop.f32.mrb[0].mxu0
        %v2312 = vpop.f32.mrb[0].mxu0
        %v2313 = vadd.f32 %v2152, %v2312
        %v2314 = vpop.f32.mrb[0].mxu0
        %2315 = vmatprep.mubr.bf16.mxu0 %v1212
        %2316 = vmatmul.mubr.bf16.gmra.mrb[0].mxu0 %v1164
        %v2317 = vpop.f32.mrb[0].mxu0
        %v2318 = vadd.f32 %v2157, %v2317
        %v2319 = vpop.f32.mrb[0].mxu0
        %v2320 = vpop.f32.mrb[0].mxu0
        %v2321 = vadd.f32 %v2160, %v2320
        %v2322 = vpop.f32.mrb[0].mxu0
        %2323 = vmatprep.mubr.bf16.mxu0 %v1213
        %2324 = vmatmul.mubr.bf16.gmra.mrb[0].mxu0 %v1165
        %v2325 = vpop.f32.mrb[0].mxu0
        %v2326 = vadd.f32 %v2165, %v2325
        %v2327 = vpop.f32.mrb[0].mxu0
        %v2328 = vpop.f32.mrb[0].mxu0
        %v2329 = vadd.f32 %v2168, %v2328
        %v2330 = vpop.f32.mrb[0].mxu0
        %2331 = vmatprep.mubr.bf16.mxu0 %v1214
        %2332 = vmatmul.mubr.bf16.gmra.mrb[0].mxu0 %v1166
        %v2333 = vpop.f32.mrb[0].mxu0
        %v2334 = vadd.f32 %v2173, %v2333
        %v2335 = vpop.f32.mrb[0].mxu0
        %v2336 = vpop.f32.mrb[0].mxu0
        %v2337 = vadd.f32 %v2176, %v2336
        %v2338 = vpop.f32.mrb[0].mxu0
        %2339 = vmatprep.mubr.bf16.mxu0 %v1215
        %2340 = vmatmul.mubr.bf16.gmra.mrb[0].mxu0 %v1167
        %v2341 = vpop.f32.mrb[0].mxu0
        %v2342 = vadd.f32 %v2181, %v2341
        %v2343 = vpop.f32.mrb[0].mxu0
        %v2344 = vpop.f32.mrb[0].mxu0
        %v2345 = vadd.f32 %v2184, %v2344
        %v2346 = vpop.f32.mrb[0].mxu0
        %2347 = vmatprep.mubr.bf16.mxu0 %v1216
        %2348 = vmatmul.mubr.bf16.gmra.mrb[0].mxu0 %v1168
        %v2349 = vpop.f32.mrb[0].mxu0
        %v2350 = vadd.f32 %v2189, %v2349
        %v2351 = vpop.f32.mrb[0].mxu0
        %v2352 = vpop.f32.mrb[0].mxu0
        %v2353 = vadd.f32 %v2192, %v2352
        %v2354 = vpop.f32.mrb[0].mxu0
        %2355 = vmatprep.mubr.bf16.mxu0 %v1217
        %2356 = vmatmul.mubr.bf16.gmra.mrb[0].mxu0 %v1169
        %v2357 = vpop.f32.mrb[0].mxu0
        %v2358 = vadd.f32 %v2197, %v2357
        %v2359 = vpop.f32.mrb[0].mxu0
        %v2360 = vpop.f32.mrb[0].mxu0
        %v2361 = vadd.f32 %v2200, %v2360
        %v2362 = vpop.f32.mrb[0].mxu0
        %2363 = vdwg.mxu0
        %2364 = vmatprep.subr.bf16.mxu0 0
        %2365 = vmatpush1.bf16.msra.mxu0 %v1930
        %2366 = vmatprep.subr.bf16.mxu0 0
        %2367 = vmatpush1.bf16.msra.mxu0 %v1931
        %2368 = vmatprep.subr.bf16.mxu0 0
        %2369 = vmatpush1.bf16.msra.mxu0 %v1932
        %2370 = vmatprep.subr.bf16.mxu0 0
        %2371 = vmatpush1.bf16.msra.mxu0 %v1933
        %2372 = vmatprep.subr.bf16.mxu0 0
        %2373 = vmatpush1.bf16.msra.mxu0 %v1934
        %2374 = vmatprep.subr.bf16.mxu0 0
        %2375 = vmatpush1.bf16.msra.mxu0 %v1935
        %2376 = vmatprep.subr.bf16.mxu0 0
        %2377 = vmatpush1.bf16.msra.mxu0 %v1936
        %2378 = vmatprep.subr.bf16.mxu0 0
        %2379 = vmatpush1.bf16.msra.mxu0 %v1937
        %2380 = vmatprep.subr.bf16.mxu0 0
        %2381 = vmatpush1.bf16.msra.mxu0 %v1938
        %2382 = vmatprep.subr.bf16.mxu0 0
        %2383 = vmatpush1.bf16.msra.mxu0 %v1939
        %2384 = vmatprep.subr.bf16.mxu0 0
        %2385 = vmatpush1.bf16.msra.mxu0 %v1940
        %2386 = vmatprep.subr.bf16.mxu0 0
        %2387 = vmatpush1.bf16.msra.mxu0 %v1941
        %2388 = vmatprep.subr.bf16.mxu0 0
        %2389 = vmatpush1.bf16.msra.mxu0 %v1942
        %2390 = vmatprep.subr.bf16.mxu0 0
        %2391 = vmatpush1.bf16.msra.mxu0 %v1943
        %2392 = vmatprep.subr.bf16.mxu0 0
        %2393 = vmatpush1.bf16.msra.mxu0 %v1944
        %2394 = vmatprep.subr.bf16.mxu0 0
        %2395 = vmatpush1.bf16.msra.mxu0 %v1945
        %2396 = vmatprep.mubr.bf16.mxu0 %v1298
        %2397 = vmatmul.mubr.bf16.gmra.mrb[0].mxu0 %v1250
        %v2398 = vpop.f32.mrb[0].mxu0
        %v2399 = vadd.f32 %v2238, %v2398
        %v2400 = vpop.f32.mrb[0].mxu0
        %v2401 = vpop.f32.mrb[0].mxu0
        %v2402 = vadd.f32 %v2241, %v2401
        %v2403 = vpop.f32.mrb[0].mxu0
        %2404 = vmatprep.mubr.bf16.mxu0 %v1299
        %2405 = vmatmul.mubr.bf16.gmra.mrb[0].mxu0 %v1251
        %v2406 = vpop.f32.mrb[0].mxu0
        %v2407 = vadd.f32 %v2246, %v2406
        %v2408 = vpop.f32.mrb[0].mxu0
        %v2409 = vpop.f32.mrb[0].mxu0
        %v2410 = vadd.f32 %v2249, %v2409
        %v2411 = vpop.f32.mrb[0].mxu0
        %2412 = vmatprep.mubr.bf16.mxu0 %v1300
        %2413 = vmatmul.mubr.bf16.gmra.mrb[0].mxu0 %v1252
        %v2414 = vpop.f32.mrb[0].mxu0
        %v2415 = vadd.f32 %v2254, %v2414
        %v2416 = vpop.f32.mrb[0].mxu0
        %v2417 = vpop.f32.mrb[0].mxu0
        %v2418 = vadd.f32 %v2257, %v2417
        %v2419 = vpop.f32.mrb[0].mxu0
        %2420 = vmatprep.mubr.bf16.mxu0 %v1301
        %2421 = vmatmul.mubr.bf16.gmra.mrb[0].mxu0 %v1253
        %v2422 = vpop.f32.mrb[0].mxu0
        %v2423 = vadd.f32 %v2262, %v2422
        %v2424 = vpop.f32.mrb[0].mxu0
        %v2425 = vpop.f32.mrb[0].mxu0
        %v2426 = vadd.f32 %v2265, %v2425
        %v2427 = vpop.f32.mrb[0].mxu0
        %2428 = vmatprep.mubr.bf16.mxu0 %v1302
        %2429 = vmatmul.mubr.bf16.gmra.mrb[0].mxu0 %v1254
        %v2430 = vpop.f32.mrb[0].mxu0
        %v2431 = vadd.f32 %v2270, %v2430
        %v2432 = vpop.f32.mrb[0].mxu0
        %v2433 = vpop.f32.mrb[0].mxu0
        %v2434 = vadd.f32 %v2273, %v2433
        %v2435 = vpop.f32.mrb[0].mxu0
        %2436 = vmatprep.mubr.bf16.mxu0 %v1303
        %2437 = vmatmul.mubr.bf16.gmra.mrb[0].mxu0 %v1255
        %v2438 = vpop.f32.mrb[0].mxu0
        %v2439 = vadd.f32 %v2278, %v2438
        %v2440 = vpop.f32.mrb[0].mxu0
        %v2441 = vpop.f32.mrb[0].mxu0
        %v2442 = vadd.f32 %v2281, %v2441
        %v2443 = vpop.f32.mrb[0].mxu0
        %2444 = vmatprep.mubr.bf16.mxu0 %v1304
        %2445 = vmatmul.mubr.bf16.gmra.mrb[0].mxu0 %v1256
        %v2446 = vpop.f32.mrb[0].mxu0
        %v2447 = vadd.f32 %v2286, %v2446
        %v2448 = vpop.f32.mrb[0].mxu0
        %v2449 = vpop.f32.mrb[0].mxu0
        %v2450 = vadd.f32 %v2289, %v2449
        %v2451 = vpop.f32.mrb[0].mxu0
        %2452 = vmatprep.mubr.bf16.mxu0 %v1305
        %2453 = vmatmul.mubr.bf16.gmra.mrb[0].mxu0 %v1257
        %v2454 = vpop.f32.mrb[0].mxu0
        %v2455 = vadd.f32 %v2294, %v2454
        %v2456 = vpop.f32.mrb[0].mxu0
        %v2457 = vpop.f32.mrb[0].mxu0
        %v2458 = vadd.f32 %v2297, %v2457
        %v2459 = vpop.f32.mrb[0].mxu0
        %2460 = vmatprep.mubr.bf16.mxu0 %v1306
        %2461 = vmatmul.mubr.bf16.gmra.mrb[0].mxu0 %v1258
        %v2462 = vpop.f32.mrb[0].mxu0
        %v2463 = vadd.f32 %v2302, %v2462
        %v2464 = vpop.f32.mrb[0].mxu0
        %v2465 = vpop.f32.mrb[0].mxu0
        %v2466 = vadd.f32 %v2305, %v2465
        %v2467 = vpop.f32.mrb[0].mxu0
        %2468 = vmatprep.mubr.bf16.mxu0 %v1307
        %2469 = vmatmul.mubr.bf16.gmra.mrb[0].mxu0 %v1259
        %v2470 = vpop.f32.mrb[0].mxu0
        %v2471 = vadd.f32 %v2310, %v2470
        %v2472 = vpop.f32.mrb[0].mxu0
        %v2473 = vpop.f32.mrb[0].mxu0
        %v2474 = vadd.f32 %v2313, %v2473
        %v2475 = vpop.f32.mrb[0].mxu0
        %2476 = vmatprep.mubr.bf16.mxu0 %v1308
        %2477 = vmatmul.mubr.bf16.gmra.mrb[0].mxu0 %v1260
        %v2478 = vpop.f32.mrb[0].mxu0
        %v2479 = vadd.f32 %v2318, %v2478
        %v2480 = vpop.f32.mrb[0].mxu0
        %v2481 = vpop.f32.mrb[0].mxu0
        %v2482 = vadd.f32 %v2321, %v2481
        %v2483 = vpop.f32.mrb[0].mxu0
        %2484 = vmatprep.mubr.bf16.mxu0 %v1309
        %2485 = vmatmul.mubr.bf16.gmra.mrb[0].mxu0 %v1261
        %v2486 = vpop.f32.mrb[0].mxu0
        %v2487 = vadd.f32 %v2326, %v2486
        %v2488 = vpop.f32.mrb[0].mxu0
        %v2489 = vpop.f32.mrb[0].mxu0
        %v2490 = vadd.f32 %v2329, %v2489
        %v2491 = vpop.f32.mrb[0].mxu0
        %2492 = vmatprep.mubr.bf16.mxu0 %v1310
        %2493 = vmatmul.mubr.bf16.gmra.mrb[0].mxu0 %v1262
        %v2494 = vpop.f32.mrb[0].mxu0
        %v2495 = vadd.f32 %v2334, %v2494
        %v2496 = vpop.f32.mrb[0].mxu0
        %v2497 = vpop.f32.mrb[0].mxu0
        %v2498 = vadd.f32 %v2337, %v2497
        %v2499 = vpop.f32.mrb[0].mxu0
        %2500 = vmatprep.mubr.bf16.mxu0 %v1311
        %2501 = vmatmul.mubr.bf16.gmra.mrb[0].mxu0 %v1263
        %v2502 = vpop.f32.mrb[0].mxu0
        %v2503 = vadd.f32 %v2342, %v2502
        %v2504 = vpop.f32.mrb[0].mxu0
        %v2505 = vpop.f32.mrb[0].mxu0
        %v2506 = vadd.f32 %v2345, %v2505
        %v2507 = vpop.f32.mrb[0].mxu0
        %2508 = vmatprep.mubr.bf16.mxu0 %v1312
        %2509 = vmatmul.mubr.bf16.gmra.mrb[0].mxu0 %v1264
        %v2510 = vpop.f32.mrb[0].mxu0
        %v2511 = vadd.f32 %v2350, %v2510
        %v2512 = vpop.f32.mrb[0].mxu0
        %v2513 = vpop.f32.mrb[0].mxu0
        %v2514 = vadd.f32 %v2353, %v2513
        %v2515 = vpop.f32.mrb[0].mxu0
        %2516 = vmatprep.mubr.bf16.mxu0 %v1313
        %2517 = vmatmul.mubr.bf16.gmra.mrb[0].mxu0 %v1265
        %v2518 = vpop.f32.mrb[0].mxu0
        %v2519 = vadd.f32 %v2358, %v2518
        %v2520 = vpop.f32.mrb[0].mxu0
        %v2521 = vpop.f32.mrb[0].mxu0
        %v2522 = vadd.f32 %v2361, %v2521
        %v2523 = vpop.f32.mrb[0].mxu0
        %2524 = vdwg.mxu0
        %2525 = vmatprep.subr.bf16.mxu0 0
        %2526 = vmatpush1.bf16.msra.mxu0 %v1946
        %2527 = vmatprep.subr.bf16.mxu0 0
        %2528 = vmatpush1.bf16.msra.mxu0 %v1947
        %2529 = vmatprep.subr.bf16.mxu0 0
        %2530 = vmatpush1.bf16.msra.mxu0 %v1948
        %2531 = vmatprep.subr.bf16.mxu0 0
        %2532 = vmatpush1.bf16.msra.mxu0 %v1949
        %2533 = vmatprep.subr.bf16.mxu0 0
        %2534 = vmatpush1.bf16.msra.mxu0 %v1950
        %2535 = vmatprep.subr.bf16.mxu0 0
        %2536 = vmatpush1.bf16.msra.mxu0 %v1951
        %2537 = vmatprep.subr.bf16.mxu0 0
        %2538 = vmatpush1.bf16.msra.mxu0 %v1952
        %2539 = vmatprep.subr.bf16.mxu0 0
        %2540 = vmatpush1.bf16.msra.mxu0 %v1953
        %2541 = vmatprep.subr.bf16.mxu0 0
        %2542 = vmatpush1.bf16.msra.mxu0 %v1954
        %2543 = vmatprep.subr.bf16.mxu0 0
        %2544 = vmatpush1.bf16.msra.mxu0 %v1955
        %2545 = vmatprep.subr.bf16.mxu0 0
        %2546 = vmatpush1.bf16.msra.mxu0 %v1956
        %2547 = vmatprep.subr.bf16.mxu0 0
        %2548 = vmatpush1.bf16.msra.mxu0 %v1957
        %2549 = vmatprep.subr.bf16.mxu0 0
        %2550 = vmatpush1.bf16.msra.mxu0 %v1958
        %2551 = vmatprep.subr.bf16.mxu0 0
        %2552 = vmatpush1.bf16.msra.mxu0 %v1959
        %2553 = vmatprep.subr.bf16.mxu0 0
        %2554 = vmatpush1.bf16.msra.mxu0 %v1960
        %2555 = vmatprep.subr.bf16.mxu0 0
        %2556 = vmatpush1.bf16.msra.mxu0 %v1961
        %2557 = vmatprep.mubr.bf16.mxu0 %v1395
        %2558 = vmatmul.mubr.bf16.gmra.mrb[0].mxu0 %v1347
        %v2559 = vpop.f32.mrb[0].mxu0
        %v2560 = vadd.f32 %v2399, %v2559
        %v2561 = vpop.f32.mrb[0].mxu0
        %v2562 = vpop.f32.mrb[0].mxu0
        %v2563 = vadd.f32 %v2402, %v2562
        %v2564 = vpop.f32.mrb[0].mxu0
        %2565 = vmatprep.mubr.bf16.mxu0 %v1396
        %2566 = vmatmul.mubr.bf16.gmra.mrb[0].mxu0 %v1348
        %v2567 = vpop.f32.mrb[0].mxu0
        %v2568 = vadd.f32 %v2407, %v2567
        %v2569 = vpop.f32.mrb[0].mxu0
        %v2570 = vpop.f32.mrb[0].mxu0
        %v2571 = vadd.f32 %v2410, %v2570
        %v2572 = vpop.f32.mrb[0].mxu0
        %2573 = vmatprep.mubr.bf16.mxu0 %v1397
        %2574 = vmatmul.mubr.bf16.gmra.mrb[0].mxu0 %v1349
        %v2575 = vpop.f32.mrb[0].mxu0
        %v2576 = vadd.f32 %v2415, %v2575
        %v2577 = vpop.f32.mrb[0].mxu0
        %v2578 = vpop.f32.mrb[0].mxu0
        %v2579 = vadd.f32 %v2418, %v2578
        %v2580 = vpop.f32.mrb[0].mxu0
        %2581 = vmatprep.mubr.bf16.mxu0 %v1398
        %2582 = vmatmul.mubr.bf16.gmra.mrb[0].mxu0 %v1350
        %v2583 = vpop.f32.mrb[0].mxu0
        %v2584 = vadd.f32 %v2423, %v2583
        %v2585 = vpop.f32.mrb[0].mxu0
        %v2586 = vpop.f32.mrb[0].mxu0
        %v2587 = vadd.f32 %v2426, %v2586
        %v2588 = vpop.f32.mrb[0].mxu0
        %2589 = vmatprep.mubr.bf16.mxu0 %v1399
        %2590 = vmatmul.mubr.bf16.gmra.mrb[0].mxu0 %v1351
        %v2591 = vpop.f32.mrb[0].mxu0
        %v2592 = vadd.f32 %v2431, %v2591
        %v2593 = vpop.f32.mrb[0].mxu0
        %v2594 = vpop.f32.mrb[0].mxu0
        %v2595 = vadd.f32 %v2434, %v2594
        %v2596 = vpop.f32.mrb[0].mxu0
        %2597 = vmatprep.mubr.bf16.mxu0 %v1400
        %2598 = vmatmul.mubr.bf16.gmra.mrb[0].mxu0 %v1352
        %v2599 = vpop.f32.mrb[0].mxu0
        %v2600 = vadd.f32 %v2439, %v2599
        %v2601 = vpop.f32.mrb[0].mxu0
        %v2602 = vpop.f32.mrb[0].mxu0
        %v2603 = vadd.f32 %v2442, %v2602
        %v2604 = vpop.f32.mrb[0].mxu0
        %2605 = vmatprep.mubr.bf16.mxu0 %v1401
        %2606 = vmatmul.mubr.bf16.gmra.mrb[0].mxu0 %v1353
        %v2607 = vpop.f32.mrb[0].mxu0
        %v2608 = vadd.f32 %v2447, %v2607
        %v2609 = vpop.f32.mrb[0].mxu0
        %v2610 = vpop.f32.mrb[0].mxu0
        %v2611 = vadd.f32 %v2450, %v2610
        %v2612 = vpop.f32.mrb[0].mxu0
        %2613 = vmatprep.mubr.bf16.mxu0 %v1402
        %2614 = vmatmul.mubr.bf16.gmra.mrb[0].mxu0 %v1354
        %v2615 = vpop.f32.mrb[0].mxu0
        %v2616 = vadd.f32 %v2455, %v2615
        %v2617 = vpop.f32.mrb[0].mxu0
        %v2618 = vpop.f32.mrb[0].mxu0
        %v2619 = vadd.f32 %v2458, %v2618
        %v2620 = vpop.f32.mrb[0].mxu0
        %2621 = vmatprep.mubr.bf16.mxu0 %v1403
        %2622 = vmatmul.mubr.bf16.gmra.mrb[0].mxu0 %v1355
        %v2623 = vpop.f32.mrb[0].mxu0
        %v2624 = vadd.f32 %v2463, %v2623
        %v2625 = vpop.f32.mrb[0].mxu0
        %v2626 = vpop.f32.mrb[0].mxu0
        %v2627 = vadd.f32 %v2466, %v2626
        %v2628 = vpop.f32.mrb[0].mxu0
        %2629 = vmatprep.mubr.bf16.mxu0 %v1404
        %2630 = vmatmul.mubr.bf16.gmra.mrb[0].mxu0 %v1356
        %v2631 = vpop.f32.mrb[0].mxu0
        %v2632 = vadd.f32 %v2471, %v2631
        %v2633 = vpop.f32.mrb[0].mxu0
        %v2634 = vpop.f32.mrb[0].mxu0
        %v2635 = vadd.f32 %v2474, %v2634
        %v2636 = vpop.f32.mrb[0].mxu0
        %2637 = vmatprep.mubr.bf16.mxu0 %v1405
        %2638 = vmatmul.mubr.bf16.gmra.mrb[0].mxu0 %v1357
        %v2639 = vpop.f32.mrb[0].mxu0
        %v2640 = vadd.f32 %v2479, %v2639
        %v2641 = vpop.f32.mrb[0].mxu0
        %v2642 = vpop.f32.mrb[0].mxu0
        %v2643 = vadd.f32 %v2482, %v2642
        %v2644 = vpop.f32.mrb[0].mxu0
        %2645 = vmatprep.mubr.bf16.mxu0 %v1406
        %2646 = vmatmul.mubr.bf16.gmra.mrb[0].mxu0 %v1358
        %v2647 = vpop.f32.mrb[0].mxu0
        %v2648 = vadd.f32 %v2487, %v2647
        %v2649 = vpop.f32.mrb[0].mxu0
        %v2650 = vpop.f32.mrb[0].mxu0
        %v2651 = vadd.f32 %v2490, %v2650
        %v2652 = vpop.f32.mrb[0].mxu0
        %2653 = vmatprep.mubr.bf16.mxu0 %v1407
        %2654 = vmatmul.mubr.bf16.gmra.mrb[0].mxu0 %v1359
        %v2655 = vpop.f32.mrb[0].mxu0
        %v2656 = vadd.f32 %v2495, %v2655
        %v2657 = vpop.f32.mrb[0].mxu0
        %v2658 = vpop.f32.mrb[0].mxu0
        %v2659 = vadd.f32 %v2498, %v2658
        %v2660 = vpop.f32.mrb[0].mxu0
        %2661 = vmatprep.mubr.bf16.mxu0 %v1408
        %2662 = vmatmul.mubr.bf16.gmra.mrb[0].mxu0 %v1360
        %v2663 = vpop.f32.mrb[0].mxu0
        %v2664 = vadd.f32 %v2503, %v2663
        %v2665 = vpop.f32.mrb[0].mxu0
        %v2666 = vpop.f32.mrb[0].mxu0
        %v2667 = vadd.f32 %v2506, %v2666
        %v2668 = vpop.f32.mrb[0].mxu0
        %2669 = vmatprep.mubr.bf16.mxu0 %v1409
        %2670 = vmatmul.mubr.bf16.gmra.mrb[0].mxu0 %v1361
        %v2671 = vpop.f32.mrb[0].mxu0
        %v2672 = vadd.f32 %v2511, %v2671
        %v2673 = vpop.f32.mrb[0].mxu0
        %v2674 = vpop.f32.mrb[0].mxu0
        %v2675 = vadd.f32 %v2514, %v2674
        %v2676 = vpop.f32.mrb[0].mxu0
        %2677 = vmatprep.mubr.bf16.mxu0 %v1410
        %2678 = vmatmul.mubr.bf16.gmra.mrb[0].mxu0 %v1362
        %v2679 = vpop.f32.mrb[0].mxu0
        %v2680 = vadd.f32 %v2519, %v2679
        %v2681 = vpop.f32.mrb[0].mxu0
        %v2682 = vpop.f32.mrb[0].mxu0
        %v2683 = vadd.f32 %v2522, %v2682
        %v2684 = vpop.f32.mrb[0].mxu0
        %2685 = vdwg.mxu0
        %2686 = vmatprep.subr.bf16.mxu0 0
        %2687 = vmatpush1.bf16.msra.mxu0 %v1962
        %2688 = vmatprep.subr.bf16.mxu0 0
        %2689 = vmatpush1.bf16.msra.mxu0 %v1963
        %2690 = vmatprep.subr.bf16.mxu0 0
        %2691 = vmatpush1.bf16.msra.mxu0 %v1964
        %2692 = vmatprep.subr.bf16.mxu0 0
        %2693 = vmatpush1.bf16.msra.mxu0 %v1965
        %2694 = vmatprep.subr.bf16.mxu0 0
        %2695 = vmatpush1.bf16.msra.mxu0 %v1966
        %2696 = vmatprep.subr.bf16.mxu0 0
        %2697 = vmatpush1.bf16.msra.mxu0 %v1967
        %2698 = vmatprep.subr.bf16.mxu0 0
        %2699 = vmatpush1.bf16.msra.mxu0 %v1968
        %2700 = vmatprep.subr.bf16.mxu0 0
        %2701 = vmatpush1.bf16.msra.mxu0 %v1969
        %2702 = vmatprep.subr.bf16.mxu0 0
        %2703 = vmatpush1.bf16.msra.mxu0 0
        %2704 = vmatprep.subr.bf16.mxu0 0
        %2705 = vmatpush1.bf16.msra.mxu0 0
        %2706 = vmatprep.subr.bf16.mxu0 0
        %2707 = vmatpush1.bf16.msra.mxu0 0
        %2708 = vmatprep.subr.bf16.mxu0 0
        %2709 = vmatpush1.bf16.msra.mxu0 0
        %2710 = vmatprep.subr.bf16.mxu0 0
        %2711 = vmatpush1.bf16.msra.mxu0 0
        %2712 = vmatprep.subr.bf16.mxu0 0
        %2713 = vmatpush1.bf16.msra.mxu0 0
        %2714 = vmatprep.subr.bf16.mxu0 0
        %2715 = vmatpush1.bf16.msra.mxu0 0
        %2716 = vmatprep.subr.bf16.mxu0 0
        %2717 = vmatpush1.bf16.msra.mxu0 0
        %2718 = vmatprep.mubr.bf16.mxu0 0
        %2719 = vmatmul.mubr.bf16.gmra.mrb[0].mxu0 %v1443
        %v2720 = vpop.f32.mrb[0].mxu0
        %v2721 = vadd.f32 %v2560, %v2720
        %v2722 = vpop.f32.mrb[0].mxu0
        %v2723 = vpop.f32.mrb[0].mxu0
        %v2724 = vadd.f32 %v2563, %v2723
        %v2725 = vpop.f32.mrb[0].mxu0
        %2726 = vmatprep.mubr.bf16.mxu0 0
        %2727 = vmatmul.mubr.bf16.gmra.mrb[0].mxu0 %v1444
        %v2728 = vpop.f32.mrb[0].mxu0
        %v2729 = vadd.f32 %v2568, %v2728
        %v2730 = vpop.f32.mrb[0].mxu0
        %v2731 = vpop.f32.mrb[0].mxu0
        %v2732 = vadd.f32 %v2571, %v2731
        %v2733 = vpop.f32.mrb[0].mxu0
        %2734 = vmatprep.mubr.bf16.mxu0 0
        %2735 = vmatmul.mubr.bf16.gmra.mrb[0].mxu0 %v1445
        %v2736 = vpop.f32.mrb[0].mxu0
        %v2737 = vadd.f32 %v2576, %v2736
        %v2738 = vpop.f32.mrb[0].mxu0
        %v2739 = vpop.f32.mrb[0].mxu0
        %v2740 = vadd.f32 %v2579, %v2739
        %v2741 = vpop.f32.mrb[0].mxu0
        %2742 = vmatprep.mubr.bf16.mxu0 0
        %2743 = vmatmul.mubr.bf16.gmra.mrb[0].mxu0 %v1446
        %v2744 = vpop.f32.mrb[0].mxu0
        %v2745 = vadd.f32 %v2584, %v2744
        %v2746 = vpop.f32.mrb[0].mxu0
        %v2747 = vpop.f32.mrb[0].mxu0
        %v2748 = vadd.f32 %v2587, %v2747
        %v2749 = vpop.f32.mrb[0].mxu0
        %2750 = vmatprep.mubr.bf16.mxu0 0
        %2751 = vmatmul.mubr.bf16.gmra.mrb[0].mxu0 %v1447
        %v2752 = vpop.f32.mrb[0].mxu0
        %v2753 = vadd.f32 %v2592, %v2752
        %v2754 = vpop.f32.mrb[0].mxu0
        %v2755 = vpop.f32.mrb[0].mxu0
        %v2756 = vadd.f32 %v2595, %v2755
        %v2757 = vpop.f32.mrb[0].mxu0
        %2758 = vmatprep.mubr.bf16.mxu0 0
        %2759 = vmatmul.mubr.bf16.gmra.mrb[0].mxu0 %v1448
        %v2760 = vpop.f32.mrb[0].mxu0
        %v2761 = vadd.f32 %v2600, %v2760
        %v2762 = vpop.f32.mrb[0].mxu0
        %v2763 = vpop.f32.mrb[0].mxu0
        %v2764 = vadd.f32 %v2603, %v2763
        %v2765 = vpop.f32.mrb[0].mxu0
        %2766 = vmatprep.mubr.bf16.mxu0 0
        %2767 = vmatmul.mubr.bf16.gmra.mrb[0].mxu0 %v1449
        %v2768 = vpop.f32.mrb[0].mxu0
        %v2769 = vadd.f32 %v2608, %v2768
        %v2770 = vpop.f32.mrb[0].mxu0
        %v2771 = vpop.f32.mrb[0].mxu0
        %v2772 = vadd.f32 %v2611, %v2771
        %v2773 = vpop.f32.mrb[0].mxu0
        %2774 = vmatprep.mubr.bf16.mxu0 0
        %2775 = vmatmul.mubr.bf16.gmra.mrb[0].mxu0 %v1450
        %v2776 = vpop.f32.mrb[0].mxu0
        %v2777 = vadd.f32 %v2616, %v2776
        %v2778 = vpop.f32.mrb[0].mxu0
        %v2779 = vpop.f32.mrb[0].mxu0
        %v2780 = vadd.f32 %v2619, %v2779
        %v2781 = vpop.f32.mrb[0].mxu0
        %2782 = vmatprep.mubr.bf16.mxu0 0
        %2783 = vmatmul.mubr.bf16.gmra.mrb[0].mxu0 %v1451
        %v2784 = vpop.f32.mrb[0].mxu0
        %v2785 = vadd.f32 %v2624, %v2784
        %v2786 = vpop.f32.mrb[0].mxu0
        %v2787 = vpop.f32.mrb[0].mxu0
        %v2788 = vadd.f32 %v2627, %v2787
        %v2789 = vpop.f32.mrb[0].mxu0
        %2790 = vmatprep.mubr.bf16.mxu0 0
        %2791 = vmatmul.mubr.bf16.gmra.mrb[0].mxu0 %v1452
        %v2792 = vpop.f32.mrb[0].mxu0
        %v2793 = vadd.f32 %v2632, %v2792
        %v2794 = vpop.f32.mrb[0].mxu0
        %v2795 = vpop.f32.mrb[0].mxu0
        %v2796 = vadd.f32 %v2635, %v2795
        %v2797 = vpop.f32.mrb[0].mxu0
        %2798 = vmatprep.mubr.bf16.mxu0 0
        %2799 = vmatmul.mubr.bf16.gmra.mrb[0].mxu0 %v1453
        %v2800 = vpop.f32.mrb[0].mxu0
        %v2801 = vadd.f32 %v2640, %v2800
        %v2802 = vpop.f32.mrb[0].mxu0
        %v2803 = vpop.f32.mrb[0].mxu0
        %v2804 = vadd.f32 %v2643, %v2803
        %v2805 = vpop.f32.mrb[0].mxu0
        %2806 = vmatprep.mubr.bf16.mxu0 0
        %2807 = vmatmul.mubr.bf16.gmra.mrb[0].mxu0 %v1454
        %v2808 = vpop.f32.mrb[0].mxu0
        %v2809 = vadd.f32 %v2648, %v2808
        %v2810 = vpop.f32.mrb[0].mxu0
        %v2811 = vpop.f32.mrb[0].mxu0
        %v2812 = vadd.f32 %v2651, %v2811
        %v2813 = vpop.f32.mrb[0].mxu0
        %2814 = vmatprep.mubr.bf16.mxu0 0
        %2815 = vmatmul.mubr.bf16.gmra.mrb[0].mxu0 %v1455
        %v2816 = vpop.f32.mrb[0].mxu0
        %v2817 = vadd.f32 %v2656, %v2816
        %v2818 = vpop.f32.mrb[0].mxu0
        %v2819 = vpop.f32.mrb[0].mxu0
        %v2820 = vadd.f32 %v2659, %v2819
        %v2821 = vpop.f32.mrb[0].mxu0
        %2822 = vmatprep.mubr.bf16.mxu0 0
        %2823 = vmatmul.mubr.bf16.gmra.mrb[0].mxu0 %v1456
        %v2824 = vpop.f32.mrb[0].mxu0
        %v2825 = vadd.f32 %v2664, %v2824
        %v2826 = vpop.f32.mrb[0].mxu0
        %v2827 = vpop.f32.mrb[0].mxu0
        %v2828 = vadd.f32 %v2667, %v2827
        %v2829 = vpop.f32.mrb[0].mxu0
        %2830 = vmatprep.mubr.bf16.mxu0 0
        %2831 = vmatmul.mubr.bf16.gmra.mrb[0].mxu0 %v1457
        %v2832 = vpop.f32.mrb[0].mxu0
        %v2833 = vadd.f32 %v2672, %v2832
        %v2834 = vpop.f32.mrb[0].mxu0
        %v2835 = vpop.f32.mrb[0].mxu0
        %v2836 = vadd.f32 %v2675, %v2835
        %v2837 = vpop.f32.mrb[0].mxu0
        %2838 = vmatprep.mubr.bf16.mxu0 0
        %2839 = vmatmul.mubr.bf16.gmra.mrb[0].mxu0 %v1458
        %v2840 = vpop.f32.mrb[0].mxu0
        %v2841 = vadd.f32 %v2680, %v2840
        %v2842 = vpop.f32.mrb[0].mxu0
        %v2843 = vpop.f32.mrb[0].mxu0
        %v2844 = vadd.f32 %v2683, %v2843
        %v2845 = vpop.f32.mrb[0].mxu0
        %2846 = vdwg.mxu0
        %v2847 = vmax.f32 %v2721, 0.0
        %v2848 = vmax.f32 %v2724, 0.0
        %v2849 = vmax.f32 %v2729, 0.0
        %v2850 = vmax.f32 %v2732, 0.0
        %v2851 = vmax.f32 %v2737, 0.0
        %v2852 = vmax.f32 %v2740, 0.0
        %v2853 = vmax.f32 %v2745, 0.0
        %v2854 = vmax.f32 %v2748, 0.0
        %v2855 = vmax.f32 %v2753, 0.0
        %v2856 = vmax.f32 %v2756, 0.0
        %v2857 = vmax.f32 %v2761, 0.0
        %v2858 = vmax.f32 %v2764, 0.0
        %v2859 = vmax.f32 %v2769, 0.0
        %v2860 = vmax.f32 %v2772, 0.0
        %v2861 = vmax.f32 %v2777, 0.0
        %v2862 = vmax.f32 %v2780, 0.0
        %v2863 = vmax.f32 %v2785, 0.0
        %v2864 = vmax.f32 %v2788, 0.0
        %v2865 = vmax.f32 %v2793, 0.0
        %v2866 = vmax.f32 %v2796, 0.0
        %v2867 = vmax.f32 %v2801, 0.0
        %v2868 = vmax.f32 %v2804, 0.0
        %v2869 = vmax.f32 %v2809, 0.0
        %v2870 = vmax.f32 %v2812, 0.0
        %v2871 = vmax.f32 %v2817, 0.0
        %v2872 = vmax.f32 %v2820, 0.0
        %v2873 = vmax.f32 %v2825, 0.0
        %v2874 = vmax.f32 %v2828, 0.0
        %v2875 = vmax.f32 %v2833, 0.0
        %v2876 = vmax.f32 %v2836, 0.0
        %v2877 = vmax.f32 %v2841, 0.0
        %v2878 = vmax.f32 %v2844, 0.0
        %v2879 = vpack.c.bf16 %v2848, %v2847
        %v2880 = vpack.c.bf16 %v2850, %v2849
        %v2881 = vpack.c.bf16 %v2852, %v2851
        %v2882 = vpack.c.bf16 %v2854, %v2853
        %v2883 = vpack.c.bf16 %v2856, %v2855
        %v2884 = vpack.c.bf16 %v2858, %v2857
        %v2885 = vpack.c.bf16 %v2860, %v2859
        %v2886 = vpack.c.bf16 %v2862, %v2861
        %v2887 = vpack.c.bf16 %v2864, %v2863
        %v2888 = vpack.c.bf16 %v2866, %v2865
        %v2889 = vpack.c.bf16 %v2868, %v2867
        %v2890 = vpack.c.bf16 %v2870, %v2869
        %v2891 = vpack.c.bf16 %v2872, %v2871
        %v2892 = vpack.c.bf16 %v2874, %v2873
        %v2893 = vpack.c.bf16 %v2876, %v2875
        %v2894 = vpack.c.bf16 %v2878, %v2877
        %v2895 = vld [vmem:[#allocation9] sm:$0xf]
        %v2896 = vld [vmem:[#allocation9 + $0x4] sm:$0xf]
        %v2897 = vld [vmem:[#allocation9 + $0x8] sm:$0xf]
        %v2898 = vld [vmem:[#allocation9 + $0xc] sm:$0xf]
        %v2899 = vld [vmem:[#allocation9 + $0x10] sm:$0xf]
        %v2900 = vld [vmem:[#allocation9 + $0x14] sm:$0xf]
        %v2901 = vld [vmem:[#allocation9 + $0x18] sm:$0xf]
        %v2902 = vld [vmem:[#allocation9 + $0x1c] sm:$0xf]
        %v2903 = vld [vmem:[#allocation9 + $0x20] sm:$0xf]
        %v2904 = vld [vmem:[#allocation9 + $0x24] sm:$0xf]
        %v2905 = vld [vmem:[#allocation9 + $0x28] sm:$0xf]
        %v2906 = vld [vmem:[#allocation9 + $0x2c] sm:$0xf]
        %v2907 = vld [vmem:[#allocation9 + $0x30] sm:$0xf]
        %v2908 = vld [vmem:[#allocation9 + $0x34] sm:$0xf]
        %v2909 = vld [vmem:[#allocation9 + $0x38] sm:$0xf]
        %v2910 = vld [vmem:[#allocation9 + $0x3c] sm:$0xf]
        %v2911 = vld [vmem:[%s6] sm:$0x1]
        %v2913 = vlaneseq
        %v2914 = vshrl.u32 %v2913, 7
        %v2915 = vsub.s32 0, %v2914
        %v2916 = vrot.slane %v2911, %v2915
        %v2934 = vunpack.c.l.b16 %v2895
        %v2935 = vunpack.c.l.b16 %v2896
        %v2936 = vunpack.c.l.b16 %v2897
        %v2937 = vunpack.c.l.b16 %v2898
        %v2938 = vunpack.c.l.b16 %v2899
        %v2939 = vunpack.c.l.b16 %v2900
        %v2940 = vunpack.c.l.b16 %v2901
        %v2941 = vunpack.c.l.b16 %v2902
        %v2942 = vunpack.c.l.b16 %v2903
        %v2943 = vunpack.c.l.b16 %v2904
        %v2944 = vunpack.c.l.b16 %v2905
        %v2945 = vunpack.c.l.b16 %v2906
        %v2946 = vunpack.c.l.b16 %v2907
        %v2947 = vunpack.c.l.b16 %v2908
        %v2948 = vunpack.c.l.b16 %v2909
        %v2949 = vunpack.c.l.b16 %v2910
        %v2950 = vpack.c.b16 %v2935, %v2934
        %v2951 = vpack.c.b16 %v2937, %v2936
        %v2952 = vpack.c.b16 %v2939, %v2938
        %v2953 = vpack.c.b16 %v2941, %v2940
        %v2954 = vpack.c.b16 %v2943, %v2942
        %v2955 = vpack.c.b16 %v2945, %v2944
        %v2956 = vpack.c.b16 %v2947, %v2946
        %v2957 = vpack.c.b16 %v2949, %v2948
        %2966 = vmatprep.subr.bf16.mxu0 0
        %2967 = vmatpush1.bf16.msra.mxu0 %v2950
        %2968 = vmatprep.subr.bf16.mxu0 0
        %2969 = vmatpush1.bf16.msra.mxu0 %v2951
        %2970 = vmatprep.subr.bf16.mxu0 0
        %2971 = vmatpush1.bf16.msra.mxu0 %v2952
        %2972 = vmatprep.subr.bf16.mxu0 0
        %2973 = vmatpush1.bf16.msra.mxu0 %v2953
        %2974 = vmatprep.subr.bf16.mxu0 0
        %2975 = vmatpush1.bf16.msra.mxu0 %v2954
        %2976 = vmatprep.subr.bf16.mxu0 0
        %2977 = vmatpush1.bf16.msra.mxu0 %v2955
        %2978 = vmatprep.subr.bf16.mxu0 0
        %2979 = vmatpush1.bf16.msra.mxu0 %v2956
        %2980 = vmatprep.subr.bf16.mxu0 0
        %2981 = vmatpush1.bf16.msra.mxu0 %v2957
        %2982 = vmatprep.subr.bf16.mxu0 0
        %2983 = vmatpush1.bf16.msra.mxu0 0
        %2984 = vmatprep.subr.bf16.mxu0 0
        %2985 = vmatpush1.bf16.msra.mxu0 0
        %2986 = vmatprep.subr.bf16.mxu0 0
        %2987 = vmatpush1.bf16.msra.mxu0 0
        %2988 = vmatprep.subr.bf16.mxu0 0
        %2989 = vmatpush1.bf16.msra.mxu0 0
        %2990 = vmatprep.subr.bf16.mxu0 0
        %2991 = vmatpush1.bf16.msra.mxu0 0
        %2992 = vmatprep.subr.bf16.mxu0 0
        %2993 = vmatpush1.bf16.msra.mxu0 0
        %2994 = vmatprep.subr.bf16.mxu0 0
        %2995 = vmatpush1.bf16.msra.mxu0 0
        %2996 = vmatprep.subr.bf16.mxu0 0
        %2997 = vmatpush1.bf16.msra.mxu0 0
        %2998 = vmatprep.mubr.bf16.mxu0 0
        %2999 = vmatmul.mubr.bf16.gmra.mrb[0].mxu0 %v2879
        %v3000 = vpop.f32.mrb[0].mxu0
        %v3001 = vadd.f32 %v2916, %v3000
        %v3002 = vpop.f32.mrb[0].mxu0
        %v3003 = vpop.f32.mrb[0].mxu0
        %v3004 = vadd.f32 %v2916, %v3003
        %v3005 = vpop.f32.mrb[0].mxu0
        %3006 = vmatprep.mubr.bf16.mxu0 0
        %3007 = vmatmul.mubr.bf16.gmra.mrb[0].mxu0 %v2880
        %v3008 = vpop.f32.mrb[0].mxu0
        %v3009 = vadd.f32 %v2916, %v3008
        %v3010 = vpop.f32.mrb[0].mxu0
        %v3011 = vpop.f32.mrb[0].mxu0
        %v3012 = vadd.f32 %v2916, %v3011
        %v3013 = vpop.f32.mrb[0].mxu0
        %3014 = vmatprep.mubr.bf16.mxu0 0
        %3015 = vmatmul.mubr.bf16.gmra.mrb[0].mxu0 %v2881
        %v3016 = vpop.f32.mrb[0].mxu0
        %v3017 = vadd.f32 %v2916, %v3016
        %v3018 = vpop.f32.mrb[0].mxu0
        %v3019 = vpop.f32.mrb[0].mxu0
        %v3020 = vadd.f32 %v2916, %v3019
        %v3021 = vpop.f32.mrb[0].mxu0
        %3022 = vmatprep.mubr.bf16.mxu0 0
        %3023 = vmatmul.mubr.bf16.gmra.mrb[0].mxu0 %v2882
        %v3024 = vpop.f32.mrb[0].mxu0
        %v3025 = vadd.f32 %v2916, %v3024
        %v3026 = vpop.f32.mrb[0].mxu0
        %v3027 = vpop.f32.mrb[0].mxu0
        %v3028 = vadd.f32 %v2916, %v3027
        %v3029 = vpop.f32.mrb[0].mxu0
        %3030 = vmatprep.mubr.bf16.mxu0 0
        %3031 = vmatmul.mubr.bf16.gmra.mrb[0].mxu0 %v2883
        %v3032 = vpop.f32.mrb[0].mxu0
        %v3033 = vadd.f32 %v2916, %v3032
        %v3034 = vpop.f32.mrb[0].mxu0
        %v3035 = vpop.f32.mrb[0].mxu0
        %v3036 = vadd.f32 %v2916, %v3035
        %v3037 = vpop.f32.mrb[0].mxu0
        %3038 = vmatprep.mubr.bf16.mxu0 0
        %3039 = vmatmul.mubr.bf16.gmra.mrb[0].mxu0 %v2884
        %v3040 = vpop.f32.mrb[0].mxu0
        %v3041 = vadd.f32 %v2916, %v3040
        %v3042 = vpop.f32.mrb[0].mxu0
        %v3043 = vpop.f32.mrb[0].mxu0
        %v3044 = vadd.f32 %v2916, %v3043
        %v3045 = vpop.f32.mrb[0].mxu0
        %3046 = vmatprep.mubr.bf16.mxu0 0
        %3047 = vmatmul.mubr.bf16.gmra.mrb[0].mxu0 %v2885
        %v3048 = vpop.f32.mrb[0].mxu0
        %v3049 = vadd.f32 %v2916, %v3048
        %v3050 = vpop.f32.mrb[0].mxu0
        %v3051 = vpop.f32.mrb[0].mxu0
        %v3052 = vadd.f32 %v2916, %v3051
        %v3053 = vpop.f32.mrb[0].mxu0
        %3054 = vmatprep.mubr.bf16.mxu0 0
        %3055 = vmatmul.mubr.bf16.gmra.mrb[0].mxu0 %v2886
        %v3056 = vpop.f32.mrb[0].mxu0
        %v3057 = vadd.f32 %v2916, %v3056
        %v3058 = vpop.f32.mrb[0].mxu0
        %v3059 = vpop.f32.mrb[0].mxu0
        %v3060 = vadd.f32 %v2916, %v3059
        %v3061 = vpop.f32.mrb[0].mxu0
        %3062 = vmatprep.mubr.bf16.mxu0 0
        %3063 = vmatmul.mubr.bf16.gmra.mrb[0].mxu0 %v2887
        %v3064 = vpop.f32.mrb[0].mxu0
        %v3065 = vadd.f32 %v2916, %v3064
        %v3066 = vpop.f32.mrb[0].mxu0
        %v3067 = vpop.f32.mrb[0].mxu0
        %v3068 = vadd.f32 %v2916, %v3067
        %v3069 = vpop.f32.mrb[0].mxu0
        %3070 = vmatprep.mubr.bf16.mxu0 0
        %3071 = vmatmul.mubr.bf16.gmra.mrb[0].mxu0 %v2888
        %v3072 = vpop.f32.mrb[0].mxu0
        %v3073 = vadd.f32 %v2916, %v3072
        %v3074 = vpop.f32.mrb[0].mxu0
        %v3075 = vpop.f32.mrb[0].mxu0
        %v3076 = vadd.f32 %v2916, %v3075
        %v3077 = vpop.f32.mrb[0].mxu0
        %3078 = vmatprep.mubr.bf16.mxu0 0
        %3079 = vmatmul.mubr.bf16.gmra.mrb[0].mxu0 %v2889
        %v3080 = vpop.f32.mrb[0].mxu0
        %v3081 = vadd.f32 %v2916, %v3080
        %v3082 = vpop.f32.mrb[0].mxu0
        %v3083 = vpop.f32.mrb[0].mxu0
        %v3084 = vadd.f32 %v2916, %v3083
        %v3085 = vpop.f32.mrb[0].mxu0
        %3086 = vmatprep.mubr.bf16.mxu0 0
        %3087 = vmatmul.mubr.bf16.gmra.mrb[0].mxu0 %v2890
        %v3088 = vpop.f32.mrb[0].mxu0
        %v3089 = vadd.f32 %v2916, %v3088
        %v3090 = vpop.f32.mrb[0].mxu0
        %v3091 = vpop.f32.mrb[0].mxu0
        %v3092 = vadd.f32 %v2916, %v3091
        %v3093 = vpop.f32.mrb[0].mxu0
        %3094 = vmatprep.mubr.bf16.mxu0 0
        %3095 = vmatmul.mubr.bf16.gmra.mrb[0].mxu0 %v2891
        %v3096 = vpop.f32.mrb[0].mxu0
        %v3097 = vadd.f32 %v2916, %v3096
        %v3098 = vpop.f32.mrb[0].mxu0
        %v3099 = vpop.f32.mrb[0].mxu0
        %v3100 = vadd.f32 %v2916, %v3099
        %v3101 = vpop.f32.mrb[0].mxu0
        %3102 = vmatprep.mubr.bf16.mxu0 0
        %3103 = vmatmul.mubr.bf16.gmra.mrb[0].mxu0 %v2892
        %v3104 = vpop.f32.mrb[0].mxu0
        %v3105 = vadd.f32 %v2916, %v3104
        %v3106 = vpop.f32.mrb[0].mxu0
        %v3107 = vpop.f32.mrb[0].mxu0
        %v3108 = vadd.f32 %v2916, %v3107
        %v3109 = vpop.f32.mrb[0].mxu0
        %3110 = vmatprep.mubr.bf16.mxu0 0
        %3111 = vmatmul.mubr.bf16.gmra.mrb[0].mxu0 %v2893
        %v3112 = vpop.f32.mrb[0].mxu0
        %v3113 = vadd.f32 %v2916, %v3112
        %v3114 = vpop.f32.mrb[0].mxu0
        %v3115 = vpop.f32.mrb[0].mxu0
        %v3116 = vadd.f32 %v2916, %v3115
        %v3117 = vpop.f32.mrb[0].mxu0
        %3118 = vmatprep.mubr.bf16.mxu0 0
        %3119 = vmatmul.mubr.bf16.gmra.mrb[0].mxu0 %v2894
        %v3120 = vpop.f32.mrb[0].mxu0
        %v3121 = vadd.f32 %v2916, %v3120
        %v3122 = vpop.f32.mrb[0].mxu0
        %v3123 = vpop.f32.mrb[0].mxu0
        %v3124 = vadd.f32 %v2916, %v3123
        %v3125 = vpop.f32.mrb[0].mxu0
        %3126 = vdwg.mxu0
        %v3127 = vmax.f32 %v3001, %v3017
        %v3128 = vmax.f32 %v3004, %v3020
        %v3129 = vmax.f32 %v3009, %v3025
        %v3130 = vmax.f32 %v3012, %v3028
        %v3131 = vmax.f32 %v3127, %v3033
        %v3132 = vmax.f32 %v3128, %v3036
        %v3133 = vmax.f32 %v3129, %v3041
        %v3134 = vmax.f32 %v3130, %v3044
        %v3135 = vmax.f32 %v3131, %v3049
        %v3136 = vmax.f32 %v3132, %v3052
        %v3137 = vmax.f32 %v3133, %v3057
        %v3138 = vmax.f32 %v3134, %v3060
        %v3139 = vmax.f32 %v3135, %v3065
        %v3140 = vmax.f32 %v3136, %v3068
        %v3141 = vmax.f32 %v3137, %v3073
        %v3142 = vmax.f32 %v3138, %v3076
        %v3143 = vmax.f32 %v3139, %v3081
        %v3144 = vmax.f32 %v3140, %v3084
        %v3145 = vmax.f32 %v3141, %v3089
        %v3146 = vmax.f32 %v3142, %v3092
        %v3147 = vmax.f32 %v3143, %v3097
        %v3148 = vmax.f32 %v3144, %v3100
        %v3149 = vmax.f32 %v3145, %v3105
        %v3150 = vmax.f32 %v3146, %v3108
        %v3151 = vmax.f32 %v3147, %v3113
        %v3152 = vmax.f32 %v3148, %v3116
        %v3153 = vmax.f32 %v3149, %v3121
        %v3154 = vmax.f32 %v3150, %v3124
        %v3155 = vmax.f32 %v3151, %v3152
        %v3156 = vmax.f32 %v3153, %v3154
        %v3157 = vmax.f32 %v3155, %v3156
        %v3158 = vrot.slane %v3157, 4
        %v3159 = vmax.f32 %v3157, %v3158
        %v3160 = vrot.slane %v3159, 2
        %v3161 = vmax.f32 %v3159, %v3160
        %v3162 = vrot.slane %v3161, 1
        %v3163 = vmax.f32 %v3161, %v3162
        %v3164 = vld [vmem:[#allocation11] sm:$0xff]
        %v3165 = vld [vmem:[#allocation11 + $0x8] sm:$0xff]
        %v3166 = vld [vmem:[#allocation11 + $0x10] sm:$0xff]
        %v3167 = vld [vmem:[#allocation11 + $0x18] sm:$0xff]
        %v3168 = vld [vmem:[#allocation11 + $0x20] sm:$0xff]
        %v3169 = vld [vmem:[#allocation11 + $0x28] sm:$0xff]
        %v3170 = vld [vmem:[#allocation11 + $0x30] sm:$0xff]
        %v3171 = vld [vmem:[#allocation11 + $0x38] sm:$0xff]
        %v3172 = vld [vmem:[#allocation11 + $0x40] sm:$0xff]
        %v3173 = vld [vmem:[#allocation11 + $0x48] sm:$0xff]
        %v3174 = vld [vmem:[#allocation11 + $0x50] sm:$0xff]
        %v3175 = vld [vmem:[#allocation11 + $0x58] sm:$0xff]
        %v3176 = vld [vmem:[#allocation11 + $0x60] sm:$0xff]
        %v3177 = vld [vmem:[#allocation11 + $0x68] sm:$0xff]
        %v3178 = vld [vmem:[#allocation11 + $0x70] sm:$0xff]
        %v3179 = vld [vmem:[#allocation11 + $0x78] sm:$0xff]
        %v3180 = vld [vmem:[%s8] sm:$0x1]
        %3181 = vmatprep.subr.mxu0 0.0
        %3182 = vmatpush1.msra.mxu0 %v3164
        %3183 = vmatprep.subr.mxu0 0.0
        %3184 = vmatpush1.msra.mxu0 %v3165
        %3185 = vmatprep.subr.mxu0 0.0
        %3186 = vmatpush1.msra.mxu0 %v3166
        %3187 = vmatprep.subr.mxu0 0.0
        %3188 = vmatpush1.msra.mxu0 %v3167
        %3189 = vmatprep.subr.mxu0 0.0
        %3190 = vmatpush1.msra.mxu0 %v3168
        %3191 = vmatprep.subr.mxu0 0.0
        %3192 = vmatpush1.msra.mxu0 %v3169
        %3193 = vmatprep.subr.mxu0 0.0
        %3194 = vmatpush1.msra.mxu0 %v3170
        %3195 = vmatprep.subr.mxu0 0.0
        %3196 = vmatpush1.msra.mxu0 %v3171
        %3197 = vmatprep.subr.mxu0 0.0
        %3198 = vmatpush1.msra.mxu0 %v3172
        %3199 = vmatprep.subr.mxu0 0.0
        %3200 = vmatpush1.msra.mxu0 %v3173
        %3201 = vmatprep.subr.mxu0 0.0
        %3202 = vmatpush1.msra.mxu0 %v3174
        %3203 = vmatprep.subr.mxu0 0.0
        %3204 = vmatpush1.msra.mxu0 %v3175
        %3205 = vmatprep.subr.mxu0 0.0
        %3206 = vmatpush1.msra.mxu0 %v3176
        %3207 = vmatprep.subr.mxu0 0.0
        %3208 = vmatpush1.msra.mxu0 %v3177
        %3209 = vmatprep.subr.mxu0 0.0
        %3210 = vmatpush1.msra.mxu0 %v3178
        %3211 = vmatprep.subr.mxu0 0.0
        %3212 = vmatpush1.msra.mxu0 %v3179
        %3213 = vmatprep.subr.mxu0 0.0
        %3214 = vmatpush1.msra.mxu0 0.0
        %3215 = vmatprep.subr.mxu0 0.0
        %3216 = vmatpush1.msra.mxu0 0.0
        %3217 = vmatprep.subr.mxu0 0.0
        %3218 = vmatpush1.msra.mxu0 0.0
        %3219 = vmatprep.subr.mxu0 0.0
        %3220 = vmatpush1.msra.mxu0 0.0
        %3221 = vmatprep.subr.mxu0 0.0
        %3222 = vmatpush1.msra.mxu0 0.0
        %3223 = vmatprep.subr.mxu0 0.0
        %3224 = vmatpush1.msra.mxu0 0.0
        %3225 = vmatprep.subr.mxu0 0.0
        %3226 = vmatpush1.msra.mxu0 0.0
        %3227 = vmatprep.subr.mxu0 0.0
        %3228 = vmatpush1.msra.mxu0 0.0
        %3229 = vmatprep.subr.mxu0 0.0
        %3230 = vmatpush1.msra.mxu0 0.0
        %3231 = vmatprep.subr.mxu0 0.0
        %3232 = vmatpush1.msra.mxu0 0.0
        %3233 = vmatprep.subr.mxu0 0.0
        %3234 = vmatpush1.msra.mxu0 0.0
        %3235 = vmatprep.subr.mxu0 0.0
        %3236 = vmatpush1.msra.mxu0 0.0
        %3237 = vmatprep.subr.mxu0 0.0
        %3238 = vmatpush1.msra.mxu0 0.0
        %3239 = vmatprep.subr.mxu0 0.0
        %3240 = vmatpush1.msra.mxu0 0.0
        %3241 = vmatprep.subr.mxu0 0.0
        %3242 = vmatpush1.msra.mxu0 0.0
        %3243 = vmatprep.subr.mxu0 0.0
        %3244 = vmatpush1.msra.mxu0 0.0
        %3245 = vmatprep.mubr.f32.mxu0 0.0
        %3246 = vmatmul.mubr.f32.gmra.mrb[0].mxu0 %v3163
        %v3247 = vpop.f32.mrb[0].mxu0
        %v3248 = vadd.f32 %v3180, %v3247
        %v3249 = vpop.f32.mrb[0].mxu0
        %3250 = vdwg.mxu0
        %v3251 = vmax.f32 %v3248, 0.0
        %v3252 = vld [vmem:[#allocation12] sm:$0xff]
        %v3253 = vld [vmem:[#allocation12 + $0x8] sm:$0xff]
        %v3254 = vld [vmem:[#allocation12 + $0x10] sm:$0xff]
        %v3255 = vld [vmem:[#allocation12 + $0x18] sm:$0xff]
        %v3256 = vld [vmem:[#allocation12 + $0x20] sm:$0xff]
        %v3257 = vld [vmem:[#allocation12 + $0x28] sm:$0xff]
        %v3258 = vld [vmem:[#allocation12 + $0x30] sm:$0xff]
        %v3259 = vld [vmem:[#allocation12 + $0x38] sm:$0xff]
        %v3260 = vld [vmem:[#allocation12 + $0x40] sm:$0xff]
        %v3261 = vld [vmem:[#allocation12 + $0x48] sm:$0xff]
        %v3262 = vld [vmem:[#allocation12 + $0x50] sm:$0xff]
        %v3263 = vld [vmem:[#allocation12 + $0x58] sm:$0xff]
        %v3264 = vld [vmem:[#allocation12 + $0x60] sm:$0xff]
        %v3265 = vld [vmem:[#allocation12 + $0x68] sm:$0xff]
        %v3266 = vld [vmem:[#allocation12 + $0x70] sm:$0xff]
        %v3267 = vld [vmem:[#allocation12 + $0x78] sm:$0xff]
        %v3268 = vld [vmem:[%s10] sm:$0x1]
        %3269 = vmatprep.subr.mxu0 0.0
        %3270 = vmatpush1.msra.mxu0 %v3252
        %3271 = vmatprep.subr.mxu0 0.0
        %3272 = vmatpush1.msra.mxu0 %v3253
        %3273 = vmatprep.subr.mxu0 0.0
        %3274 = vmatpush1.msra.mxu0 %v3254
        %3275 = vmatprep.subr.mxu0 0.0
        %3276 = vmatpush1.msra.mxu0 %v3255
        %3277 = vmatprep.subr.mxu0 0.0
        %3278 = vmatpush1.msra.mxu0 %v3256
        %3279 = vmatprep.subr.mxu0 0.0
        %3280 = vmatpush1.msra.mxu0 %v3257
        %3281 = vmatprep.subr.mxu0 0.0
        %3282 = vmatpush1.msra.mxu0 %v3258
        %3283 = vmatprep.subr.mxu0 0.0
        %3284 = vmatpush1.msra.mxu0 %v3259
        %3285 = vmatprep.subr.mxu0 0.0
        %3286 = vmatpush1.msra.mxu0 %v3260
        %3287 = vmatprep.subr.mxu0 0.0
        %3288 = vmatpush1.msra.mxu0 %v3261
        %3289 = vmatprep.subr.mxu0 0.0
        %3290 = vmatpush1.msra.mxu0 %v3262
        %3291 = vmatprep.subr.mxu0 0.0
        %3292 = vmatpush1.msra.mxu0 %v3263
        %3293 = vmatprep.subr.mxu0 0.0
        %3294 = vmatpush1.msra.mxu0 %v3264
        %3295 = vmatprep.subr.mxu0 0.0
        %3296 = vmatpush1.msra.mxu0 %v3265
        %3297 = vmatprep.subr.mxu0 0.0
        %3298 = vmatpush1.msra.mxu0 %v3266
        %3299 = vmatprep.subr.mxu0 0.0
        %3300 = vmatpush1.msra.mxu0 %v3267
        %3301 = vmatprep.subr.mxu0 0.0
        %3302 = vmatpush1.msra.mxu0 0.0
        %3303 = vmatprep.subr.mxu0 0.0
        %3304 = vmatpush1.msra.mxu0 0.0
        %3305 = vmatprep.subr.mxu0 0.0
        %3306 = vmatpush1.msra.mxu0 0.0
        %3307 = vmatprep.subr.mxu0 0.0
        %3308 = vmatpush1.msra.mxu0 0.0
        %3309 = vmatprep.subr.mxu0 0.0
        %3310 = vmatpush1.msra.mxu0 0.0
        %3311 = vmatprep.subr.mxu0 0.0
        %3312 = vmatpush1.msra.mxu0 0.0
        %3313 = vmatprep.subr.mxu0 0.0
        %3314 = vmatpush1.msra.mxu0 0.0
        %3315 = vmatprep.subr.mxu0 0.0
        %3316 = vmatpush1.msra.mxu0 0.0
        %3317 = vmatprep.subr.mxu0 0.0
        %3318 = vmatpush1.msra.mxu0 0.0
        %3319 = vmatprep.subr.mxu0 0.0
        %3320 = vmatpush1.msra.mxu0 0.0
        %3321 = vmatprep.subr.mxu0 0.0
        %3322 = vmatpush1.msra.mxu0 0.0
        %3323 = vmatprep.subr.mxu0 0.0
        %3324 = vmatpush1.msra.mxu0 0.0
        %3325 = vmatprep.subr.mxu0 0.0
        %3326 = vmatpush1.msra.mxu0 0.0
        %3327 = vmatprep.subr.mxu0 0.0
        %3328 = vmatpush1.msra.mxu0 0.0
        %3329 = vmatprep.subr.mxu0 0.0
        %3330 = vmatpush1.msra.mxu0 0.0
        %3331 = vmatprep.subr.mxu0 0.0
        %3332 = vmatpush1.msra.mxu0 0.0
        %3333 = vmatprep.mubr.f32.mxu0 0.0
        %3334 = vmatmul.mubr.f32.gmra.mrb[0].mxu0 %v3251
        %v3335 = vpop.f32.mrb[0].mxu0
        %v3336 = vadd.f32 %v3268, %v3335
        %v3337 = vpop.f32.mrb[0].mxu0
        %3338 = vdwg.mxu0
        %v3339 = vxor.u32 %v3336, 2147483648
        %v3340 = vmul.f32 %v3339, 1.442695
        %v3341 = vpow.pop %v3340
        %v3342 = vadd.f32 %v3341, 1.0
        %v3343 = vrcp.pop %v3342
        %v3344 = vmul.f32 1.0, %v3343
        %v3345 = vld [vmem:[#allocation14] sm:$0xf]
        %v3346 = vld [vmem:[#allocation14 + $0x4] sm:$0xf]
        %v3347 = vld [vmem:[#allocation14 + $0x8] sm:$0xf]
        %v3348 = vld [vmem:[#allocation14 + $0xc] sm:$0xf]
        %v3349 = vld [vmem:[#allocation14 + $0x10] sm:$0xf]
        %v3350 = vld [vmem:[#allocation14 + $0x14] sm:$0xf]
        %v3351 = vld [vmem:[#allocation14 + $0x18] sm:$0xf]
        %v3352 = vld [vmem:[#allocation14 + $0x1c] sm:$0xf]
        %v3353 = vld [vmem:[#allocation14 + $0x20] sm:$0xf]
        %v3354 = vld [vmem:[#allocation14 + $0x24] sm:$0xf]
        %v3355 = vld [vmem:[#allocation14 + $0x28] sm:$0xf]
        %v3356 = vld [vmem:[#allocation14 + $0x2c] sm:$0xf]
        %v3357 = vld [vmem:[#allocation14 + $0x30] sm:$0xf]
        %v3358 = vld [vmem:[#allocation14 + $0x34] sm:$0xf]
        %v3359 = vld [vmem:[#allocation14 + $0x38] sm:$0xf]
        %v3360 = vld [vmem:[#allocation14 + $0x3c] sm:$0xf]
        %v3361 = vld [vmem:[%s12] sm:$0x1]
        %v3363 = vlaneseq
        %v3364 = vshrl.u32 %v3363, 7
        %v3365 = vsub.s32 0, %v3364
        %v3366 = vrot.slane %v3361, %v3365
        %v3384 = vunpack.c.l.b16 %v3345
        %v3385 = vunpack.c.l.b16 %v3346
        %v3386 = vunpack.c.l.b16 %v3347
        %v3387 = vunpack.c.l.b16 %v3348
        %v3388 = vunpack.c.l.b16 %v3349
        %v3389 = vunpack.c.l.b16 %v3350
        %v3390 = vunpack.c.l.b16 %v3351
        %v3391 = vunpack.c.l.b16 %v3352
        %v3392 = vunpack.c.l.b16 %v3353
        %v3393 = vunpack.c.l.b16 %v3354
        %v3394 = vunpack.c.l.b16 %v3355
        %v3395 = vunpack.c.l.b16 %v3356
        %v3396 = vunpack.c.l.b16 %v3357
        %v3397 = vunpack.c.l.b16 %v3358
        %v3398 = vunpack.c.l.b16 %v3359
        %v3399 = vunpack.c.l.b16 %v3360
        %v3400 = vpack.c.b16 %v3385, %v3384
        %v3401 = vpack.c.b16 %v3387, %v3386
        %v3402 = vpack.c.b16 %v3389, %v3388
        %v3403 = vpack.c.b16 %v3391, %v3390
        %v3404 = vpack.c.b16 %v3393, %v3392
        %v3405 = vpack.c.b16 %v3395, %v3394
        %v3406 = vpack.c.b16 %v3397, %v3396
        %v3407 = vpack.c.b16 %v3399, %v3398
        %3416 = vmatprep.subr.bf16.mxu0 0
        %3417 = vmatpush1.bf16.msra.mxu0 %v3400
        %3418 = vmatprep.subr.bf16.mxu0 0
        %3419 = vmatpush1.bf16.msra.mxu0 %v3401
        %3420 = vmatprep.subr.bf16.mxu0 0
        %3421 = vmatpush1.bf16.msra.mxu0 %v3402
        %3422 = vmatprep.subr.bf16.mxu0 0
        %3423 = vmatpush1.bf16.msra.mxu0 %v3403
        %3424 = vmatprep.subr.bf16.mxu0 0
        %3425 = vmatpush1.bf16.msra.mxu0 %v3404
        %3426 = vmatprep.subr.bf16.mxu0 0
        %3427 = vmatpush1.bf16.msra.mxu0 %v3405
        %3428 = vmatprep.subr.bf16.mxu0 0
        %3429 = vmatpush1.bf16.msra.mxu0 %v3406
        %3430 = vmatprep.subr.bf16.mxu0 0
        %3431 = vmatpush1.bf16.msra.mxu0 %v3407
        %3432 = vmatprep.subr.bf16.mxu0 0
        %3433 = vmatpush1.bf16.msra.mxu0 0
        %3434 = vmatprep.subr.bf16.mxu0 0
        %3435 = vmatpush1.bf16.msra.mxu0 0
        %3436 = vmatprep.subr.bf16.mxu0 0
        %3437 = vmatpush1.bf16.msra.mxu0 0
        %3438 = vmatprep.subr.bf16.mxu0 0
        %3439 = vmatpush1.bf16.msra.mxu0 0
        %3440 = vmatprep.subr.bf16.mxu0 0
        %3441 = vmatpush1.bf16.msra.mxu0 0
        %3442 = vmatprep.subr.bf16.mxu0 0
        %3443 = vmatpush1.bf16.msra.mxu0 0
        %3444 = vmatprep.subr.bf16.mxu0 0
        %3445 = vmatpush1.bf16.msra.mxu0 0
        %3446 = vmatprep.subr.bf16.mxu0 0
        %3447 = vmatpush1.bf16.msra.mxu0 0
        %3448 = vmatprep.mubr.bf16.mxu0 0
        %3449 = vmatmul.mubr.bf16.gmra.mrb[0].mxu0 %v666
        %v3450 = vpop.f32.mrb[0].mxu0
        %v3451 = vadd.f32 %v3366, %v3450
        %v3452 = vpop.f32.mrb[0].mxu0
        %v3453 = vpop.f32.mrb[0].mxu0
        %v3454 = vadd.f32 %v3366, %v3453
        %v3455 = vpop.f32.mrb[0].mxu0
        %3456 = vmatprep.mubr.bf16.mxu0 0
        %3457 = vmatmul.mubr.bf16.gmra.mrb[0].mxu0 %v667
        %v3458 = vpop.f32.mrb[0].mxu0
        %v3459 = vadd.f32 %v3366, %v3458
        %v3460 = vpop.f32.mrb[0].mxu0
        %v3461 = vpop.f32.mrb[0].mxu0
        %v3462 = vadd.f32 %v3366, %v3461
        %v3463 = vpop.f32.mrb[0].mxu0
        %3464 = vmatprep.mubr.bf16.mxu0 0
        %3465 = vmatmul.mubr.bf16.gmra.mrb[0].mxu0 %v668
        %v3466 = vpop.f32.mrb[0].mxu0
        %v3467 = vadd.f32 %v3366, %v3466
        %v3468 = vpop.f32.mrb[0].mxu0
        %v3469 = vpop.f32.mrb[0].mxu0
        %v3470 = vadd.f32 %v3366, %v3469
        %v3471 = vpop.f32.mrb[0].mxu0
        %3472 = vmatprep.mubr.bf16.mxu0 0
        %3473 = vmatmul.mubr.bf16.gmra.mrb[0].mxu0 %v669
        %v3474 = vpop.f32.mrb[0].mxu0
        %v3475 = vadd.f32 %v3366, %v3474
        %v3476 = vpop.f32.mrb[0].mxu0
        %v3477 = vpop.f32.mrb[0].mxu0
        %v3478 = vadd.f32 %v3366, %v3477
        %v3479 = vpop.f32.mrb[0].mxu0
        %3480 = vmatprep.mubr.bf16.mxu0 0
        %3481 = vmatmul.mubr.bf16.gmra.mrb[0].mxu0 %v670
        %v3482 = vpop.f32.mrb[0].mxu0
        %v3483 = vadd.f32 %v3366, %v3482
        %v3484 = vpop.f32.mrb[0].mxu0
        %v3485 = vpop.f32.mrb[0].mxu0
        %v3486 = vadd.f32 %v3366, %v3485
        %v3487 = vpop.f32.mrb[0].mxu0
        %3488 = vmatprep.mubr.bf16.mxu0 0
        %3489 = vmatmul.mubr.bf16.gmra.mrb[0].mxu0 %v671
        %v3490 = vpop.f32.mrb[0].mxu0
        %v3491 = vadd.f32 %v3366, %v3490
        %v3492 = vpop.f32.mrb[0].mxu0
        %v3493 = vpop.f32.mrb[0].mxu0
        %v3494 = vadd.f32 %v3366, %v3493
        %v3495 = vpop.f32.mrb[0].mxu0
        %3496 = vmatprep.mubr.bf16.mxu0 0
        %3497 = vmatmul.mubr.bf16.gmra.mrb[0].mxu0 %v672
        %v3498 = vpop.f32.mrb[0].mxu0
        %v3499 = vadd.f32 %v3366, %v3498
        %v3500 = vpop.f32.mrb[0].mxu0
        %v3501 = vpop.f32.mrb[0].mxu0
        %v3502 = vadd.f32 %v3366, %v3501
        %v3503 = vpop.f32.mrb[0].mxu0
        %3504 = vmatprep.mubr.bf16.mxu0 0
        %3505 = vmatmul.mubr.bf16.gmra.mrb[0].mxu0 %v673
        %v3506 = vpop.f32.mrb[0].mxu0
        %v3507 = vadd.f32 %v3366, %v3506
        %v3508 = vpop.f32.mrb[0].mxu0
        %v3509 = vpop.f32.mrb[0].mxu0
        %v3510 = vadd.f32 %v3366, %v3509
        %v3511 = vpop.f32.mrb[0].mxu0
        %3512 = vmatprep.mubr.bf16.mxu0 0
        %3513 = vmatmul.mubr.bf16.gmra.mrb[0].mxu0 %v674
        %v3514 = vpop.f32.mrb[0].mxu0
        %v3515 = vadd.f32 %v3366, %v3514
        %v3516 = vpop.f32.mrb[0].mxu0
        %v3517 = vpop.f32.mrb[0].mxu0
        %v3518 = vadd.f32 %v3366, %v3517
        %v3519 = vpop.f32.mrb[0].mxu0
        %3520 = vmatprep.mubr.bf16.mxu0 0
        %3521 = vmatmul.mubr.bf16.gmra.mrb[0].mxu0 %v675
        %v3522 = vpop.f32.mrb[0].mxu0
        %v3523 = vadd.f32 %v3366, %v3522
        %v3524 = vpop.f32.mrb[0].mxu0
        %v3525 = vpop.f32.mrb[0].mxu0
        %v3526 = vadd.f32 %v3366, %v3525
        %v3527 = vpop.f32.mrb[0].mxu0
        %3528 = vmatprep.mubr.bf16.mxu0 0
        %3529 = vmatmul.mubr.bf16.gmra.mrb[0].mxu0 %v676
        %v3530 = vpop.f32.mrb[0].mxu0
        %v3531 = vadd.f32 %v3366, %v3530
        %v3532 = vpop.f32.mrb[0].mxu0
        %v3533 = vpop.f32.mrb[0].mxu0
        %v3534 = vadd.f32 %v3366, %v3533
        %v3535 = vpop.f32.mrb[0].mxu0
        %3536 = vmatprep.mubr.bf16.mxu0 0
        %3537 = vmatmul.mubr.bf16.gmra.mrb[0].mxu0 %v677
        %v3538 = vpop.f32.mrb[0].mxu0
        %v3539 = vadd.f32 %v3366, %v3538
        %v3540 = vpop.f32.mrb[0].mxu0
        %v3541 = vpop.f32.mrb[0].mxu0
        %v3542 = vadd.f32 %v3366, %v3541
        %v3543 = vpop.f32.mrb[0].mxu0
        %3544 = vmatprep.mubr.bf16.mxu0 0
        %3545 = vmatmul.mubr.bf16.gmra.mrb[0].mxu0 %v678
        %v3546 = vpop.f32.mrb[0].mxu0
        %v3547 = vadd.f32 %v3366, %v3546
        %v3548 = vpop.f32.mrb[0].mxu0
        %v3549 = vpop.f32.mrb[0].mxu0
        %v3550 = vadd.f32 %v3366, %v3549
        %v3551 = vpop.f32.mrb[0].mxu0
        %3552 = vmatprep.mubr.bf16.mxu0 0
        %3553 = vmatmul.mubr.bf16.gmra.mrb[0].mxu0 %v679
        %v3554 = vpop.f32.mrb[0].mxu0
        %v3555 = vadd.f32 %v3366, %v3554
        %v3556 = vpop.f32.mrb[0].mxu0
        %v3557 = vpop.f32.mrb[0].mxu0
        %v3558 = vadd.f32 %v3366, %v3557
        %v3559 = vpop.f32.mrb[0].mxu0
        %3560 = vmatprep.mubr.bf16.mxu0 0
        %3561 = vmatmul.mubr.bf16.gmra.mrb[0].mxu0 %v680
        %v3562 = vpop.f32.mrb[0].mxu0
        %v3563 = vadd.f32 %v3366, %v3562
        %v3564 = vpop.f32.mrb[0].mxu0
        %v3565 = vpop.f32.mrb[0].mxu0
        %v3566 = vadd.f32 %v3366, %v3565
        %v3567 = vpop.f32.mrb[0].mxu0
        %3568 = vmatprep.mubr.bf16.mxu0 0
        %3569 = vmatmul.mubr.bf16.gmra.mrb[0].mxu0 %v681
        %v3570 = vpop.f32.mrb[0].mxu0
        %v3571 = vadd.f32 %v3366, %v3570
        %v3572 = vpop.f32.mrb[0].mxu0
        %v3573 = vpop.f32.mrb[0].mxu0
        %v3574 = vadd.f32 %v3366, %v3573
        %v3575 = vpop.f32.mrb[0].mxu0
        %3576 = vdwg.mxu0
        %v3577 = vlaneseq
        %v3578 = vshrl.u32 %v3577, 7
        %v3579 = vsub.s32 0, %v3578
        %v3580 = vrot.slane %v3344, %v3579
        %v3581 = vmul.f32 %v3001, %v3580
        %v3582 = vmul.f32 %v3004, %v3580
        %v3583 = vmul.f32 %v3009, %v3580
        %v3584 = vmul.f32 %v3012, %v3580
        %v3585 = vmul.f32 %v3017, %v3580
        %v3586 = vmul.f32 %v3020, %v3580
        %v3587 = vmul.f32 %v3025, %v3580
        %v3588 = vmul.f32 %v3028, %v3580
        %v3589 = vmul.f32 %v3033, %v3580
        %v3590 = vmul.f32 %v3036, %v3580
        %v3591 = vmul.f32 %v3041, %v3580
        %v3592 = vmul.f32 %v3044, %v3580
        %v3593 = vmul.f32 %v3049, %v3580
        %v3594 = vmul.f32 %v3052, %v3580
        %v3595 = vmul.f32 %v3057, %v3580
        %v3596 = vmul.f32 %v3060, %v3580
        %v3597 = vmul.f32 %v3065, %v3580
        %v3598 = vmul.f32 %v3068, %v3580
        %v3599 = vmul.f32 %v3073, %v3580
        %v3600 = vmul.f32 %v3076, %v3580
        %v3601 = vmul.f32 %v3081, %v3580
        %v3602 = vmul.f32 %v3084, %v3580
        %v3603 = vmul.f32 %v3089, %v3580
        %v3604 = vmul.f32 %v3092, %v3580
        %v3605 = vmul.f32 %v3097, %v3580
        %v3606 = vmul.f32 %v3100, %v3580
        %v3607 = vmul.f32 %v3105, %v3580
        %v3608 = vmul.f32 %v3108, %v3580
        %v3609 = vmul.f32 %v3113, %v3580
        %v3610 = vmul.f32 %v3116, %v3580
        %v3611 = vmul.f32 %v3121, %v3580
        %v3612 = vmul.f32 %v3124, %v3580
        %v3613 = vadd.f32 %v3581, %v3451
        %v3614 = vadd.f32 %v3582, %v3454
        %v3615 = vadd.f32 %v3583, %v3459
        %v3616 = vadd.f32 %v3584, %v3462
        %v3617 = vadd.f32 %v3585, %v3467
        %v3618 = vadd.f32 %v3586, %v3470
        %v3619 = vadd.f32 %v3587, %v3475
        %v3620 = vadd.f32 %v3588, %v3478
        %v3621 = vadd.f32 %v3589, %v3483
        %v3622 = vadd.f32 %v3590, %v3486
        %v3623 = vadd.f32 %v3591, %v3491
        %v3624 = vadd.f32 %v3592, %v3494
        %v3625 = vadd.f32 %v3593, %v3499
        %v3626 = vadd.f32 %v3594, %v3502
        %v3627 = vadd.f32 %v3595, %v3507
        %v3628 = vadd.f32 %v3596, %v3510
        %v3629 = vadd.f32 %v3597, %v3515
        %v3630 = vadd.f32 %v3598, %v3518
        %v3631 = vadd.f32 %v3599, %v3523
        %v3632 = vadd.f32 %v3600, %v3526
        %v3633 = vadd.f32 %v3601, %v3531
        %v3634 = vadd.f32 %v3602, %v3534
        %v3635 = vadd.f32 %v3603, %v3539
        %v3636 = vadd.f32 %v3604, %v3542
        %v3637 = vadd.f32 %v3605, %v3547
        %v3638 = vadd.f32 %v3606, %v3550
        %v3639 = vadd.f32 %v3607, %v3555
        %v3640 = vadd.f32 %v3608, %v3558
        %v3641 = vadd.f32 %v3609, %v3563
        %v3642 = vadd.f32 %v3610, %v3566
        %v3643 = vadd.f32 %v3611, %v3571
        %v3644 = vadd.f32 %v3612, %v3574
        %v3645 = vmax.f32 %v3613, 0.0
        %v3646 = vmax.f32 %v3614, 0.0
        %v3647 = vmax.f32 %v3615, 0.0
        %v3648 = vmax.f32 %v3616, 0.0
        %v3649 = vmax.f32 %v3617, 0.0
        %v3650 = vmax.f32 %v3618, 0.0
        %v3651 = vmax.f32 %v3619, 0.0
        %v3652 = vmax.f32 %v3620, 0.0
        %v3653 = vmax.f32 %v3621, 0.0
        %v3654 = vmax.f32 %v3622, 0.0
        %v3655 = vmax.f32 %v3623, 0.0
        %v3656 = vmax.f32 %v3624, 0.0
        %v3657 = vmax.f32 %v3625, 0.0
        %v3658 = vmax.f32 %v3626, 0.0
        %v3659 = vmax.f32 %v3627, 0.0
        %v3660 = vmax.f32 %v3628, 0.0
        %v3661 = vmax.f32 %v3629, 0.0
        %v3662 = vmax.f32 %v3630, 0.0
        %v3663 = vmax.f32 %v3631, 0.0
        %v3664 = vmax.f32 %v3632, 0.0
        %v3665 = vmax.f32 %v3633, 0.0
        %v3666 = vmax.f32 %v3634, 0.0
        %v3667 = vmax.f32 %v3635, 0.0
        %v3668 = vmax.f32 %v3636, 0.0
        %v3669 = vmax.f32 %v3637, 0.0
        %v3670 = vmax.f32 %v3638, 0.0
        %v3671 = vmax.f32 %v3639, 0.0
        %v3672 = vmax.f32 %v3640, 0.0
        %v3673 = vmax.f32 %v3641, 0.0
        %v3674 = vmax.f32 %v3642, 0.0
        %v3675 = vmax.f32 %v3643, 0.0
        %v3676 = vmax.f32 %v3644, 0.0
        %v3677 = vpack.c.bf16 %v3646, %v3645
        %v3678 = vpack.c.bf16 %v3648, %v3647
        %v3679 = vpack.c.bf16 %v3650, %v3649
        %v3680 = vpack.c.bf16 %v3652, %v3651
        %v3681 = vpack.c.bf16 %v3654, %v3653
        %v3682 = vpack.c.bf16 %v3656, %v3655
        %v3683 = vpack.c.bf16 %v3658, %v3657
        %v3684 = vpack.c.bf16 %v3660, %v3659
        %v3685 = vpack.c.bf16 %v3662, %v3661
        %v3686 = vpack.c.bf16 %v3664, %v3663
        %v3687 = vpack.c.bf16 %v3666, %v3665
        %v3688 = vpack.c.bf16 %v3668, %v3667
        %v3689 = vpack.c.bf16 %v3670, %v3669
        %v3690 = vpack.c.bf16 %v3672, %v3671
        %v3691 = vpack.c.bf16 %v3674, %v3673
        %v3692 = vpack.c.bf16 %v3676, %v3675
        %v3709 = vunpack.c.l.b16 %v3677
        %v3710 = vunpack.c.h.b16 %v3677
        %v3711 = vunpack.c.l.b16 %v3678
        %v3712 = vunpack.c.h.b16 %v3678
        %v3713 = vunpack.c.l.b16 %v3679
        %v3714 = vunpack.c.h.b16 %v3679
        %v3715 = vunpack.c.l.b16 %v3680
        %v3716 = vunpack.c.h.b16 %v3680
        %v3717 = vunpack.c.l.b16 %v3681
        %v3718 = vunpack.c.h.b16 %v3681
        %v3719 = vunpack.c.l.b16 %v3682
        %v3720 = vunpack.c.h.b16 %v3682
        %v3721 = vunpack.c.l.b16 %v3683
        %v3722 = vunpack.c.h.b16 %v3683
        %v3723 = vunpack.c.l.b16 %v3684
        %v3724 = vunpack.c.h.b16 %v3684
        %v3725 = vunpack.c.l.b16 %v3685
        %v3726 = vunpack.c.h.b16 %v3685
        %v3727 = vunpack.c.l.b16 %v3686
        %v3728 = vunpack.c.h.b16 %v3686
        %v3729 = vunpack.c.l.b16 %v3687
        %v3730 = vunpack.c.h.b16 %v3687
        %v3731 = vunpack.c.l.b16 %v3688
        %v3732 = vunpack.c.h.b16 %v3688
        %v3733 = vunpack.c.l.b16 %v3689
        %v3734 = vunpack.c.h.b16 %v3689
        %v3735 = vunpack.c.l.b16 %v3690
        %v3736 = vunpack.c.h.b16 %v3690
        %v3737 = vunpack.c.l.b16 %v3691
        %v3738 = vunpack.c.h.b16 %v3691
        %v3739 = vunpack.c.l.b16 %v3692
        %v3740 = vunpack.c.h.b16 %v3692
        %v3741 = vpack.c.b16 %v3709, %v3709
        %v3742 = vpack.c.b16 %v3710, %v3710
        %v3743 = vpack.c.b16 %v3711, %v3711
        %v3744 = vpack.c.b16 %v3712, %v3712
        %v3745 = vpack.c.b16 %v3713, %v3713
        %v3746 = vpack.c.b16 %v3714, %v3714
        %v3747 = vpack.c.b16 %v3715, %v3715
        %v3748 = vpack.c.b16 %v3716, %v3716
        %v3749 = vpack.c.b16 %v3717, %v3717
        %v3750 = vpack.c.b16 %v3718, %v3718
        %v3751 = vpack.c.b16 %v3719, %v3719
        %v3752 = vpack.c.b16 %v3720, %v3720
        %v3753 = vpack.c.b16 %v3721, %v3721
        %v3754 = vpack.c.b16 %v3722, %v3722
        %v3755 = vpack.c.b16 %v3723, %v3723
        %v3756 = vpack.c.b16 %v3724, %v3724
        %v3757 = vpack.c.b16 %v3725, %v3725
        %v3758 = vpack.c.b16 %v3726, %v3726
        %v3759 = vpack.c.b16 %v3727, %v3727
        %v3760 = vpack.c.b16 %v3728, %v3728
        %v3761 = vpack.c.b16 %v3729, %v3729
        %v3762 = vpack.c.b16 %v3730, %v3730
        %v3763 = vpack.c.b16 %v3731, %v3731
        %v3764 = vpack.c.b16 %v3732, %v3732
        %v3765 = vpack.c.b16 %v3733, %v3733
        %v3766 = vpack.c.b16 %v3734, %v3734
        %v3767 = vpack.c.b16 %v3735, %v3735
        %v3768 = vpack.c.b16 %v3736, %v3736
        %v3769 = vpack.c.b16 %v3737, %v3737
        %v3770 = vpack.c.b16 %v3738, %v3738
        %v3771 = vpack.c.b16 %v3739, %v3739
        %v3772 = vpack.c.b16 %v3740, %v3740
        %3805 = vst [vmem:[%s545] sm:$0xf] %v3741
        %3806 = vst [vmem:[%s545 + $0x4] sm:$0xf] %v3742
        %3807 = vst [vmem:[%s545 + $0x8] sm:$0xf] %v3743
        %3808 = vst [vmem:[%s545 + $0xc] sm:$0xf] %v3744
        %3809 = vst [vmem:[%s545 + $0x10] sm:$0xf] %v3745
        %3810 = vst [vmem:[%s545 + $0x14] sm:$0xf] %v3746
        %3811 = vst [vmem:[%s545 + $0x18] sm:$0xf] %v3747
        %3812 = vst [vmem:[%s545 + $0x1c] sm:$0xf] %v3748
        %3813 = vst [vmem:[%s545 + $0x20] sm:$0xf] %v3749
        %3814 = vst [vmem:[%s545 + $0x24] sm:$0xf] %v3750
        %3815 = vst [vmem:[%s545 + $0x28] sm:$0xf] %v3751
        %3816 = vst [vmem:[%s545 + $0x2c] sm:$0xf] %v3752
        %3817 = vst [vmem:[%s545 + $0x30] sm:$0xf] %v3753
        %3818 = vst [vmem:[%s545 + $0x34] sm:$0xf] %v3754
        %3819 = vst [vmem:[%s545 + $0x38] sm:$0xf] %v3755
        %3820 = vst [vmem:[%s545 + $0x3c] sm:$0xf] %v3756
        %3821 = vst [vmem:[%s545 + $0x40] sm:$0xf] %v3757
        %3822 = vst [vmem:[%s545 + $0x44] sm:$0xf] %v3758
        %3823 = vst [vmem:[%s545 + $0x48] sm:$0xf] %v3759
        %3824 = vst [vmem:[%s545 + $0x4c] sm:$0xf] %v3760
        %3825 = vst [vmem:[%s545 + $0x50] sm:$0xf] %v3761
        %3826 = vst [vmem:[%s545 + $0x54] sm:$0xf] %v3762
        %3827 = vst [vmem:[%s545 + $0x58] sm:$0xf] %v3763
        %3828 = vst [vmem:[%s545 + $0x5c] sm:$0xf] %v3764
        %3829 = vst [vmem:[%s545 + $0x60] sm:$0xf] %v3765
        %3830 = vst [vmem:[%s545 + $0x64] sm:$0xf] %v3766
        %3831 = vst [vmem:[%s545 + $0x68] sm:$0xf] %v3767
        %3832 = vst [vmem:[%s545 + $0x6c] sm:$0xf] %v3768
        %3833 = vst [vmem:[%s545 + $0x70] sm:$0xf] %v3769
        %3834 = vst [vmem:[%s545 + $0x74] sm:$0xf] %v3770
        %3835 = vst [vmem:[%s545 + $0x78] sm:$0xf] %v3771
        %3836 = vst [vmem:[%s545 + $0x7c] sm:$0xf] %v3772
        %s3837 = sand.u32 %s319, 1
        %s3838 = scalar_lea.sflag [#allocation5], %s3837
        %s3839 = sand.u32 %s319, 1
        %s3840 = smul.addr %s3839, 128
        %s3841 = scalar_lea.vmem [#allocation15], %s3840
        // Predicated region
        $region101: #{tpu_custom_call.1} parent=71 // pred_check
          %p3842 = pneg %p329
        $region102: #{tpu_custom_call.1} parent=71 // pred_check_branch
          %3844 = sbr.rel (%p3842) target = $region104
        $region103: #{tpu_custom_call.1} parent=71 // pred_region
          %s3846 = ssub.s32 2048, 2048
          %3847 = vsyncadd %s3838, %s3846
          %s3848 = smul.addr %s33, 32
          %s3849 = smul.addr %s3848, 64
          %s3850 = scalar_lea.hbm %s13, %s3849
          %s3851 = sshll.u32 %s3841, 4
          %s3852 = int_to_ptr.vmem [resolvable:$true] %s3851
          %3857 = dma.vmem_to_hbm [thread:$0]  %s3852, 2048, %s3850, %s3838, 64, 64, 4
        $region104: #{tpu_custom_call.1} parent=71 // pred_fallthru
          _
      $region72: #{tpu_custom_call.1} parent=5 // pred_fallthru
        _
      %p3858 = scmp.le.s32.totalorder 2, %s28
      // Predicated region
      $region105: #{tpu_custom_call.1} parent=5 // pred_check
        %p3859 = pneg %p3858
      $region106: #{tpu_custom_call.1} parent=5 // pred_check_branch
        %3861 = sbr.rel (%p3859) target = $region108
      $region107: #{tpu_custom_call.1} parent=5 // pred_region
        %s3862 = ssub.s32 %s28, 2
        // Predicated region
        $region109: #{tpu_custom_call.1} parent=107 // pred_check
          %p3863 = pneg %p335
        $region110: #{tpu_custom_call.1} parent=107 // pred_check_branch
          %3865 = sbr.rel (%p3863) target = $region112
        $region111: #{tpu_custom_call.1} parent=107 // pred_region
          %s3866 = sand.u32 %s320, 1
          %s3867 = scalar_lea.sflag [#allocation5], %s3866
          %s3868 = sand.u32 %s320, 1
          %s3869 = smul.addr %s3868, 128
          %s3870 = scalar_lea.vmem [#allocation15], %s3869
          %3871 = dma.done %s3867, 2048
        $region112: #{tpu_custom_call.1} parent=107 // pred_fallthru
          _
      $region108: #{tpu_custom_call.1} parent=5 // pred_fallthru
        _
    $region6: #{tpu_custom_call.1} parent=1 // loop_footer
      %s32 = sadd.s32 1, %s28
    $region7: #{tpu_custom_call.1} parent=1 // loop_footer_branch
      %27 = sbr.rel target = $region3
    $region8: #{tpu_custom_call.1} parent=1 // loop_exit
      _
    %3872 = vsyncpa [#allocation4], 1
    %s3873 = scalar_lea.sflag [#allocation4], 1
    %3874 = vsyncpa %s3873, 1
    %3875 = vsyncpa [#allocation7], 1
    %3876 = vsyncpa [#allocation10], 1
    %3877 = vsyncpa [#allocation13], 1
    %3878 = vsyncpa [#allocation5], 1
    %s3879 = scalar_lea.sflag [#allocation5], 1
    %3880 = vsyncpa %s3879, 1

</llo_original>
